<compile_context>
chip_gen: v7x
topology: tpu7x:2x2x1
jax: 0.10.0
libtpu: 0.0.40
codegen_flags: <defaults>
</compile_context>

<pallas_src>
import functools

import jax
import jax.numpy as jnp
from jax.experimental import pallas as pl
from jax.experimental.pallas import tpu as pltpu

NUM_CLASSES = 481 * 2 * 3  # 2886
PATCH = 4                  # patch-embed stem: 4x4, stride 4
C1 = 128                   # stem output channels  (lane-dense)
C2 = 128                   # conv-block output channels (lane-dense)


# ----------------------------------------------------------------------------
# Fused Pallas kernel: stem matmul -> 3x3 conv -> GAP -> head, per image.
# ----------------------------------------------------------------------------
def _gazenet_fused_kernel(xp_ref, w1_ref, b1_ref, w2_ref, b2_ref, wh_ref,
                          bh_ref, o_ref, y1p_ref, *, gh, gw, c2):
    # Zero the padded feature-map scratch; the untouched one-pixel border is
    # the zero padding of the 3x3 conv.
    y1p_ref[...] = jnp.zeros_like(y1p_ref)

    # ---- Stage 1: patch-embed stem (matmul + bias + ReLU), one patch-row at
    # a time.  xp_ref[0] is (gh*gw, P*P*Cin); results go to the interior of
    # the padded scratch.  bf16 operands, f32 accumulation.
    for r in range(gh):
        xr = xp_ref[0, pl.ds(r * gw, gw), :]                       # (gw, Kp) bf16
        h = jnp.dot(xr, w1_ref[...], preferred_element_type=jnp.float32)
        h = jnp.maximum(h + b1_ref[...], 0.0)                      # (gw, C1) f32
        y1p_ref[r + 1, pl.ds(1, gw), :] = h

    # ---- Stage 2: 3x3 / stride-1 conv block (+ReLU), fused with global
    # average pooling.  Each of the 9 taps is a shifted, contiguous (gw, C1)
    # view of the padded scratch -- patch extraction never leaves VMEM.
    pool = jnp.zeros((1, c2), jnp.float32)
    for r in range(gh):
        acc = jnp.zeros((gw, c2), jnp.float32)
        for di in range(3):
            for dj in range(3):
                seg = y1p_ref[r + di, pl.ds(dj, gw), :]            # (gw, C1) f32
                acc = acc + jnp.dot(seg.astype(jnp.bfloat16),
                                    w2_ref[3 * di + dj],
                                    preferred_element_type=jnp.float32)
        y2r = jnp.maximum(acc + b2_ref[...], 0.0)                  # (gw, C2) f32
        pool = pool + jnp.sum(y2r, axis=0, keepdims=True)          # (1, C2)  f32

    pooled = (pool * (1.0 / float(gh * gw))).astype(jnp.bfloat16)  # (1, C2)

    # ---- Stage 3: classifier head -> lane-dense 2886-wide logits (the only
    # tensor that is stored to HBM).
    logits = jnp.dot(pooled, wh_ref[...], preferred_element_type=jnp.float32)
    o_ref[0] = logits + bh_ref[...]


# ----------------------------------------------------------------------------
# Parameters (deterministic, in-script).  Weights kept in bf16 for the MXU.
# ----------------------------------------------------------------------------
def init_params(key):
    k1, k2, k3 = jax.random.split(key, 3)
    cin = 3
    kp = PATCH * PATCH * cin  # 48
    w1 = jax.random.normal(k1, (kp, C1), jnp.float32) / jnp.sqrt(float(kp))
    w2 = (jax.random.normal(k2, (9, C1, C2), jnp.float32)
          / jnp.sqrt(9.0 * float(C1)))
    wh = (jax.random.normal(k3, (C2, NUM_CLASSES), jnp.float32)
          / jnp.sqrt(float(C2)))
    return {
        "w1": w1.astype(jnp.bfloat16),
        "b1": jnp.zeros((1, C1), jnp.float32),
        "w2": w2.astype(jnp.bfloat16),
        "b2": jnp.zeros((1, C2), jnp.float32),
        "wh": wh.astype(jnp.bfloat16),
        "bh": jnp.zeros((1, NUM_CLASSES), jnp.float32),
    }


# ----------------------------------------------------------------------------
# Forward: NCHW -> NHWC -> non-overlapping patchify (pure reshape/transpose),
# then the single fused Pallas call.
# ----------------------------------------------------------------------------
def gazenet_forward(params, x_nchw):
    x = jnp.transpose(x_nchw, (0, 2, 3, 1)).astype(jnp.float32)  # (B,H,W,Cin)
    B, H, W, cin = x.shape
    if H % PATCH or W % PATCH:
        raise ValueError("H and W must be multiples of the 4x4 patch stem")
    gh, gw = H // PATCH, W // PATCH
    kp = PATCH * PATCH * cin

    # Non-overlapping 4x4 patches: bijective rearrangement, no im2col blow-up.
    xp = x.reshape(B, gh, PATCH, gw, PATCH, cin)
    xp = jnp.transpose(xp, (0, 1, 3, 2, 4, 5)).reshape(B, gh * gw, kp)
    xp = xp.astype(jnp.bfloat16)

    w1, b1 = params["w1"], params["b1"]
    w2, b2 = params["w2"], params["b2"]
    wh, bh = params["wh"], params["bh"]
    n_out = wh.shape[1]

    kernel = functools.partial(_gazenet_fused_kernel, gh=gh, gw=gw, c2=C2)

    flops = 2 * B * (gh * gw * kp * C1 + gh * gw * 9 * C1 * C2 + C2 * n_out)
    bytes_accessed = (int(xp.size) * 2
                      + sum(int(v.size) * v.dtype.itemsize
                            for v in params.values())
                      + B * n_out * 4)

    out = pl.pallas_call(
        kernel,
        out_shape=jax.ShapeDtypeStruct((B, 1, n_out), jnp.float32),
        grid=(B,),
        in_specs=[
            pl.BlockSpec((1, gh * gw, kp), lambda b: (b, 0, 0)),   # patches
            pl.BlockSpec((kp, C1), lambda b: (0, 0)),              # w1
            pl.BlockSpec((1, C1), lambda b: (0, 0)),               # b1
            pl.BlockSpec((9, C1, C2), lambda b: (0, 0, 0)),        # w2 (taps)
            pl.BlockSpec((1, C2), lambda b: (0, 0)),               # b2
            pl.BlockSpec((C2, n_out), lambda b: (0, 0)),           # head w
            pl.BlockSpec((1, n_out), lambda b: (0, 0)),            # head b
        ],
        out_specs=pl.BlockSpec((1, 1, n_out), lambda b: (b, 0, 0)),
        scratch_shapes=[pltpu.VMEM((gh + 2, gw + 2, C1), jnp.float32)],
        compiler_params=pltpu.CompilerParams(
            dimension_semantics=("parallel",),
            vmem_limit_bytes=32 * 1024 * 1024),
        cost_estimate=pl.CostEstimate(
            flops=int(flops), transcendentals=0,
            bytes_accessed=int(bytes_accessed)),
    )(xp, w1, b1, w2, b2, wh, bh)

    return out.reshape(B, n_out)


if __name__ == "__main__":
    key = jax.random.PRNGKey(0)
    k_params, k_x = jax.random.split(key)
    params = init_params(k_params)

    # Small NCHW input consistent with an image backbone: (B=2, C=3, H=W=16).
    x = jax.random.normal(k_x, (2, 3, 16, 16), jnp.float32)

    out = jax.jit(gazenet_forward)(params, x)
    out = jax.block_until_ready(out)

    assert out.shape == (2, NUM_CLASSES), out.shape
    assert bool(jnp.all(jnp.isfinite(out)))
    print("KERNEL_OK")
</pallas_src>

<mosaic_0001>
module attributes {stable_mosaic.version = 11 : i64} {
  func.func @_gazenet_fused_kernel(%arg0: i32, %arg1: memref<1x16x48xbf16, #tpu.memory_space<vmem>>, %arg2: memref<48x128xbf16, #tpu.memory_space<vmem>>, %arg3: memref<1x128xf32, #tpu.memory_space<vmem>>, %arg4: memref<9x128x128xbf16, #tpu.memory_space<vmem>>, %arg5: memref<1x128xf32, #tpu.memory_space<vmem>>, %arg6: memref<128x2886xbf16, #tpu.memory_space<vmem>>, %arg7: memref<1x2886xf32, #tpu.memory_space<vmem>>, %arg8: memref<1x1x2886xf32, #tpu.memory_space<vmem>>, %arg9: memref<6x6x128xf32, #tpu.memory_space<vmem>>) attributes {dimension_semantics = [#tpu.dimension_semantics<parallel>], iteration_bounds = array<i64: 2>, scalar_prefetch = 0 : i64, scratch_operands = 1 : i64, tpu.core_type = #tpu.core_type<tc>, window_params = [{transform_indices = @transform_0, window_bounds = array<i64: 1, 16, 48>}, {pipeline_mode = #tpu.pipeline_mode<synchronous>, transform_indices = @transform_1, window_bounds = array<i64: 48, 128>}, {pipeline_mode = #tpu.pipeline_mode<synchronous>, transform_indices = @transform_2, window_bounds = array<i64: 1, 128>}, {pipeline_mode = #tpu.pipeline_mode<synchronous>, transform_indices = @transform_3, window_bounds = array<i64: 9, 128, 128>}, {pipeline_mode = #tpu.pipeline_mode<synchronous>, transform_indices = @transform_4, window_bounds = array<i64: 1, 128>}, {pipeline_mode = #tpu.pipeline_mode<synchronous>, transform_indices = @transform_5, window_bounds = array<i64: 128, 2886>}, {pipeline_mode = #tpu.pipeline_mode<synchronous>, transform_indices = @transform_6, window_bounds = array<i64: 1, 2886>}, {transform_indices = @transform_7, window_bounds = array<i64: 1, 1, 2886>}]} {
    %cst = arith.constant 0.000000e+00 : f32
    %0 = vector.broadcast %cst : f32 to vector<6x6x128xf32>
    %c0 = arith.constant 0 : index
    %c0_0 = arith.constant 0 : index
    %c0_1 = arith.constant 0 : index
    %1 = vector.load %arg9[%c0, %c0_0, %c0_1] : memref<6x6x128xf32, #tpu.memory_space<vmem>>, vector<6x6x128xf32>
    tpu.vector_store %arg9[%c0, %c0_0, %c0_1], %0 {strides = array<i32>} : memref<6x6x128xf32, #tpu.memory_space<vmem>>, vector<6x6x128xf32>,
    %c0_2 = arith.constant 0 : index
    %c0_3 = arith.constant 0 : index
    %c0_4 = arith.constant 0 : index
    %2 = vector.load %arg1[%c0_2, %c0_3, %c0_4] : memref<1x16x48xbf16, #tpu.memory_space<vmem>>, vector<1x4x48xbf16>
    %3 = vector.shape_cast %2 : vector<1x4x48xbf16> to vector<4x48xbf16>
    %c0_5 = arith.constant 0 : index
    %c0_6 = arith.constant 0 : index
    %4 = vector.load %arg2[%c0_5, %c0_6] : memref<48x128xbf16, #tpu.memory_space<vmem>>, vector<48x128xbf16>
    %cst_7 = arith.constant dense<0.000000e+00> : vector<4x128xf32>
    %5 = tpu.matmul %3, %4, %cst_7 {dimension_numbers = #tpu.dot_dimension_numbers<[1], [0], [0], [1], [0, 0, 1, 1], [], []>} : vector<4x48xbf16>, vector<48x128xbf16>, vector<4x128xf32> -> vector<4x128xf32>
    %c0_8 = arith.constant 0 : index
    %c0_9 = arith.constant 0 : index
    %6 = vector.load %arg3[%c0_8, %c0_9] : memref<1x128xf32, #tpu.memory_space<vmem>>, vector<1x128xf32>
    %7 = vector.broadcast %6 : vector<1x128xf32> to vector<4x128xf32>
    %8 = arith.addf %5, %7 : vector<4x128xf32>
    %cst_10 = arith.constant 0.000000e+00 : f32
    %9 = vector.broadcast %cst_10 : f32 to vector<4x128xf32>
    %10 = arith.maximumf %8, %9 : vector<4x128xf32>
    %c1 = arith.constant 1 : index
    %c1_11 = arith.constant 1 : index
    %c0_12 = arith.constant 0 : index
    %11 = vector.load %arg9[%c1, %c1_11, %c0_12] : memref<6x6x128xf32, #tpu.memory_space<vmem>>, vector<1x4x128xf32>
    %12 = vector.shape_cast %11 : vector<1x4x128xf32> to vector<4x128xf32>
    %13 = vector.shape_cast %10 : vector<4x128xf32> to vector<1x4x128xf32>
    tpu.vector_store %arg9[%c1, %c1_11, %c0_12], %13 {strides = array<i32>} : memref<6x6x128xf32, #tpu.memory_space<vmem>>, vector<1x4x128xf32>,
    %c0_13 = arith.constant 0 : index
    %c4 = arith.constant 4 : index
    %c0_14 = arith.constant 0 : index
    %14 = vector.load %arg1[%c0_13, %c4, %c0_14] : memref<1x16x48xbf16, #tpu.memory_space<vmem>>, vector<1x4x48xbf16>
    %15 = vector.shape_cast %14 : vector<1x4x48xbf16> to vector<4x48xbf16>
    %c0_15 = arith.constant 0 : index
    %c0_16 = arith.constant 0 : index
    %16 = vector.load %arg2[%c0_15, %c0_16] : memref<48x128xbf16, #tpu.memory_space<vmem>>, vector<48x128xbf16>
    %cst_17 = arith.constant dense<0.000000e+00> : vector<4x128xf32>
    %17 = tpu.matmul %15, %16, %cst_17 {dimension_numbers = #tpu.dot_dimension_numbers<[1], [0], [0], [1], [0, 0, 1, 1], [], []>} : vector<4x48xbf16>, vector<48x128xbf16>, vector<4x128xf32> -> vector<4x128xf32>
    %c0_18 = arith.constant 0 : index
    %c0_19 = arith.constant 0 : index
    %18 = vector.load %arg3[%c0_18, %c0_19] : memref<1x128xf32, #tpu.memory_space<vmem>>, vector<1x128xf32>
    %19 = vector.broadcast %18 : vector<1x128xf32> to vector<4x128xf32>
    %20 = arith.addf %17, %19 : vector<4x128xf32>
    %cst_20 = arith.constant 0.000000e+00 : f32
    %21 = vector.broadcast %cst_20 : f32 to vector<4x128xf32>
    %22 = arith.maximumf %20, %21 : vector<4x128xf32>
    %c2 = arith.constant 2 : index
    %c1_21 = arith.constant 1 : index
    %c0_22 = arith.constant 0 : index
    %23 = vector.load %arg9[%c2, %c1_21, %c0_22] : memref<6x6x128xf32, #tpu.memory_space<vmem>>, vector<1x4x128xf32>
    %24 = vector.shape_cast %23 : vector<1x4x128xf32> to vector<4x128xf32>
    %25 = vector.shape_cast %22 : vector<4x128xf32> to vector<1x4x128xf32>
    tpu.vector_store %arg9[%c2, %c1_21, %c0_22], %25 {strides = array<i32>} : memref<6x6x128xf32, #tpu.memory_space<vmem>>, vector<1x4x128xf32>,
    %c0_23 = arith.constant 0 : index
    %c8 = arith.constant 8 : index
    %c0_24 = arith.constant 0 : index
    %26 = vector.load %arg1[%c0_23, %c8, %c0_24] : memref<1x16x48xbf16, #tpu.memory_space<vmem>>, vector<1x4x48xbf16>
    %27 = vector.shape_cast %26 : vector<1x4x48xbf16> to vector<4x48xbf16>
    %c0_25 = arith.constant 0 : index
    %c0_26 = arith.constant 0 : index
    %28 = vector.load %arg2[%c0_25, %c0_26] : memref<48x128xbf16, #tpu.memory_space<vmem>>, vector<48x128xbf16>
    %cst_27 = arith.constant dense<0.000000e+00> : vector<4x128xf32>
    %29 = tpu.matmul %27, %28, %cst_27 {dimension_numbers = #tpu.dot_dimension_numbers<[1], [0], [0], [1], [0, 0, 1, 1], [], []>} : vector<4x48xbf16>, vector<48x128xbf16>, vector<4x128xf32> -> vector<4x128xf32>
    %c0_28 = arith.constant 0 : index
    %c0_29 = arith.constant 0 : index
    %30 = vector.load %arg3[%c0_28, %c0_29] : memref<1x128xf32, #tpu.memory_space<vmem>>, vector<1x128xf32>
    %31 = vector.broadcast %30 : vector<1x128xf32> to vector<4x128xf32>
    %32 = arith.addf %29, %31 : vector<4x128xf32>
    %cst_30 = arith.constant 0.000000e+00 : f32
    %33 = vector.broadcast %cst_30 : f32 to vector<4x128xf32>
    %34 = arith.maximumf %32, %33 : vector<4x128xf32>
    %c3 = arith.constant 3 : index
    %c1_31 = arith.constant 1 : index
    %c0_32 = arith.constant 0 : index
    %35 = vector.load %arg9[%c3, %c1_31, %c0_32] : memref<6x6x128xf32, #tpu.memory_space<vmem>>, vector<1x4x128xf32>
    %36 = vector.shape_cast %35 : vector<1x4x128xf32> to vector<4x128xf32>
    %37 = vector.shape_cast %34 : vector<4x128xf32> to vector<1x4x128xf32>
    tpu.vector_store %arg9[%c3, %c1_31, %c0_32], %37 {strides = array<i32>} : memref<6x6x128xf32, #tpu.memory_space<vmem>>, vector<1x4x128xf32>,
    %c0_33 = arith.constant 0 : index
    %c12 = arith.constant 12 : index
    %c0_34 = arith.constant 0 : index
    %38 = vector.load %arg1[%c0_33, %c12, %c0_34] : memref<1x16x48xbf16, #tpu.memory_space<vmem>>, vector<1x4x48xbf16>
    %39 = vector.shape_cast %38 : vector<1x4x48xbf16> to vector<4x48xbf16>
    %c0_35 = arith.constant 0 : index
    %c0_36 = arith.constant 0 : index
    %40 = vector.load %arg2[%c0_35, %c0_36] : memref<48x128xbf16, #tpu.memory_space<vmem>>, vector<48x128xbf16>
    %cst_37 = arith.constant dense<0.000000e+00> : vector<4x128xf32>
    %41 = tpu.matmul %39, %40, %cst_37 {dimension_numbers = #tpu.dot_dimension_numbers<[1], [0], [0], [1], [0, 0, 1, 1], [], []>} : vector<4x48xbf16>, vector<48x128xbf16>, vector<4x128xf32> -> vector<4x128xf32>
    %c0_38 = arith.constant 0 : index
    %c0_39 = arith.constant 0 : index
    %42 = vector.load %arg3[%c0_38, %c0_39] : memref<1x128xf32, #tpu.memory_space<vmem>>, vector<1x128xf32>
    %43 = vector.broadcast %42 : vector<1x128xf32> to vector<4x128xf32>
    %44 = arith.addf %41, %43 : vector<4x128xf32>
    %cst_40 = arith.constant 0.000000e+00 : f32
    %45 = vector.broadcast %cst_40 : f32 to vector<4x128xf32>
    %46 = arith.maximumf %44, %45 : vector<4x128xf32>
    %c4_41 = arith.constant 4 : index
    %c1_42 = arith.constant 1 : index
    %c0_43 = arith.constant 0 : index
    %47 = vector.load %arg9[%c4_41, %c1_42, %c0_43] : memref<6x6x128xf32, #tpu.memory_space<vmem>>, vector<1x4x128xf32>
    %48 = vector.shape_cast %47 : vector<1x4x128xf32> to vector<4x128xf32>
    %49 = vector.shape_cast %46 : vector<4x128xf32> to vector<1x4x128xf32>
    tpu.vector_store %arg9[%c4_41, %c1_42, %c0_43], %49 {strides = array<i32>} : memref<6x6x128xf32, #tpu.memory_space<vmem>>, vector<1x4x128xf32>,
    %cst_44 = arith.constant 0.000000e+00 : f32
    %50 = vector.broadcast %cst_44 : f32 to vector<1x128xf32>
    %cst_45 = arith.constant 0.000000e+00 : f32
    %51 = vector.broadcast %cst_45 : f32 to vector<4x128xf32>
    %c0_46 = arith.constant 0 : index
    %c0_47 = arith.constant 0 : index
    %c0_48 = arith.constant 0 : index
    %52 = vector.load %arg9[%c0_46, %c0_47, %c0_48] : memref<6x6x128xf32, #tpu.memory_space<vmem>>, vector<1x4x128xf32>
    %53 = vector.shape_cast %52 : vector<1x4x128xf32> to vector<4x128xf32>
    %54 = arith.truncf %53 : vector<4x128xf32> to vector<4x128xbf16>
    %c0_49 = arith.constant 0 : index
    %c0_50 = arith.constant 0 : index
    %c0_51 = arith.constant 0 : index
    %55 = vector.load %arg4[%c0_49, %c0_50, %c0_51] : memref<9x128x128xbf16, #tpu.memory_space<vmem>>, vector<1x128x128xbf16>
    %56 = vector.shape_cast %55 : vector<1x128x128xbf16> to vector<128x128xbf16>
    %cst_52 = arith.constant dense<0.000000e+00> : vector<4x128xf32>
    %57 = tpu.matmul %54, %56, %cst_52 {dimension_numbers = #tpu.dot_dimension_numbers<[1], [0], [0], [1], [0, 0, 1, 1], [], []>} : vector<4x128xbf16>, vector<128x128xbf16>, vector<4x128xf32> -> vector<4x128xf32>
    %58 = arith.addf %51, %57 : vector<4x128xf32>
    %c0_53 = arith.constant 0 : index
    %c1_54 = arith.constant 1 : index
    %c0_55 = arith.constant 0 : index
    %59 = vector.load %arg9[%c0_53, %c1_54, %c0_55] : memref<6x6x128xf32, #tpu.memory_space<vmem>>, vector<1x4x128xf32>
    %60 = vector.shape_cast %59 : vector<1x4x128xf32> to vector<4x128xf32>
    %61 = arith.truncf %60 : vector<4x128xf32> to vector<4x128xbf16>
    %c1_56 = arith.constant 1 : index
    %c0_57 = arith.constant 0 : index
    %c0_58 = arith.constant 0 : index
    %62 = vector.load %arg4[%c1_56, %c0_57, %c0_58] : memref<9x128x128xbf16, #tpu.memory_space<vmem>>, vector<1x128x128xbf16>
    %63 = vector.shape_cast %62 : vector<1x128x128xbf16> to vector<128x128xbf16>
    %cst_59 = arith.constant dense<0.000000e+00> : vector<4x128xf32>
    %64 = tpu.matmul %61, %63, %cst_59 {dimension_numbers = #tpu.dot_dimension_numbers<[1], [0], [0], [1], [0, 0, 1, 1], [], []>} : vector<4x128xbf16>, vector<128x128xbf16>, vector<4x128xf32> -> vector<4x128xf32>
    %65 = arith.addf %58, %64 : vector<4x128xf32>
    %c0_60 = arith.constant 0 : index
    %c2_61 = arith.constant 2 : index
    %c0_62 = arith.constant 0 : index
    %66 = vector.load %arg9[%c0_60, %c2_61, %c0_62] : memref<6x6x128xf32, #tpu.memory_space<vmem>>, vector<1x4x128xf32>
    %67 = vector.shape_cast %66 : vector<1x4x128xf32> to vector<4x128xf32>
    %68 = arith.truncf %67 : vector<4x128xf32> to vector<4x128xbf16>
    %c2_63 = arith.constant 2 : index
    %c0_64 = arith.constant 0 : index
    %c0_65 = arith.constant 0 : index
    %69 = vector.load %arg4[%c2_63, %c0_64, %c0_65] : memref<9x128x128xbf16, #tpu.memory_space<vmem>>, vector<1x128x128xbf16>
    %70 = vector.shape_cast %69 : vector<1x128x128xbf16> to vector<128x128xbf16>
    %cst_66 = arith.constant dense<0.000000e+00> : vector<4x128xf32>
    %71 = tpu.matmul %68, %70, %cst_66 {dimension_numbers = #tpu.dot_dimension_numbers<[1], [0], [0], [1], [0, 0, 1, 1], [], []>} : vector<4x128xbf16>, vector<128x128xbf16>, vector<4x128xf32> -> vector<4x128xf32>
    %72 = arith.addf %65, %71 : vector<4x128xf32>
    %c1_67 = arith.constant 1 : index
    %c0_68 = arith.constant 0 : index
    %c0_69 = arith.constant 0 : index
    %73 = vector.load %arg9[%c1_67, %c0_68, %c0_69] : memref<6x6x128xf32, #tpu.memory_space<vmem>>, vector<1x4x128xf32>
    %74 = vector.shape_cast %73 : vector<1x4x128xf32> to vector<4x128xf32>
    %75 = arith.truncf %74 : vector<4x128xf32> to vector<4x128xbf16>
    %c3_70 = arith.constant 3 : index
    %c0_71 = arith.constant 0 : index
    %c0_72 = arith.constant 0 : index
    %76 = vector.load %arg4[%c3_70, %c0_71, %c0_72] : memref<9x128x128xbf16, #tpu.memory_space<vmem>>, vector<1x128x128xbf16>
    %77 = vector.shape_cast %76 : vector<1x128x128xbf16> to vector<128x128xbf16>
    %cst_73 = arith.constant dense<0.000000e+00> : vector<4x128xf32>
    %78 = tpu.matmul %75, %77, %cst_73 {dimension_numbers = #tpu.dot_dimension_numbers<[1], [0], [0], [1], [0, 0, 1, 1], [], []>} : vector<4x128xbf16>, vector<128x128xbf16>, vector<4x128xf32> -> vector<4x128xf32>
    %79 = arith.addf %72, %78 : vector<4x128xf32>
    %c1_74 = arith.constant 1 : index
    %c1_75 = arith.constant 1 : index
    %c0_76 = arith.constant 0 : index
    %80 = vector.load %arg9[%c1_74, %c1_75, %c0_76] : memref<6x6x128xf32, #tpu.memory_space<vmem>>, vector<1x4x128xf32>
    %81 = vector.shape_cast %80 : vector<1x4x128xf32> to vector<4x128xf32>
    %82 = arith.truncf %81 : vector<4x128xf32> to vector<4x128xbf16>
    %c4_77 = arith.constant 4 : index
    %c0_78 = arith.constant 0 : index
    %c0_79 = arith.constant 0 : index
    %83 = vector.load %arg4[%c4_77, %c0_78, %c0_79] : memref<9x128x128xbf16, #tpu.memory_space<vmem>>, vector<1x128x128xbf16>
    %84 = vector.shape_cast %83 : vector<1x128x128xbf16> to vector<128x128xbf16>
    %cst_80 = arith.constant dense<0.000000e+00> : vector<4x128xf32>
    %85 = tpu.matmul %82, %84, %cst_80 {dimension_numbers = #tpu.dot_dimension_numbers<[1], [0], [0], [1], [0, 0, 1, 1], [], []>} : vector<4x128xbf16>, vector<128x128xbf16>, vector<4x128xf32> -> vector<4x128xf32>
    %86 = arith.addf %79, %85 : vector<4x128xf32>
    %c1_81 = arith.constant 1 : index
    %c2_82 = arith.constant 2 : index
    %c0_83 = arith.constant 0 : index
    %87 = vector.load %arg9[%c1_81, %c2_82, %c0_83] : memref<6x6x128xf32, #tpu.memory_space<vmem>>, vector<1x4x128xf32>
    %88 = vector.shape_cast %87 : vector<1x4x128xf32> to vector<4x128xf32>
    %89 = arith.truncf %88 : vector<4x128xf32> to vector<4x128xbf16>
    %c5 = arith.constant 5 : index
    %c0_84 = arith.constant 0 : index
    %c0_85 = arith.constant 0 : index
    %90 = vector.load %arg4[%c5, %c0_84, %c0_85] : memref<9x128x128xbf16, #tpu.memory_space<vmem>>, vector<1x128x128xbf16>
    %91 = vector.shape_cast %90 : vector<1x128x128xbf16> to vector<128x128xbf16>
    %cst_86 = arith.constant dense<0.000000e+00> : vector<4x128xf32>
    %92 = tpu.matmul %89, %91, %cst_86 {dimension_numbers = #tpu.dot_dimension_numbers<[1], [0], [0], [1], [0, 0, 1, 1], [], []>} : vector<4x128xbf16>, vector<128x128xbf16>, vector<4x128xf32> -> vector<4x128xf32>
    %93 = arith.addf %86, %92 : vector<4x128xf32>
    %c2_87 = arith.constant 2 : index
    %c0_88 = arith.constant 0 : index
    %c0_89 = arith.constant 0 : index
    %94 = vector.load %arg9[%c2_87, %c0_88, %c0_89] : memref<6x6x128xf32, #tpu.memory_space<vmem>>, vector<1x4x128xf32>
    %95 = vector.shape_cast %94 : vector<1x4x128xf32> to vector<4x128xf32>
    %96 = arith.truncf %95 : vector<4x128xf32> to vector<4x128xbf16>
    %c6 = arith.constant 6 : index
    %c0_90 = arith.constant 0 : index
    %c0_91 = arith.constant 0 : index
    %97 = vector.load %arg4[%c6, %c0_90, %c0_91] : memref<9x128x128xbf16, #tpu.memory_space<vmem>>, vector<1x128x128xbf16>
    %98 = vector.shape_cast %97 : vector<1x128x128xbf16> to vector<128x128xbf16>
    %cst_92 = arith.constant dense<0.000000e+00> : vector<4x128xf32>
    %99 = tpu.matmul %96, %98, %cst_92 {dimension_numbers = #tpu.dot_dimension_numbers<[1], [0], [0], [1], [0, 0, 1, 1], [], []>} : vector<4x128xbf16>, vector<128x128xbf16>, vector<4x128xf32> -> vector<4x128xf32>
    %100 = arith.addf %93, %99 : vector<4x128xf32>
    %c2_93 = arith.constant 2 : index
    %c1_94 = arith.constant 1 : index
    %c0_95 = arith.constant 0 : index
    %101 = vector.load %arg9[%c2_93, %c1_94, %c0_95] : memref<6x6x128xf32, #tpu.memory_space<vmem>>, vector<1x4x128xf32>
    %102 = vector.shape_cast %101 : vector<1x4x128xf32> to vector<4x128xf32>
    %103 = arith.truncf %102 : vector<4x128xf32> to vector<4x128xbf16>
    %c7 = arith.constant 7 : index
    %c0_96 = arith.constant 0 : index
    %c0_97 = arith.constant 0 : index
    %104 = vector.load %arg4[%c7, %c0_96, %c0_97] : memref<9x128x128xbf16, #tpu.memory_space<vmem>>, vector<1x128x128xbf16>
    %105 = vector.shape_cast %104 : vector<1x128x128xbf16> to vector<128x128xbf16>
    %cst_98 = arith.constant dense<0.000000e+00> : vector<4x128xf32>
    %106 = tpu.matmul %103, %105, %cst_98 {dimension_numbers = #tpu.dot_dimension_numbers<[1], [0], [0], [1], [0, 0, 1, 1], [], []>} : vector<4x128xbf16>, vector<128x128xbf16>, vector<4x128xf32> -> vector<4x128xf32>
    %107 = arith.addf %100, %106 : vector<4x128xf32>
    %c2_99 = arith.constant 2 : index
    %c2_100 = arith.constant 2 : index
    %c0_101 = arith.constant 0 : index
    %108 = vector.load %arg9[%c2_99, %c2_100, %c0_101] : memref<6x6x128xf32, #tpu.memory_space<vmem>>, vector<1x4x128xf32>
    %109 = vector.shape_cast %108 : vector<1x4x128xf32> to vector<4x128xf32>
    %110 = arith.truncf %109 : vector<4x128xf32> to vector<4x128xbf16>
    %c8_102 = arith.constant 8 : index
    %c0_103 = arith.constant 0 : index
    %c0_104 = arith.constant 0 : index
    %111 = vector.load %arg4[%c8_102, %c0_103, %c0_104] : memref<9x128x128xbf16, #tpu.memory_space<vmem>>, vector<1x128x128xbf16>
    %112 = vector.shape_cast %111 : vector<1x128x128xbf16> to vector<128x128xbf16>
    %cst_105 = arith.constant dense<0.000000e+00> : vector<4x128xf32>
    %113 = tpu.matmul %110, %112, %cst_105 {dimension_numbers = #tpu.dot_dimension_numbers<[1], [0], [0], [1], [0, 0, 1, 1], [], []>} : vector<4x128xbf16>, vector<128x128xbf16>, vector<4x128xf32> -> vector<4x128xf32>
    %114 = arith.addf %107, %113 : vector<4x128xf32>
    %c0_106 = arith.constant 0 : index
    %c0_107 = arith.constant 0 : index
    %115 = vector.load %arg5[%c0_106, %c0_107] : memref<1x128xf32, #tpu.memory_space<vmem>>, vector<1x128xf32>
    %116 = vector.broadcast %115 : vector<1x128xf32> to vector<4x128xf32>
    %117 = arith.addf %114, %116 : vector<4x128xf32>
    %cst_108 = arith.constant 0.000000e+00 : f32
    %118 = vector.broadcast %cst_108 : f32 to vector<4x128xf32>
    %119 = arith.maximumf %117, %118 : vector<4x128xf32>
    %cst_109 = arith.constant dense<0.000000e+00> : vector<128xf32>
    %120 = vector.multi_reduction <add>, %119, %cst_109 [0] : vector<4x128xf32> to vector<128xf32>
    %121 = vector.shape_cast %120 : vector<128xf32> to vector<1x128xf32>
    %122 = arith.addf %50, %121 : vector<1x128xf32>
    %cst_110 = arith.constant 0.000000e+00 : f32
    %123 = vector.broadcast %cst_110 : f32 to vector<4x128xf32>
    %c1_111 = arith.constant 1 : index
    %c0_112 = arith.constant 0 : index
    %c0_113 = arith.constant 0 : index
    %124 = vector.load %arg9[%c1_111, %c0_112, %c0_113] : memref<6x6x128xf32, #tpu.memory_space<vmem>>, vector<1x4x128xf32>
    %125 = vector.shape_cast %124 : vector<1x4x128xf32> to vector<4x128xf32>
    %126 = arith.truncf %125 : vector<4x128xf32> to vector<4x128xbf16>
    %c0_114 = arith.constant 0 : index
    %c0_115 = arith.constant 0 : index
    %c0_116 = arith.constant 0 : index
    %127 = vector.load %arg4[%c0_114, %c0_115, %c0_116] : memref<9x128x128xbf16, #tpu.memory_space<vmem>>, vector<1x128x128xbf16>
    %128 = vector.shape_cast %127 : vector<1x128x128xbf16> to vector<128x128xbf16>
    %cst_117 = arith.constant dense<0.000000e+00> : vector<4x128xf32>
    %129 = tpu.matmul %126, %128, %cst_117 {dimension_numbers = #tpu.dot_dimension_numbers<[1], [0], [0], [1], [0, 0, 1, 1], [], []>} : vector<4x128xbf16>, vector<128x128xbf16>, vector<4x128xf32> -> vector<4x128xf32>
    %130 = arith.addf %123, %129 : vector<4x128xf32>
    %c1_118 = arith.constant 1 : index
    %c1_119 = arith.constant 1 : index
    %c0_120 = arith.constant 0 : index
    %131 = vector.load %arg9[%c1_118, %c1_119, %c0_120] : memref<6x6x128xf32, #tpu.memory_space<vmem>>, vector<1x4x128xf32>
    %132 = vector.shape_cast %131 : vector<1x4x128xf32> to vector<4x128xf32>
    %133 = arith.truncf %132 : vector<4x128xf32> to vector<4x128xbf16>
    %c1_121 = arith.constant 1 : index
    %c0_122 = arith.constant 0 : index
    %c0_123 = arith.constant 0 : index
    %134 = vector.load %arg4[%c1_121, %c0_122, %c0_123] : memref<9x128x128xbf16, #tpu.memory_space<vmem>>, vector<1x128x128xbf16>
    %135 = vector.shape_cast %134 : vector<1x128x128xbf16> to vector<128x128xbf16>
    %cst_124 = arith.constant dense<0.000000e+00> : vector<4x128xf32>
    %136 = tpu.matmul %133, %135, %cst_124 {dimension_numbers = #tpu.dot_dimension_numbers<[1], [0], [0], [1], [0, 0, 1, 1], [], []>} : vector<4x128xbf16>, vector<128x128xbf16>, vector<4x128xf32> -> vector<4x128xf32>
    %137 = arith.addf %130, %136 : vector<4x128xf32>
    %c1_125 = arith.constant 1 : index
    %c2_126 = arith.constant 2 : index
    %c0_127 = arith.constant 0 : index
    %138 = vector.load %arg9[%c1_125, %c2_126, %c0_127] : memref<6x6x128xf32, #tpu.memory_space<vmem>>, vector<1x4x128xf32>
    %139 = vector.shape_cast %138 : vector<1x4x128xf32> to vector<4x128xf32>
    %140 = arith.truncf %139 : vector<4x128xf32> to vector<4x128xbf16>
    %c2_128 = arith.constant 2 : index
    %c0_129 = arith.constant 0 : index
    %c0_130 = arith.constant 0 : index
    %141 = vector.load %arg4[%c2_128, %c0_129, %c0_130] : memref<9x128x128xbf16, #tpu.memory_space<vmem>>, vector<1x128x128xbf16>
    %142 = vector.shape_cast %141 : vector<1x128x128xbf16> to vector<128x128xbf16>
    %cst_131 = arith.constant dense<0.000000e+00> : vector<4x128xf32>
    %143 = tpu.matmul %140, %142, %cst_131 {dimension_numbers = #tpu.dot_dimension_numbers<[1], [0], [0], [1], [0, 0, 1, 1], [], []>} : vector<4x128xbf16>, vector<128x128xbf16>, vector<4x128xf32> -> vector<4x128xf32>
    %144 = arith.addf %137, %143 : vector<4x128xf32>
    %c2_132 = arith.constant 2 : index
    %c0_133 = arith.constant 0 : index
    %c0_134 = arith.constant 0 : index
    %145 = vector.load %arg9[%c2_132, %c0_133, %c0_134] : memref<6x6x128xf32, #tpu.memory_space<vmem>>, vector<1x4x128xf32>
    %146 = vector.shape_cast %145 : vector<1x4x128xf32> to vector<4x128xf32>
    %147 = arith.truncf %146 : vector<4x128xf32> to vector<4x128xbf16>
    %c3_135 = arith.constant 3 : index
    %c0_136 = arith.constant 0 : index
    %c0_137 = arith.constant 0 : index
    %148 = vector.load %arg4[%c3_135, %c0_136, %c0_137] : memref<9x128x128xbf16, #tpu.memory_space<vmem>>, vector<1x128x128xbf16>
    %149 = vector.shape_cast %148 : vector<1x128x128xbf16> to vector<128x128xbf16>
    %cst_138 = arith.constant dense<0.000000e+00> : vector<4x128xf32>
    %150 = tpu.matmul %147, %149, %cst_138 {dimension_numbers = #tpu.dot_dimension_numbers<[1], [0], [0], [1], [0, 0, 1, 1], [], []>} : vector<4x128xbf16>, vector<128x128xbf16>, vector<4x128xf32> -> vector<4x128xf32>
    %151 = arith.addf %144, %150 : vector<4x128xf32>
    %c2_139 = arith.constant 2 : index
    %c1_140 = arith.constant 1 : index
    %c0_141 = arith.constant 0 : index
    %152 = vector.load %arg9[%c2_139, %c1_140, %c0_141] : memref<6x6x128xf32, #tpu.memory_space<vmem>>, vector<1x4x128xf32>
    %153 = vector.shape_cast %152 : vector<1x4x128xf32> to vector<4x128xf32>
    %154 = arith.truncf %153 : vector<4x128xf32> to vector<4x128xbf16>
    %c4_142 = arith.constant 4 : index
    %c0_143 = arith.constant 0 : index
    %c0_144 = arith.constant 0 : index
    %155 = vector.load %arg4[%c4_142, %c0_143, %c0_144] : memref<9x128x128xbf16, #tpu.memory_space<vmem>>, vector<1x128x128xbf16>
    %156 = vector.shape_cast %155 : vector<1x128x128xbf16> to vector<128x128xbf16>
    %cst_145 = arith.constant dense<0.000000e+00> : vector<4x128xf32>
    %157 = tpu.matmul %154, %156, %cst_145 {dimension_numbers = #tpu.dot_dimension_numbers<[1], [0], [0], [1], [0, 0, 1, 1], [], []>} : vector<4x128xbf16>, vector<128x128xbf16>, vector<4x128xf32> -> vector<4x128xf32>
    %158 = arith.addf %151, %157 : vector<4x128xf32>
    %c2_146 = arith.constant 2 : index
    %c2_147 = arith.constant 2 : index
    %c0_148 = arith.constant 0 : index
    %159 = vector.load %arg9[%c2_146, %c2_147, %c0_148] : memref<6x6x128xf32, #tpu.memory_space<vmem>>, vector<1x4x128xf32>
    %160 = vector.shape_cast %159 : vector<1x4x128xf32> to vector<4x128xf32>
    %161 = arith.truncf %160 : vector<4x128xf32> to vector<4x128xbf16>
    %c5_149 = arith.constant 5 : index
    %c0_150 = arith.constant 0 : index
    %c0_151 = arith.constant 0 : index
    %162 = vector.load %arg4[%c5_149, %c0_150, %c0_151] : memref<9x128x128xbf16, #tpu.memory_space<vmem>>, vector<1x128x128xbf16>
    %163 = vector.shape_cast %162 : vector<1x128x128xbf16> to vector<128x128xbf16>
    %cst_152 = arith.constant dense<0.000000e+00> : vector<4x128xf32>
    %164 = tpu.matmul %161, %163, %cst_152 {dimension_numbers = #tpu.dot_dimension_numbers<[1], [0], [0], [1], [0, 0, 1, 1], [], []>} : vector<4x128xbf16>, vector<128x128xbf16>, vector<4x128xf32> -> vector<4x128xf32>
    %165 = arith.addf %158, %164 : vector<4x128xf32>
    %c3_153 = arith.constant 3 : index
    %c0_154 = arith.constant 0 : index
    %c0_155 = arith.constant 0 : index
    %166 = vector.load %arg9[%c3_153, %c0_154, %c0_155] : memref<6x6x128xf32, #tpu.memory_space<vmem>>, vector<1x4x128xf32>
    %167 = vector.shape_cast %166 : vector<1x4x128xf32> to vector<4x128xf32>
    %168 = arith.truncf %167 : vector<4x128xf32> to vector<4x128xbf16>
    %c6_156 = arith.constant 6 : index
    %c0_157 = arith.constant 0 : index
    %c0_158 = arith.constant 0 : index
    %169 = vector.load %arg4[%c6_156, %c0_157, %c0_158] : memref<9x128x128xbf16, #tpu.memory_space<vmem>>, vector<1x128x128xbf16>
    %170 = vector.shape_cast %169 : vector<1x128x128xbf16> to vector<128x128xbf16>
    %cst_159 = arith.constant dense<0.000000e+00> : vector<4x128xf32>
    %171 = tpu.matmul %168, %170, %cst_159 {dimension_numbers = #tpu.dot_dimension_numbers<[1], [0], [0], [1], [0, 0, 1, 1], [], []>} : vector<4x128xbf16>, vector<128x128xbf16>, vector<4x128xf32> -> vector<4x128xf32>
    %172 = arith.addf %165, %171 : vector<4x128xf32>
    %c3_160 = arith.constant 3 : index
    %c1_161 = arith.constant 1 : index
    %c0_162 = arith.constant 0 : index
    %173 = vector.load %arg9[%c3_160, %c1_161, %c0_162] : memref<6x6x128xf32, #tpu.memory_space<vmem>>, vector<1x4x128xf32>
    %174 = vector.shape_cast %173 : vector<1x4x128xf32> to vector<4x128xf32>
    %175 = arith.truncf %174 : vector<4x128xf32> to vector<4x128xbf16>
    %c7_163 = arith.constant 7 : index
    %c0_164 = arith.constant 0 : index
    %c0_165 = arith.constant 0 : index
    %176 = vector.load %arg4[%c7_163, %c0_164, %c0_165] : memref<9x128x128xbf16, #tpu.memory_space<vmem>>, vector<1x128x128xbf16>
    %177 = vector.shape_cast %176 : vector<1x128x128xbf16> to vector<128x128xbf16>
    %cst_166 = arith.constant dense<0.000000e+00> : vector<4x128xf32>
    %178 = tpu.matmul %175, %177, %cst_166 {dimension_numbers = #tpu.dot_dimension_numbers<[1], [0], [0], [1], [0, 0, 1, 1], [], []>} : vector<4x128xbf16>, vector<128x128xbf16>, vector<4x128xf32> -> vector<4x128xf32>
    %179 = arith.addf %172, %178 : vector<4x128xf32>
    %c3_167 = arith.constant 3 : index
    %c2_168 = arith.constant 2 : index
    %c0_169 = arith.constant 0 : index
    %180 = vector.load %arg9[%c3_167, %c2_168, %c0_169] : memref<6x6x128xf32, #tpu.memory_space<vmem>>, vector<1x4x128xf32>
    %181 = vector.shape_cast %180 : vector<1x4x128xf32> to vector<4x128xf32>
    %182 = arith.truncf %181 : vector<4x128xf32> to vector<4x128xbf16>
    %c8_170 = arith.constant 8 : index
    %c0_171 = arith.constant 0 : index
    %c0_172 = arith.constant 0 : index
    %183 = vector.load %arg4[%c8_170, %c0_171, %c0_172] : memref<9x128x128xbf16, #tpu.memory_space<vmem>>, vector<1x128x128xbf16>
    %184 = vector.shape_cast %183 : vector<1x128x128xbf16> to vector<128x128xbf16>
    %cst_173 = arith.constant dense<0.000000e+00> : vector<4x128xf32>
    %185 = tpu.matmul %182, %184, %cst_173 {dimension_numbers = #tpu.dot_dimension_numbers<[1], [0], [0], [1], [0, 0, 1, 1], [], []>} : vector<4x128xbf16>, vector<128x128xbf16>, vector<4x128xf32> -> vector<4x128xf32>
    %186 = arith.addf %179, %185 : vector<4x128xf32>
    %c0_174 = arith.constant 0 : index
    %c0_175 = arith.constant 0 : index
    %187 = vector.load %arg5[%c0_174, %c0_175] : memref<1x128xf32, #tpu.memory_space<vmem>>, vector<1x128xf32>
    %188 = vector.broadcast %187 : vector<1x128xf32> to vector<4x128xf32>
    %189 = arith.addf %186, %188 : vector<4x128xf32>
    %cst_176 = arith.constant 0.000000e+00 : f32
    %190 = vector.broadcast %cst_176 : f32 to vector<4x128xf32>
    %191 = arith.maximumf %189, %190 : vector<4x128xf32>
    %cst_177 = arith.constant dense<0.000000e+00> : vector<128xf32>
    %192 = vector.multi_reduction <add>, %191, %cst_177 [0] : vector<4x128xf32> to vector<128xf32>
    %193 = vector.shape_cast %192 : vector<128xf32> to vector<1x128xf32>
    %194 = arith.addf %122, %193 : vector<1x128xf32>
    %cst_178 = arith.constant 0.000000e+00 : f32
    %195 = vector.broadcast %cst_178 : f32 to vector<4x128xf32>
    %c2_179 = arith.constant 2 : index
    %c0_180 = arith.constant 0 : index
    %c0_181 = arith.constant 0 : index
    %196 = vector.load %arg9[%c2_179, %c0_180, %c0_181] : memref<6x6x128xf32, #tpu.memory_space<vmem>>, vector<1x4x128xf32>
    %197 = vector.shape_cast %196 : vector<1x4x128xf32> to vector<4x128xf32>
    %198 = arith.truncf %197 : vector<4x128xf32> to vector<4x128xbf16>
    %c0_182 = arith.constant 0 : index
    %c0_183 = arith.constant 0 : index
    %c0_184 = arith.constant 0 : index
    %199 = vector.load %arg4[%c0_182, %c0_183, %c0_184] : memref<9x128x128xbf16, #tpu.memory_space<vmem>>, vector<1x128x128xbf16>
    %200 = vector.shape_cast %199 : vector<1x128x128xbf16> to vector<128x128xbf16>
    %cst_185 = arith.constant dense<0.000000e+00> : vector<4x128xf32>
    %201 = tpu.matmul %198, %200, %cst_185 {dimension_numbers = #tpu.dot_dimension_numbers<[1], [0], [0], [1], [0, 0, 1, 1], [], []>} : vector<4x128xbf16>, vector<128x128xbf16>, vector<4x128xf32> -> vector<4x128xf32>
    %202 = arith.addf %195, %201 : vector<4x128xf32>
    %c2_186 = arith.constant 2 : index
    %c1_187 = arith.constant 1 : index
    %c0_188 = arith.constant 0 : index
    %203 = vector.load %arg9[%c2_186, %c1_187, %c0_188] : memref<6x6x128xf32, #tpu.memory_space<vmem>>, vector<1x4x128xf32>
    %204 = vector.shape_cast %203 : vector<1x4x128xf32> to vector<4x128xf32>
    %205 = arith.truncf %204 : vector<4x128xf32> to vector<4x128xbf16>
    %c1_189 = arith.constant 1 : index
    %c0_190 = arith.constant 0 : index
    %c0_191 = arith.constant 0 : index
    %206 = vector.load %arg4[%c1_189, %c0_190, %c0_191] : memref<9x128x128xbf16, #tpu.memory_space<vmem>>, vector<1x128x128xbf16>
    %207 = vector.shape_cast %206 : vector<1x128x128xbf16> to vector<128x128xbf16>
    %cst_192 = arith.constant dense<0.000000e+00> : vector<4x128xf32>
    %208 = tpu.matmul %205, %207, %cst_192 {dimension_numbers = #tpu.dot_dimension_numbers<[1], [0], [0], [1], [0, 0, 1, 1], [], []>} : vector<4x128xbf16>, vector<128x128xbf16>, vector<4x128xf32> -> vector<4x128xf32>
    %209 = arith.addf %202, %208 : vector<4x128xf32>
    %c2_193 = arith.constant 2 : index
    %c2_194 = arith.constant 2 : index
    %c0_195 = arith.constant 0 : index
    %210 = vector.load %arg9[%c2_193, %c2_194, %c0_195] : memref<6x6x128xf32, #tpu.memory_space<vmem>>, vector<1x4x128xf32>
    %211 = vector.shape_cast %210 : vector<1x4x128xf32> to vector<4x128xf32>
    %212 = arith.truncf %211 : vector<4x128xf32> to vector<4x128xbf16>
    %c2_196 = arith.constant 2 : index
    %c0_197 = arith.constant 0 : index
    %c0_198 = arith.constant 0 : index
    %213 = vector.load %arg4[%c2_196, %c0_197, %c0_198] : memref<9x128x128xbf16, #tpu.memory_space<vmem>>, vector<1x128x128xbf16>
    %214 = vector.shape_cast %213 : vector<1x128x128xbf16> to vector<128x128xbf16>
    %cst_199 = arith.constant dense<0.000000e+00> : vector<4x128xf32>
    %215 = tpu.matmul %212, %214, %cst_199 {dimension_numbers = #tpu.dot_dimension_numbers<[1], [0], [0], [1], [0, 0, 1, 1], [], []>} : vector<4x128xbf16>, vector<128x128xbf16>, vector<4x128xf32> -> vector<4x128xf32>
    %216 = arith.addf %209, %215 : vector<4x128xf32>
    %c3_200 = arith.constant 3 : index
    %c0_201 = arith.constant 0 : index
    %c0_202 = arith.constant 0 : index
    %217 = vector.load %arg9[%c3_200, %c0_201, %c0_202] : memref<6x6x128xf32, #tpu.memory_space<vmem>>, vector<1x4x128xf32>
    %218 = vector.shape_cast %217 : vector<1x4x128xf32> to vector<4x128xf32>
    %219 = arith.truncf %218 : vector<4x128xf32> to vector<4x128xbf16>
    %c3_203 = arith.constant 3 : index
    %c0_204 = arith.constant 0 : index
    %c0_205 = arith.constant 0 : index
    %220 = vector.load %arg4[%c3_203, %c0_204, %c0_205] : memref<9x128x128xbf16, #tpu.memory_space<vmem>>, vector<1x128x128xbf16>
    %221 = vector.shape_cast %220 : vector<1x128x128xbf16> to vector<128x128xbf16>
    %cst_206 = arith.constant dense<0.000000e+00> : vector<4x128xf32>
    %222 = tpu.matmul %219, %221, %cst_206 {dimension_numbers = #tpu.dot_dimension_numbers<[1], [0], [0], [1], [0, 0, 1, 1], [], []>} : vector<4x128xbf16>, vector<128x128xbf16>, vector<4x128xf32> -> vector<4x128xf32>
    %223 = arith.addf %216, %222 : vector<4x128xf32>
    %c3_207 = arith.constant 3 : index
    %c1_208 = arith.constant 1 : index
    %c0_209 = arith.constant 0 : index
    %224 = vector.load %arg9[%c3_207, %c1_208, %c0_209] : memref<6x6x128xf32, #tpu.memory_space<vmem>>, vector<1x4x128xf32>
    %225 = vector.shape_cast %224 : vector<1x4x128xf32> to vector<4x128xf32>
    %226 = arith.truncf %225 : vector<4x128xf32> to vector<4x128xbf16>
    %c4_210 = arith.constant 4 : index
    %c0_211 = arith.constant 0 : index
    %c0_212 = arith.constant 0 : index
    %227 = vector.load %arg4[%c4_210, %c0_211, %c0_212] : memref<9x128x128xbf16, #tpu.memory_space<vmem>>, vector<1x128x128xbf16>
    %228 = vector.shape_cast %227 : vector<1x128x128xbf16> to vector<128x128xbf16>
    %cst_213 = arith.constant dense<0.000000e+00> : vector<4x128xf32>
    %229 = tpu.matmul %226, %228, %cst_213 {dimension_numbers = #tpu.dot_dimension_numbers<[1], [0], [0], [1], [0, 0, 1, 1], [], []>} : vector<4x128xbf16>, vector<128x128xbf16>, vector<4x128xf32> -> vector<4x128xf32>
    %230 = arith.addf %223, %229 : vector<4x128xf32>
    %c3_214 = arith.constant 3 : index
    %c2_215 = arith.constant 2 : index
    %c0_216 = arith.constant 0 : index
    %231 = vector.load %arg9[%c3_214, %c2_215, %c0_216] : memref<6x6x128xf32, #tpu.memory_space<vmem>>, vector<1x4x128xf32>
    %232 = vector.shape_cast %231 : vector<1x4x128xf32> to vector<4x128xf32>
    %233 = arith.truncf %232 : vector<4x128xf32> to vector<4x128xbf16>
    %c5_217 = arith.constant 5 : index
    %c0_218 = arith.constant 0 : index
    %c0_219 = arith.constant 0 : index
    %234 = vector.load %arg4[%c5_217, %c0_218, %c0_219] : memref<9x128x128xbf16, #tpu.memory_space<vmem>>, vector<1x128x128xbf16>
    %235 = vector.shape_cast %234 : vector<1x128x128xbf16> to vector<128x128xbf16>
    %cst_220 = arith.constant dense<0.000000e+00> : vector<4x128xf32>
    %236 = tpu.matmul %233, %235, %cst_220 {dimension_numbers = #tpu.dot_dimension_numbers<[1], [0], [0], [1], [0, 0, 1, 1], [], []>} : vector<4x128xbf16>, vector<128x128xbf16>, vector<4x128xf32> -> vector<4x128xf32>
    %237 = arith.addf %230, %236 : vector<4x128xf32>
    %c4_221 = arith.constant 4 : index
    %c0_222 = arith.constant 0 : index
    %c0_223 = arith.constant 0 : index
    %238 = vector.load %arg9[%c4_221, %c0_222, %c0_223] : memref<6x6x128xf32, #tpu.memory_space<vmem>>, vector<1x4x128xf32>
    %239 = vector.shape_cast %238 : vector<1x4x128xf32> to vector<4x128xf32>
    %240 = arith.truncf %239 : vector<4x128xf32> to vector<4x128xbf16>
    %c6_224 = arith.constant 6 : index
    %c0_225 = arith.constant 0 : index
    %c0_226 = arith.constant 0 : index
    %241 = vector.load %arg4[%c6_224, %c0_225, %c0_226] : memref<9x128x128xbf16, #tpu.memory_space<vmem>>, vector<1x128x128xbf16>
    %242 = vector.shape_cast %241 : vector<1x128x128xbf16> to vector<128x128xbf16>
    %cst_227 = arith.constant dense<0.000000e+00> : vector<4x128xf32>
    %243 = tpu.matmul %240, %242, %cst_227 {dimension_numbers = #tpu.dot_dimension_numbers<[1], [0], [0], [1], [0, 0, 1, 1], [], []>} : vector<4x128xbf16>, vector<128x128xbf16>, vector<4x128xf32> -> vector<4x128xf32>
    %244 = arith.addf %237, %243 : vector<4x128xf32>
    %c4_228 = arith.constant 4 : index
    %c1_229 = arith.constant 1 : index
    %c0_230 = arith.constant 0 : index
    %245 = vector.load %arg9[%c4_228, %c1_229, %c0_230] : memref<6x6x128xf32, #tpu.memory_space<vmem>>, vector<1x4x128xf32>
    %246 = vector.shape_cast %245 : vector<1x4x128xf32> to vector<4x128xf32>
    %247 = arith.truncf %246 : vector<4x128xf32> to vector<4x128xbf16>
    %c7_231 = arith.constant 7 : index
    %c0_232 = arith.constant 0 : index
    %c0_233 = arith.constant 0 : index
    %248 = vector.load %arg4[%c7_231, %c0_232, %c0_233] : memref<9x128x128xbf16, #tpu.memory_space<vmem>>, vector<1x128x128xbf16>
    %249 = vector.shape_cast %248 : vector<1x128x128xbf16> to vector<128x128xbf16>
    %cst_234 = arith.constant dense<0.000000e+00> : vector<4x128xf32>
    %250 = tpu.matmul %247, %249, %cst_234 {dimension_numbers = #tpu.dot_dimension_numbers<[1], [0], [0], [1], [0, 0, 1, 1], [], []>} : vector<4x128xbf16>, vector<128x128xbf16>, vector<4x128xf32> -> vector<4x128xf32>
    %251 = arith.addf %244, %250 : vector<4x128xf32>
    %c4_235 = arith.constant 4 : index
    %c2_236 = arith.constant 2 : index
    %c0_237 = arith.constant 0 : index
    %252 = vector.load %arg9[%c4_235, %c2_236, %c0_237] : memref<6x6x128xf32, #tpu.memory_space<vmem>>, vector<1x4x128xf32>
    %253 = vector.shape_cast %252 : vector<1x4x128xf32> to vector<4x128xf32>
    %254 = arith.truncf %253 : vector<4x128xf32> to vector<4x128xbf16>
    %c8_238 = arith.constant 8 : index
    %c0_239 = arith.constant 0 : index
    %c0_240 = arith.constant 0 : index
    %255 = vector.load %arg4[%c8_238, %c0_239, %c0_240] : memref<9x128x128xbf16, #tpu.memory_space<vmem>>, vector<1x128x128xbf16>
    %256 = vector.shape_cast %255 : vector<1x128x128xbf16> to vector<128x128xbf16>
    %cst_241 = arith.constant dense<0.000000e+00> : vector<4x128xf32>
    %257 = tpu.matmul %254, %256, %cst_241 {dimension_numbers = #tpu.dot_dimension_numbers<[1], [0], [0], [1], [0, 0, 1, 1], [], []>} : vector<4x128xbf16>, vector<128x128xbf16>, vector<4x128xf32> -> vector<4x128xf32>
    %258 = arith.addf %251, %257 : vector<4x128xf32>
    %c0_242 = arith.constant 0 : index
    %c0_243 = arith.constant 0 : index
    %259 = vector.load %arg5[%c0_242, %c0_243] : memref<1x128xf32, #tpu.memory_space<vmem>>, vector<1x128xf32>
    %260 = vector.broadcast %259 : vector<1x128xf32> to vector<4x128xf32>
    %261 = arith.addf %258, %260 : vector<4x128xf32>
    %cst_244 = arith.constant 0.000000e+00 : f32
    %262 = vector.broadcast %cst_244 : f32 to vector<4x128xf32>
    %263 = arith.maximumf %261, %262 : vector<4x128xf32>
    %cst_245 = arith.constant dense<0.000000e+00> : vector<128xf32>
    %264 = vector.multi_reduction <add>, %263, %cst_245 [0] : vector<4x128xf32> to vector<128xf32>
    %265 = vector.shape_cast %264 : vector<128xf32> to vector<1x128xf32>
    %266 = arith.addf %194, %265 : vector<1x128xf32>
    %cst_246 = arith.constant 0.000000e+00 : f32
    %267 = vector.broadcast %cst_246 : f32 to vector<4x128xf32>
    %c3_247 = arith.constant 3 : index
    %c0_248 = arith.constant 0 : index
    %c0_249 = arith.constant 0 : index
    %268 = vector.load %arg9[%c3_247, %c0_248, %c0_249] : memref<6x6x128xf32, #tpu.memory_space<vmem>>, vector<1x4x128xf32>
    %269 = vector.shape_cast %268 : vector<1x4x128xf32> to vector<4x128xf32>
    %270 = arith.truncf %269 : vector<4x128xf32> to vector<4x128xbf16>
    %c0_250 = arith.constant 0 : index
    %c0_251 = arith.constant 0 : index
    %c0_252 = arith.constant 0 : index
    %271 = vector.load %arg4[%c0_250, %c0_251, %c0_252] : memref<9x128x128xbf16, #tpu.memory_space<vmem>>, vector<1x128x128xbf16>
    %272 = vector.shape_cast %271 : vector<1x128x128xbf16> to vector<128x128xbf16>
    %cst_253 = arith.constant dense<0.000000e+00> : vector<4x128xf32>
    %273 = tpu.matmul %270, %272, %cst_253 {dimension_numbers = #tpu.dot_dimension_numbers<[1], [0], [0], [1], [0, 0, 1, 1], [], []>} : vector<4x128xbf16>, vector<128x128xbf16>, vector<4x128xf32> -> vector<4x128xf32>
    %274 = arith.addf %267, %273 : vector<4x128xf32>
    %c3_254 = arith.constant 3 : index
    %c1_255 = arith.constant 1 : index
    %c0_256 = arith.constant 0 : index
    %275 = vector.load %arg9[%c3_254, %c1_255, %c0_256] : memref<6x6x128xf32, #tpu.memory_space<vmem>>, vector<1x4x128xf32>
    %276 = vector.shape_cast %275 : vector<1x4x128xf32> to vector<4x128xf32>
    %277 = arith.truncf %276 : vector<4x128xf32> to vector<4x128xbf16>
    %c1_257 = arith.constant 1 : index
    %c0_258 = arith.constant 0 : index
    %c0_259 = arith.constant 0 : index
    %278 = vector.load %arg4[%c1_257, %c0_258, %c0_259] : memref<9x128x128xbf16, #tpu.memory_space<vmem>>, vector<1x128x128xbf16>
    %279 = vector.shape_cast %278 : vector<1x128x128xbf16> to vector<128x128xbf16>
    %cst_260 = arith.constant dense<0.000000e+00> : vector<4x128xf32>
    %280 = tpu.matmul %277, %279, %cst_260 {dimension_numbers = #tpu.dot_dimension_numbers<[1], [0], [0], [1], [0, 0, 1, 1], [], []>} : vector<4x128xbf16>, vector<128x128xbf16>, vector<4x128xf32> -> vector<4x128xf32>
    %281 = arith.addf %274, %280 : vector<4x128xf32>
    %c3_261 = arith.constant 3 : index
    %c2_262 = arith.constant 2 : index
    %c0_263 = arith.constant 0 : index
    %282 = vector.load %arg9[%c3_261, %c2_262, %c0_263] : memref<6x6x128xf32, #tpu.memory_space<vmem>>, vector<1x4x128xf32>
    %283 = vector.shape_cast %282 : vector<1x4x128xf32> to vector<4x128xf32>
    %284 = arith.truncf %283 : vector<4x128xf32> to vector<4x128xbf16>
    %c2_264 = arith.constant 2 : index
    %c0_265 = arith.constant 0 : index
    %c0_266 = arith.constant 0 : index
    %285 = vector.load %arg4[%c2_264, %c0_265, %c0_266] : memref<9x128x128xbf16, #tpu.memory_space<vmem>>, vector<1x128x128xbf16>
    %286 = vector.shape_cast %285 : vector<1x128x128xbf16> to vector<128x128xbf16>
    %cst_267 = arith.constant dense<0.000000e+00> : vector<4x128xf32>
    %287 = tpu.matmul %284, %286, %cst_267 {dimension_numbers = #tpu.dot_dimension_numbers<[1], [0], [0], [1], [0, 0, 1, 1], [], []>} : vector<4x128xbf16>, vector<128x128xbf16>, vector<4x128xf32> -> vector<4x128xf32>
    %288 = arith.addf %281, %287 : vector<4x128xf32>
    %c4_268 = arith.constant 4 : index
    %c0_269 = arith.constant 0 : index
    %c0_270 = arith.constant 0 : index
    %289 = vector.load %arg9[%c4_268, %c0_269, %c0_270] : memref<6x6x128xf32, #tpu.memory_space<vmem>>, vector<1x4x128xf32>
    %290 = vector.shape_cast %289 : vector<1x4x128xf32> to vector<4x128xf32>
    %291 = arith.truncf %290 : vector<4x128xf32> to vector<4x128xbf16>
    %c3_271 = arith.constant 3 : index
    %c0_272 = arith.constant 0 : index
    %c0_273 = arith.constant 0 : index
    %292 = vector.load %arg4[%c3_271, %c0_272, %c0_273] : memref<9x128x128xbf16, #tpu.memory_space<vmem>>, vector<1x128x128xbf16>
    %293 = vector.shape_cast %292 : vector<1x128x128xbf16> to vector<128x128xbf16>
    %cst_274 = arith.constant dense<0.000000e+00> : vector<4x128xf32>
    %294 = tpu.matmul %291, %293, %cst_274 {dimension_numbers = #tpu.dot_dimension_numbers<[1], [0], [0], [1], [0, 0, 1, 1], [], []>} : vector<4x128xbf16>, vector<128x128xbf16>, vector<4x128xf32> -> vector<4x128xf32>
    %295 = arith.addf %288, %294 : vector<4x128xf32>
    %c4_275 = arith.constant 4 : index
    %c1_276 = arith.constant 1 : index
    %c0_277 = arith.constant 0 : index
    %296 = vector.load %arg9[%c4_275, %c1_276, %c0_277] : memref<6x6x128xf32, #tpu.memory_space<vmem>>, vector<1x4x128xf32>
    %297 = vector.shape_cast %296 : vector<1x4x128xf32> to vector<4x128xf32>
    %298 = arith.truncf %297 : vector<4x128xf32> to vector<4x128xbf16>
    %c4_278 = arith.constant 4 : index
    %c0_279 = arith.constant 0 : index
    %c0_280 = arith.constant 0 : index
    %299 = vector.load %arg4[%c4_278, %c0_279, %c0_280] : memref<9x128x128xbf16, #tpu.memory_space<vmem>>, vector<1x128x128xbf16>
    %300 = vector.shape_cast %299 : vector<1x128x128xbf16> to vector<128x128xbf16>
    %cst_281 = arith.constant dense<0.000000e+00> : vector<4x128xf32>
    %301 = tpu.matmul %298, %300, %cst_281 {dimension_numbers = #tpu.dot_dimension_numbers<[1], [0], [0], [1], [0, 0, 1, 1], [], []>} : vector<4x128xbf16>, vector<128x128xbf16>, vector<4x128xf32> -> vector<4x128xf32>
    %302 = arith.addf %295, %301 : vector<4x128xf32>
    %c4_282 = arith.constant 4 : index
    %c2_283 = arith.constant 2 : index
    %c0_284 = arith.constant 0 : index
    %303 = vector.load %arg9[%c4_282, %c2_283, %c0_284] : memref<6x6x128xf32, #tpu.memory_space<vmem>>, vector<1x4x128xf32>
    %304 = vector.shape_cast %303 : vector<1x4x128xf32> to vector<4x128xf32>
    %305 = arith.truncf %304 : vector<4x128xf32> to vector<4x128xbf16>
    %c5_285 = arith.constant 5 : index
    %c0_286 = arith.constant 0 : index
    %c0_287 = arith.constant 0 : index
    %306 = vector.load %arg4[%c5_285, %c0_286, %c0_287] : memref<9x128x128xbf16, #tpu.memory_space<vmem>>, vector<1x128x128xbf16>
    %307 = vector.shape_cast %306 : vector<1x128x128xbf16> to vector<128x128xbf16>
    %cst_288 = arith.constant dense<0.000000e+00> : vector<4x128xf32>
    %308 = tpu.matmul %305, %307, %cst_288 {dimension_numbers = #tpu.dot_dimension_numbers<[1], [0], [0], [1], [0, 0, 1, 1], [], []>} : vector<4x128xbf16>, vector<128x128xbf16>, vector<4x128xf32> -> vector<4x128xf32>
    %309 = arith.addf %302, %308 : vector<4x128xf32>
    %c5_289 = arith.constant 5 : index
    %c0_290 = arith.constant 0 : index
    %c0_291 = arith.constant 0 : index
    %310 = vector.load %arg9[%c5_289, %c0_290, %c0_291] : memref<6x6x128xf32, #tpu.memory_space<vmem>>, vector<1x4x128xf32>
    %311 = vector.shape_cast %310 : vector<1x4x128xf32> to vector<4x128xf32>
    %312 = arith.truncf %311 : vector<4x128xf32> to vector<4x128xbf16>
    %c6_292 = arith.constant 6 : index
    %c0_293 = arith.constant 0 : index
    %c0_294 = arith.constant 0 : index
    %313 = vector.load %arg4[%c6_292, %c0_293, %c0_294] : memref<9x128x128xbf16, #tpu.memory_space<vmem>>, vector<1x128x128xbf16>
    %314 = vector.shape_cast %313 : vector<1x128x128xbf16> to vector<128x128xbf16>
    %cst_295 = arith.constant dense<0.000000e+00> : vector<4x128xf32>
    %315 = tpu.matmul %312, %314, %cst_295 {dimension_numbers = #tpu.dot_dimension_numbers<[1], [0], [0], [1], [0, 0, 1, 1], [], []>} : vector<4x128xbf16>, vector<128x128xbf16>, vector<4x128xf32> -> vector<4x128xf32>
    %316 = arith.addf %309, %315 : vector<4x128xf32>
    %c5_296 = arith.constant 5 : index
    %c1_297 = arith.constant 1 : index
    %c0_298 = arith.constant 0 : index
    %317 = vector.load %arg9[%c5_296, %c1_297, %c0_298] : memref<6x6x128xf32, #tpu.memory_space<vmem>>, vector<1x4x128xf32>
    %318 = vector.shape_cast %317 : vector<1x4x128xf32> to vector<4x128xf32>
    %319 = arith.truncf %318 : vector<4x128xf32> to vector<4x128xbf16>
    %c7_299 = arith.constant 7 : index
    %c0_300 = arith.constant 0 : index
    %c0_301 = arith.constant 0 : index
    %320 = vector.load %arg4[%c7_299, %c0_300, %c0_301] : memref<9x128x128xbf16, #tpu.memory_space<vmem>>, vector<1x128x128xbf16>
    %321 = vector.shape_cast %320 : vector<1x128x128xbf16> to vector<128x128xbf16>
    %cst_302 = arith.constant dense<0.000000e+00> : vector<4x128xf32>
    %322 = tpu.matmul %319, %321, %cst_302 {dimension_numbers = #tpu.dot_dimension_numbers<[1], [0], [0], [1], [0, 0, 1, 1], [], []>} : vector<4x128xbf16>, vector<128x128xbf16>, vector<4x128xf32> -> vector<4x128xf32>
    %323 = arith.addf %316, %322 : vector<4x128xf32>
    %c5_303 = arith.constant 5 : index
    %c2_304 = arith.constant 2 : index
    %c0_305 = arith.constant 0 : index
    %324 = vector.load %arg9[%c5_303, %c2_304, %c0_305] : memref<6x6x128xf32, #tpu.memory_space<vmem>>, vector<1x4x128xf32>
    %325 = vector.shape_cast %324 : vector<1x4x128xf32> to vector<4x128xf32>
    %326 = arith.truncf %325 : vector<4x128xf32> to vector<4x128xbf16>
    %c8_306 = arith.constant 8 : index
    %c0_307 = arith.constant 0 : index
    %c0_308 = arith.constant 0 : index
    %327 = vector.load %arg4[%c8_306, %c0_307, %c0_308] : memref<9x128x128xbf16, #tpu.memory_space<vmem>>, vector<1x128x128xbf16>
    %328 = vector.shape_cast %327 : vector<1x128x128xbf16> to vector<128x128xbf16>
    %cst_309 = arith.constant dense<0.000000e+00> : vector<4x128xf32>
    %329 = tpu.matmul %326, %328, %cst_309 {dimension_numbers = #tpu.dot_dimension_numbers<[1], [0], [0], [1], [0, 0, 1, 1], [], []>} : vector<4x128xbf16>, vector<128x128xbf16>, vector<4x128xf32> -> vector<4x128xf32>
    %330 = arith.addf %323, %329 : vector<4x128xf32>
    %c0_310 = arith.constant 0 : index
    %c0_311 = arith.constant 0 : index
    %331 = vector.load %arg5[%c0_310, %c0_311] : memref<1x128xf32, #tpu.memory_space<vmem>>, vector<1x128xf32>
    %332 = vector.broadcast %331 : vector<1x128xf32> to vector<4x128xf32>
    %333 = arith.addf %330, %332 : vector<4x128xf32>
    %cst_312 = arith.constant 0.000000e+00 : f32
    %334 = vector.broadcast %cst_312 : f32 to vector<4x128xf32>
    %335 = arith.maximumf %333, %334 : vector<4x128xf32>
    %cst_313 = arith.constant dense<0.000000e+00> : vector<128xf32>
    %336 = vector.multi_reduction <add>, %335, %cst_313 [0] : vector<4x128xf32> to vector<128xf32>
    %337 = vector.shape_cast %336 : vector<128xf32> to vector<1x128xf32>
    %338 = arith.addf %266, %337 : vector<1x128xf32>
    %cst_314 = arith.constant 6.250000e-02 : f32
    %339 = vector.broadcast %cst_314 : f32 to vector<1x128xf32>
    %340 = arith.mulf %338, %339 : vector<1x128xf32>
    %341 = arith.truncf %340 : vector<1x128xf32> to vector<1x128xbf16>
    %c0_315 = arith.constant 0 : index
    %c0_316 = arith.constant 0 : index
    %342 = vector.load %arg6[%c0_315, %c0_316] : memref<128x2886xbf16, #tpu.memory_space<vmem>>, vector<128x2886xbf16>
    %cst_317 = arith.constant dense<0.000000e+00> : vector<1x2886xf32>
    %343 = tpu.matmul %341, %342, %cst_317 {dimension_numbers = #tpu.dot_dimension_numbers<[1], [0], [0], [1], [0, 0, 1, 1], [], []>} : vector<1x128xbf16>, vector<128x2886xbf16>, vector<1x2886xf32> -> vector<1x2886xf32>
    %c0_318 = arith.constant 0 : index
    %c0_319 = arith.constant 0 : index
    %344 = vector.load %arg7[%c0_318, %c0_319] : memref<1x2886xf32, #tpu.memory_space<vmem>>, vector<1x2886xf32>
    %345 = arith.addf %343, %344 : vector<1x2886xf32>
    %c0_320 = arith.constant 0 : index
    %c0_321 = arith.constant 0 : index
    %c0_322 = arith.constant 0 : index
    %346 = vector.load %arg8[%c0_320, %c0_321, %c0_322] : memref<1x1x2886xf32, #tpu.memory_space<vmem>>, vector<1x1x2886xf32>
    %347 = vector.shape_cast %346 : vector<1x1x2886xf32> to vector<1x2886xf32>
    %348 = vector.shape_cast %345 : vector<1x2886xf32> to vector<1x1x2886xf32>
    tpu.vector_store %arg8[%c0_320, %c0_321, %c0_322], %348 {strides = array<i32>} : memref<1x1x2886xf32, #tpu.memory_space<vmem>>, vector<1x1x2886xf32>,
    return
  }
  func.func @transform_0(%arg0: i32) -> (i32, i32, i32) {
    %c0_i32 = arith.constant 0 : i32
    %c0_i32_0 = arith.constant 0 : i32
    %c0_i32_1 = arith.constant 0 : i32
    return %arg0, %c0_i32, %c0_i32_0 : i32, i32, i32
  }
  func.func @transform_1(%arg0: i32) -> (i32, i32) {
    %c0_i32 = arith.constant 0 : i32
    %c0_i32_0 = arith.constant 0 : i32
    %c0_i32_1 = arith.constant 0 : i32
    return %c0_i32, %c0_i32_0 : i32, i32
  }
  func.func @transform_2(%arg0: i32) -> (i32, i32) {
    %c0_i32 = arith.constant 0 : i32
    %c0_i32_0 = arith.constant 0 : i32
    %c0_i32_1 = arith.constant 0 : i32
    return %c0_i32, %c0_i32_0 : i32, i32
  }
  func.func @transform_3(%arg0: i32) -> (i32, i32, i32) {
    %c0_i32 = arith.constant 0 : i32
    %c0_i32_0 = arith.constant 0 : i32
    %c0_i32_1 = arith.constant 0 : i32
    %c0_i32_2 = arith.constant 0 : i32
    return %c0_i32, %c0_i32_0, %c0_i32_1 : i32, i32, i32
  }
  func.func @transform_4(%arg0: i32) -> (i32, i32) {
    %c0_i32 = arith.constant 0 : i32
    %c0_i32_0 = arith.constant 0 : i32
    %c0_i32_1 = arith.constant 0 : i32
    return %c0_i32, %c0_i32_0 : i32, i32
  }
  func.func @transform_5(%arg0: i32) -> (i32, i32) {
    %c0_i32 = arith.constant 0 : i32
    %c0_i32_0 = arith.constant 0 : i32
    %c0_i32_1 = arith.constant 0 : i32
    return %c0_i32, %c0_i32_0 : i32, i32
  }
  func.func @transform_6(%arg0: i32) -> (i32, i32) {
    %c0_i32 = arith.constant 0 : i32
    %c0_i32_0 = arith.constant 0 : i32
    %c0_i32_1 = arith.constant 0 : i32
    return %c0_i32, %c0_i32_0 : i32, i32
  }
  func.func @transform_7(%arg0: i32) -> (i32, i32, i32) {
    %c0_i32 = arith.constant 0 : i32
    %c0_i32_0 = arith.constant 0 : i32
    %c0_i32_1 = arith.constant 0 : i32
    return %arg0, %c0_i32, %c0_i32_0 : i32, i32, i32
  }
}

</mosaic_0001>

<llo_original>
// kernel: gazenet_forward.1
$region0: #{gazenet_forward.1}
  #allocation0 [shape = 'u32[]', space=smem, size = 0x4, offset = 0x4, fixed_abs, tag = 'smem constant byte address 0x4 - core index']
  #allocation1 [shape = 'u32[144,128]{1,0:T(1,128)}', space=vmem, size = 0x12000, scoped, tag = 'internal scratch']
  #allocation2 [shape = 'f32[6,6,128]{2,1,0:T(8,128)}', space=vmem, size = 0x6000, scoped, tag = 'scratch operand']
  %s0 = inlined_call_operand.vmem [shape: bf16[2,16,48], index: 0, kind: input, shape index: {}]
  %s1 = inlined_call_operand.vmem [shape: bf16[48,128], index: 1, kind: input, shape index: {}]
  %s2 = inlined_call_operand.vmem [shape: f32[1,128], index: 2, kind: input, shape index: {}]
  %s3 = inlined_call_operand.vmem [shape: bf16[9,128,128], index: 3, kind: input, shape index: {}]
  %s4 = inlined_call_operand.vmem [shape: f32[1,128], index: 4, kind: input, shape index: {}]
  %s5 = inlined_call_operand.vmem [shape: bf16[128,2886], index: 5, kind: input, shape index: {}]
  %s6 = inlined_call_operand.vmem [shape: f32[1,2886], index: 6, kind: input, shape index: {}]
  %s7 = inlined_call_operand.vmem [shape: f32[2,1,2886], index: 7, kind: output, shape index: {}]
  %s8 = sld [smem:[#allocation0]]
  $region61: #{gazenet_forward.1} parent=0
    _
  %s10 = ssub.s32 1, %s8
  %s11 = scalar_select 0, %s10, %s8
  loop: start=0, step=1, limit=4
  $region2: #{gazenet_forward.1} parent=0 // loop_pre_header
    _
  $region3: #{gazenet_forward.1} parent=0 // loop_header
    %s13 = sphi 0, %s17
    %p14 = scmp.ge.s32.totalorder %s13, 4
    %s23 = sphi 0, %s25
    %s26 = sphi 0, %s23
    %s27 = sphi 0, %s26
    %s43 = sphi 0, %s27
    %s47 = sphi 0, %s47
    %s49 = sphi 0, %s47
    %s50 = sphi 0, %s49
    %s64 = sphi 0, %s50
    %s68 = sphi 0, %s68
    %s70 = sphi 0, %s68
    %s71 = sphi 0, %s70
    %s85 = sphi 0, %s71
    %s89 = sphi 0, %s89
    %s91 = sphi 0, %s89
    %s92 = sphi 0, %s91
    %s106 = sphi 0, %s92
    %s110 = sphi 0, %s110
    %s112 = sphi 0, %s110
    %s113 = sphi 0, %s112
    %s127 = sphi 0, %s113
    %s131 = sphi 0, %s131
    %s133 = sphi 0, %s131
    %s134 = sphi 0, %s133
    %s148 = sphi 0, %s134
    %s152 = sphi 0, %s152
    %s154 = sphi 0, %s152
    %s155 = sphi 0, %s154
    %s169 = sphi 0, %s155
    %s175 = sphi 0, %s177
    %s178 = sphi 0, %s175
    %s179 = sphi 0, %s178
    %s195 = sphi 0, %s179
  $region4: #{gazenet_forward.1} parent=0 // loop_header_branch
    %16 = sbr.rel (%p14) target = $region8
  $region5: #{gazenet_forward.1} parent=0 // loop_body
    %s18 = ssub.s32 %s13, 1
    %s19 = ssub.s32 %s13, 2
    %s20 = sadd.s32 %s13, 1
    %s21 = ssub.s32 %s13, %s20
    %p22 = scmp.eq.s32.totalorder %s21, 0
    %s24 = sadd.s32 %s23, 1
    %s25 = scalar_select %p22, %s23, %s24
    %p28 = pneg %p22
    %p29 = scmp.eq.s32.totalorder %s13, 1
    %p30 = por %p28, %p29
    %p31 = scmp.ne.s32.totalorder %s23, %s26
    %p32 = scmp.eq.s32.totalorder %s13, 0
    %p33 = por %p31, %p32
    %p34 = scmp.ne.s32.totalorder %s23, %s26
    %p35 = scmp.eq.s32.totalorder %s18, 1
    %p36 = por %p34, %p35
    %p37 = scmp.ne.s32.totalorder %s26, %s27
    %p38 = scmp.eq.s32.totalorder %s18, 0
    %p39 = por %p37, %p38
    %p40 = scmp.ne.s32.totalorder %s26, %s27
    %p41 = scmp.eq.s32.totalorder %s19, 1
    %p42 = por %p40, %p41
    %p44 = scmp.ne.s32.totalorder %s27, %s43
    %p45 = scmp.eq.s32.totalorder %s19, 0
    %p46 = por %p44, %p45
    %s48 = sadd.s32 %s47, 1
    %p51 = scmp.eq.s32.totalorder %s13, 1
    %p52 = scmp.ne.s32.totalorder %s47, %s49
    %p53 = scmp.eq.s32.totalorder %s13, 0
    %p54 = por %p52, %p53
    %p55 = scmp.ne.s32.totalorder %s47, %s49
    %p56 = scmp.eq.s32.totalorder %s18, 1
    %p57 = por %p55, %p56
    %p58 = scmp.ne.s32.totalorder %s49, %s50
    %p59 = scmp.eq.s32.totalorder %s18, 0
    %p60 = por %p58, %p59
    %p61 = scmp.ne.s32.totalorder %s49, %s50
    %p62 = scmp.eq.s32.totalorder %s19, 1
    %p63 = por %p61, %p62
    %p65 = scmp.ne.s32.totalorder %s50, %s64
    %p66 = scmp.eq.s32.totalorder %s19, 0
    %p67 = por %p65, %p66
    %s69 = sadd.s32 %s68, 1
    %p72 = scmp.eq.s32.totalorder %s13, 1
    %p73 = scmp.ne.s32.totalorder %s68, %s70
    %p74 = scmp.eq.s32.totalorder %s13, 0
    %p75 = por %p73, %p74
    %p76 = scmp.ne.s32.totalorder %s68, %s70
    %p77 = scmp.eq.s32.totalorder %s18, 1
    %p78 = por %p76, %p77
    %p79 = scmp.ne.s32.totalorder %s70, %s71
    %p80 = scmp.eq.s32.totalorder %s18, 0
    %p81 = por %p79, %p80
    %p82 = scmp.ne.s32.totalorder %s70, %s71
    %p83 = scmp.eq.s32.totalorder %s19, 1
    %p84 = por %p82, %p83
    %p86 = scmp.ne.s32.totalorder %s71, %s85
    %p87 = scmp.eq.s32.totalorder %s19, 0
    %p88 = por %p86, %p87
    %s90 = sadd.s32 %s89, 1
    %p93 = scmp.eq.s32.totalorder %s13, 1
    %p94 = scmp.ne.s32.totalorder %s89, %s91
    %p95 = scmp.eq.s32.totalorder %s13, 0
    %p96 = por %p94, %p95
    %p97 = scmp.ne.s32.totalorder %s89, %s91
    %p98 = scmp.eq.s32.totalorder %s18, 1
    %p99 = por %p97, %p98
    %p100 = scmp.ne.s32.totalorder %s91, %s92
    %p101 = scmp.eq.s32.totalorder %s18, 0
    %p102 = por %p100, %p101
    %p103 = scmp.ne.s32.totalorder %s91, %s92
    %p104 = scmp.eq.s32.totalorder %s19, 1
    %p105 = por %p103, %p104
    %p107 = scmp.ne.s32.totalorder %s92, %s106
    %p108 = scmp.eq.s32.totalorder %s19, 0
    %p109 = por %p107, %p108
    %s111 = sadd.s32 %s110, 1
    %p114 = scmp.eq.s32.totalorder %s13, 1
    %p115 = scmp.ne.s32.totalorder %s110, %s112
    %p116 = scmp.eq.s32.totalorder %s13, 0
    %p117 = por %p115, %p116
    %p118 = scmp.ne.s32.totalorder %s110, %s112
    %p119 = scmp.eq.s32.totalorder %s18, 1
    %p120 = por %p118, %p119
    %p121 = scmp.ne.s32.totalorder %s112, %s113
    %p122 = scmp.eq.s32.totalorder %s18, 0
    %p123 = por %p121, %p122
    %p124 = scmp.ne.s32.totalorder %s112, %s113
    %p125 = scmp.eq.s32.totalorder %s19, 1
    %p126 = por %p124, %p125
    %p128 = scmp.ne.s32.totalorder %s113, %s127
    %p129 = scmp.eq.s32.totalorder %s19, 0
    %p130 = por %p128, %p129
    %s132 = sadd.s32 %s131, 1
    %p135 = scmp.eq.s32.totalorder %s13, 1
    %p136 = scmp.ne.s32.totalorder %s131, %s133
    %p137 = scmp.eq.s32.totalorder %s13, 0
    %p138 = por %p136, %p137
    %p139 = scmp.ne.s32.totalorder %s131, %s133
    %p140 = scmp.eq.s32.totalorder %s18, 1
    %p141 = por %p139, %p140
    %p142 = scmp.ne.s32.totalorder %s133, %s134
    %p143 = scmp.eq.s32.totalorder %s18, 0
    %p144 = por %p142, %p143
    %p145 = scmp.ne.s32.totalorder %s133, %s134
    %p146 = scmp.eq.s32.totalorder %s19, 1
    %p147 = por %p145, %p146
    %p149 = scmp.ne.s32.totalorder %s134, %s148
    %p150 = scmp.eq.s32.totalorder %s19, 0
    %p151 = por %p149, %p150
    %s153 = sadd.s32 %s152, 1
    %p156 = scmp.eq.s32.totalorder %s13, 1
    %p157 = scmp.ne.s32.totalorder %s152, %s154
    %p158 = scmp.eq.s32.totalorder %s13, 0
    %p159 = por %p157, %p158
    %p160 = scmp.ne.s32.totalorder %s152, %s154
    %p161 = scmp.eq.s32.totalorder %s18, 1
    %p162 = por %p160, %p161
    %p163 = scmp.ne.s32.totalorder %s154, %s155
    %p164 = scmp.eq.s32.totalorder %s18, 0
    %p165 = por %p163, %p164
    %p166 = scmp.ne.s32.totalorder %s154, %s155
    %p167 = scmp.eq.s32.totalorder %s19, 1
    %p168 = por %p166, %p167
    %p170 = scmp.ne.s32.totalorder %s155, %s169
    %p171 = scmp.eq.s32.totalorder %s19, 0
    %p172 = por %p170, %p171
    %s173 = ssub.s32 %s13, %s20
    %p174 = scmp.eq.s32.totalorder %s173, 0
    %s176 = sadd.s32 %s175, 1
    %s177 = scalar_select %p174, %s175, %s176
    %p180 = pneg %p174
    %p181 = scmp.eq.s32.totalorder %s13, 1
    %p182 = por %p180, %p181
    %p183 = scmp.ne.s32.totalorder %s175, %s178
    %p184 = scmp.eq.s32.totalorder %s13, 0
    %p185 = por %p183, %p184
    %p186 = scmp.ne.s32.totalorder %s175, %s178
    %p187 = scmp.eq.s32.totalorder %s18, 1
    %p188 = por %p186, %p187
    %p189 = scmp.ne.s32.totalorder %s178, %s179
    %p190 = scmp.eq.s32.totalorder %s18, 0
    %p191 = por %p189, %p190
    %p192 = scmp.ne.s32.totalorder %s178, %s179
    %p193 = scmp.eq.s32.totalorder %s19, 1
    %p194 = por %p192, %p193
    %p196 = scmp.ne.s32.totalorder %s179, %s195
    %p197 = scmp.eq.s32.totalorder %s19, 0
    %p198 = por %p196, %p197
    %p199 = scmp.le.s32.totalorder 1, %s13
    %p200 = scmp.lt.s32.totalorder %s13, 3
    %p201 = pnand %p199, %p200
    %p202 = pneg %p201
    // Predicated region
    $region9: #{gazenet_forward.1} parent=5 // pred_check
      _
    $region10: #{gazenet_forward.1} parent=5 // pred_check_branch
      %204 = sbr.rel (%p201) target = $region12
    $region11: #{gazenet_forward.1} parent=5 // pred_region
      %s205 = ssub.s32 %s13, 1
      // Predicated region
      $region13: #{gazenet_forward.1} parent=11 // pred_check
        %p206 = pneg %p60
      $region14: #{gazenet_forward.1} parent=11 // pred_check_branch
        %208 = sbr.rel (%p206) target = $region16
      $region15: #{gazenet_forward.1} parent=11 // pred_region
        _
      $region16: #{gazenet_forward.1} parent=11 // pred_fallthru
        _
      // Predicated region
      $region17: #{gazenet_forward.1} parent=11 // pred_check
        %p209 = pneg %p81
      $region18: #{gazenet_forward.1} parent=11 // pred_check_branch
        %211 = sbr.rel (%p209) target = $region20
      $region19: #{gazenet_forward.1} parent=11 // pred_region
        _
      $region20: #{gazenet_forward.1} parent=11 // pred_fallthru
        _
      // Predicated region
      $region21: #{gazenet_forward.1} parent=11 // pred_check
        %p212 = pneg %p102
      $region22: #{gazenet_forward.1} parent=11 // pred_check_branch
        %214 = sbr.rel (%p212) target = $region24
      $region23: #{gazenet_forward.1} parent=11 // pred_region
        _
      $region24: #{gazenet_forward.1} parent=11 // pred_fallthru
        _
      // Predicated region
      $region25: #{gazenet_forward.1} parent=11 // pred_check
        %p215 = pneg %p123
      $region26: #{gazenet_forward.1} parent=11 // pred_check_branch
        %217 = sbr.rel (%p215) target = $region28
      $region27: #{gazenet_forward.1} parent=11 // pred_region
        _
      $region28: #{gazenet_forward.1} parent=11 // pred_fallthru
        _
      // Predicated region
      $region29: #{gazenet_forward.1} parent=11 // pred_check
        %p218 = pneg %p144
      $region30: #{gazenet_forward.1} parent=11 // pred_check_branch
        %220 = sbr.rel (%p218) target = $region32
      $region31: #{gazenet_forward.1} parent=11 // pred_region
        _
      $region32: #{gazenet_forward.1} parent=11 // pred_fallthru
        _
      // Predicated region
      $region33: #{gazenet_forward.1} parent=11 // pred_check
        %p221 = pneg %p165
      $region34: #{gazenet_forward.1} parent=11 // pred_check_branch
        %223 = sbr.rel (%p221) target = $region36
      $region35: #{gazenet_forward.1} parent=11 // pred_region
        _
      $region36: #{gazenet_forward.1} parent=11 // pred_fallthru
        _
    $region12: #{gazenet_forward.1} parent=5 // pred_fallthru
      _
    %p224 = scmp.lt.s32.totalorder %s13, 2
    // Predicated region
    $region37: #{gazenet_forward.1} parent=5 // pred_check
      %p225 = pneg %p224
    $region38: #{gazenet_forward.1} parent=5 // pred_check_branch
      %227 = sbr.rel (%p225) target = $region40
    $region39: #{gazenet_forward.1} parent=5 // pred_region
      // Predicated region
      $region41: #{gazenet_forward.1} parent=39 // pred_check
        %p228 = pneg %p33
      $region42: #{gazenet_forward.1} parent=39 // pred_check_branch
        %230 = sbr.rel (%p228) target = $region44
      $region43: #{gazenet_forward.1} parent=39 // pred_region
        %p231 = scmp.lt.s32.totalorder %s13, 1
        %s232 = scalar_select %p231, %s13, 1
        %s233 = smul.addr %s232, 2
        %s234 = smul.addr %s233, 4
        %s235 = scalar_lea.vmem %s0, %s234
      $region44: #{gazenet_forward.1} parent=39 // pred_fallthru
        _
    $region40: #{gazenet_forward.1} parent=5 // pred_fallthru
      _
    %p236 = scmp.le.s32.totalorder 1, %s13
    %p237 = scmp.lt.s32.totalorder %s13, 3
    %p238 = pnand %p236, %p237
    %p239 = pneg %p238
    // Predicated region
    $region45: #{gazenet_forward.1} parent=5 // pred_check
      _
    $region46: #{gazenet_forward.1} parent=5 // pred_check_branch
      %241 = sbr.rel (%p238) target = $region48
    $region47: #{gazenet_forward.1} parent=5 // pred_region
      %s242 = ssub.s32 %s13, 1
      %p243 = scmp.lt.s32.totalorder %s18, 1
      %s244 = scalar_select %p243, %s18, 1
      %s245 = smul.addr %s244, 2
      %s246 = smul.addr %s245, 4
      %s247 = scalar_lea.vmem %s0, %s246
      %p248 = pneg %p39
      %p249 = pneg %p36
      %p250 = pneg %p60
      %p251 = pneg %p57
      %p252 = pneg %p81
      %p253 = pneg %p78
      %p254 = pneg %p102
      %p255 = pneg %p99
      %p256 = pneg %p123
      %p257 = pneg %p120
      %p258 = pneg %p144
      %p259 = pneg %p141
      %p260 = pneg %p165
      %p261 = pneg %p162
      %p262 = pneg %p191
      %p263 = pneg %p188
      %p264 = scmp.lt.s32.totalorder %s18, 1
      %s265 = scalar_select %p264, %s18, 1
      %s266 = smul.addr %s265, 23
      %s267 = scalar_lea.vmem %s7, %s266
      %p268 = scmp.lt.s32.totalorder %s18, 1
      %s269 = scalar_select %p268, %s18, 1
      %s270 = smul.addr %s269, 2
      %s271 = smul.addr %s270, 4
      %s272 = scalar_lea.vmem %s0, %s271
      %p273 = scmp.lt.s32.totalorder %s18, 1
      %s274 = scalar_select %p273, %s18, 1
      %s275 = smul.addr %s274, 23
      %s276 = scalar_lea.vmem %s7, %s275
      %278 = vst [vmem:[#allocation2] sm:$0x3f] 0.0
      %279 = vst [vmem:[#allocation2 + $0x8] sm:$0x3f] 0.0
      %280 = vst [vmem:[#allocation2 + $0x10] sm:$0x3f] 0.0
      %281 = vst [vmem:[#allocation2 + $0x18] sm:$0x3f] 0.0
      %282 = vst [vmem:[#allocation2 + $0x20] sm:$0x3f] 0.0
      %283 = vst [vmem:[#allocation2 + $0x28] sm:$0x3f] 0.0
      %v284 = vld [vmem:[%s272] sm:$0x3]
      %v285 = vld [vmem:[%s1] sm:$0xf]
      %v286 = vld [vmem:[%s1 + $0x4] sm:$0xf]
      %v287 = vld [vmem:[%s1 + $0x8] sm:$0xf]
      %v288 = vld [vmem:[%s1 + $0xc] sm:$0xf]
      %v289 = vld [vmem:[%s1 + $0x10] sm:$0xf]
      %v290 = vld [vmem:[%s1 + $0x14] sm:$0xf]
      %v291 = vld [vmem:[%s2] sm:$0x1]
      %v293 = vlaneseq
      %v294 = vshrl.u32 %v293, 7
      %v295 = vsub.s32 0, %v294
      %v296 = vrot.slane %v291, %v295
      %v304 = vunpack.c.l.b16 %v285
      %v305 = vunpack.c.l.b16 %v286
      %v306 = vunpack.c.l.b16 %v287
      %v307 = vunpack.c.l.b16 %v288
      %v308 = vunpack.c.l.b16 %v289
      %v309 = vunpack.c.l.b16 %v290
      %v310 = vpack.c.b16 %v305, %v304
      %v311 = vpack.c.b16 %v307, %v306
      %v312 = vpack.c.b16 %v309, %v308
      %vm316 = vcmask 392192
      %v318 = vsel %vm316, %v284, 0
      %320 = vmatprep.subr.bf16.mxu0 0
      %321 = vmatpush1.bf16.msra.mxu0 %v310
      %322 = vmatprep.subr.bf16.mxu0 0
      %323 = vmatpush1.bf16.msra.mxu0 %v311
      %324 = vmatprep.subr.bf16.mxu0 0
      %325 = vmatpush1.bf16.msra.mxu0 %v312
      %326 = vmatprep.subr.bf16.mxu0 0
      %327 = vmatpush1.bf16.msra.mxu0 0
      %328 = vmatprep.subr.bf16.mxu0 0
      %329 = vmatpush1.bf16.msra.mxu0 0
      %330 = vmatprep.subr.bf16.mxu0 0
      %331 = vmatpush1.bf16.msra.mxu0 0
      %332 = vmatprep.subr.bf16.mxu0 0
      %333 = vmatpush1.bf16.msra.mxu0 0
      %334 = vmatprep.subr.bf16.mxu0 0
      %335 = vmatpush1.bf16.msra.mxu0 0
      %336 = vmatprep.subr.bf16.mxu0 0
      %337 = vmatpush1.bf16.msra.mxu0 0
      %338 = vmatprep.subr.bf16.mxu0 0
      %339 = vmatpush1.bf16.msra.mxu0 0
      %340 = vmatprep.subr.bf16.mxu0 0
      %341 = vmatpush1.bf16.msra.mxu0 0
      %342 = vmatprep.subr.bf16.mxu0 0
      %343 = vmatpush1.bf16.msra.mxu0 0
      %344 = vmatprep.subr.bf16.mxu0 0
      %345 = vmatpush1.bf16.msra.mxu0 0
      %346 = vmatprep.subr.bf16.mxu0 0
      %347 = vmatpush1.bf16.msra.mxu0 0
      %348 = vmatprep.subr.bf16.mxu0 0
      %349 = vmatpush1.bf16.msra.mxu0 0
      %350 = vmatprep.subr.bf16.mxu0 0
      %351 = vmatpush1.bf16.msra.mxu0 0
      %352 = vmatprep.mubr.bf16.mxu0 0
      %353 = vmatmul.mubr.bf16.gmra.mrb[0].mxu0 %v318
      %v354 = vpop.f32.mrb[0].mxu0
      %v355 = vadd.f32 %v296, %v354
      %v356 = vpop.f32.mrb[0].mxu0
      %v357 = vpop.f32.mrb[0].mxu0
      %v358 = vpop.f32.mrb[0].mxu0
      %359 = vdwg.mxu0
      %v360 = vmax.f32 %v355, 0.0
      %s361 = scalar_lea.vmem [#allocation2], 8
      %362 = vst [vmem:[%s361 + $0x1] sm:$0xf] %v360
      %v363 = vld [vmem:[%s272] sm:$0xc]
      %v364 = vld [vmem:[%s1] sm:$0xf]
      %v365 = vld [vmem:[%s1 + $0x4] sm:$0xf]
      %v366 = vld [vmem:[%s1 + $0x8] sm:$0xf]
      %v367 = vld [vmem:[%s1 + $0xc] sm:$0xf]
      %v368 = vld [vmem:[%s1 + $0x10] sm:$0xf]
      %v369 = vld [vmem:[%s1 + $0x14] sm:$0xf]
      %v370 = vld [vmem:[%s2] sm:$0x1]
      %v372 = vlaneseq
      %v373 = vshrl.u32 %v372, 7
      %v374 = vsub.s32 0, %v373
      %v375 = vrot.slane %v370, %v374
      %v378 = vunpack.c.l.b16 %v363
      %v379 = vpack.c.b16 %v378, %v378
      %v380 = vrot.slane %v379, 2
      %v387 = vunpack.c.l.b16 %v364
      %v388 = vunpack.c.l.b16 %v365
      %v389 = vunpack.c.l.b16 %v366
      %v390 = vunpack.c.l.b16 %v367
      %v391 = vunpack.c.l.b16 %v368
      %v392 = vunpack.c.l.b16 %v369
      %v393 = vpack.c.b16 %v388, %v387
      %v394 = vpack.c.b16 %v390, %v389
      %v395 = vpack.c.b16 %v392, %v391
      %v400 = vsel %vm316, %v380, 0
      %402 = vmatprep.subr.bf16.mxu0 0
      %403 = vmatpush1.bf16.msra.mxu0 %v393
      %404 = vmatprep.subr.bf16.mxu0 0
      %405 = vmatpush1.bf16.msra.mxu0 %v394
      %406 = vmatprep.subr.bf16.mxu0 0
      %407 = vmatpush1.bf16.msra.mxu0 %v395
      %408 = vmatprep.subr.bf16.mxu0 0
      %409 = vmatpush1.bf16.msra.mxu0 0
      %410 = vmatprep.subr.bf16.mxu0 0
      %411 = vmatpush1.bf16.msra.mxu0 0
      %412 = vmatprep.subr.bf16.mxu0 0
      %413 = vmatpush1.bf16.msra.mxu0 0
      %414 = vmatprep.subr.bf16.mxu0 0
      %415 = vmatpush1.bf16.msra.mxu0 0
      %416 = vmatprep.subr.bf16.mxu0 0
      %417 = vmatpush1.bf16.msra.mxu0 0
      %418 = vmatprep.subr.bf16.mxu0 0
      %419 = vmatpush1.bf16.msra.mxu0 0
      %420 = vmatprep.subr.bf16.mxu0 0
      %421 = vmatpush1.bf16.msra.mxu0 0
      %422 = vmatprep.subr.bf16.mxu0 0
      %423 = vmatpush1.bf16.msra.mxu0 0
      %424 = vmatprep.subr.bf16.mxu0 0
      %425 = vmatpush1.bf16.msra.mxu0 0
      %426 = vmatprep.subr.bf16.mxu0 0
      %427 = vmatpush1.bf16.msra.mxu0 0
      %428 = vmatprep.subr.bf16.mxu0 0
      %429 = vmatpush1.bf16.msra.mxu0 0
      %430 = vmatprep.subr.bf16.mxu0 0
      %431 = vmatpush1.bf16.msra.mxu0 0
      %432 = vmatprep.subr.bf16.mxu0 0
      %433 = vmatpush1.bf16.msra.mxu0 0
      %434 = vmatprep.mubr.bf16.mxu0 0
      %435 = vmatmul.mubr.bf16.gmra.mrb[0].mxu0 %v400
      %v436 = vpop.f32.mrb[0].mxu0
      %v437 = vadd.f32 %v375, %v436
      %v438 = vpop.f32.mrb[0].mxu0
      %v439 = vpop.f32.mrb[0].mxu0
      %v440 = vpop.f32.mrb[0].mxu0
      %441 = vdwg.mxu0
      %v442 = vmax.f32 %v437, 0.0
      %s443 = scalar_lea.vmem [#allocation2], 16
      %444 = vst [vmem:[%s443 + $0x1] sm:$0xf] %v442
      %v445 = vld [vmem:[%s272 + $0x4] sm:$0x3]
      %v446 = vld [vmem:[%s1] sm:$0xf]
      %v447 = vld [vmem:[%s1 + $0x4] sm:$0xf]
      %v448 = vld [vmem:[%s1 + $0x8] sm:$0xf]
      %v449 = vld [vmem:[%s1 + $0xc] sm:$0xf]
      %v450 = vld [vmem:[%s1 + $0x10] sm:$0xf]
      %v451 = vld [vmem:[%s1 + $0x14] sm:$0xf]
      %v452 = vld [vmem:[%s2] sm:$0x1]
      %v454 = vlaneseq
      %v455 = vshrl.u32 %v454, 7
      %v456 = vsub.s32 0, %v455
      %v457 = vrot.slane %v452, %v456
      %v465 = vunpack.c.l.b16 %v446
      %v466 = vunpack.c.l.b16 %v447
      %v467 = vunpack.c.l.b16 %v448
      %v468 = vunpack.c.l.b16 %v449
      %v469 = vunpack.c.l.b16 %v450
      %v470 = vunpack.c.l.b16 %v451
      %v471 = vpack.c.b16 %v466, %v465
      %v472 = vpack.c.b16 %v468, %v467
      %v473 = vpack.c.b16 %v470, %v469
      %v478 = vsel %vm316, %v445, 0
      %480 = vmatprep.subr.bf16.mxu0 0
      %481 = vmatpush1.bf16.msra.mxu0 %v471
      %482 = vmatprep.subr.bf16.mxu0 0
      %483 = vmatpush1.bf16.msra.mxu0 %v472
      %484 = vmatprep.subr.bf16.mxu0 0
      %485 = vmatpush1.bf16.msra.mxu0 %v473
      %486 = vmatprep.subr.bf16.mxu0 0
      %487 = vmatpush1.bf16.msra.mxu0 0
      %488 = vmatprep.subr.bf16.mxu0 0
      %489 = vmatpush1.bf16.msra.mxu0 0
      %490 = vmatprep.subr.bf16.mxu0 0
      %491 = vmatpush1.bf16.msra.mxu0 0
      %492 = vmatprep.subr.bf16.mxu0 0
      %493 = vmatpush1.bf16.msra.mxu0 0
      %494 = vmatprep.subr.bf16.mxu0 0
      %495 = vmatpush1.bf16.msra.mxu0 0
      %496 = vmatprep.subr.bf16.mxu0 0
      %497 = vmatpush1.bf16.msra.mxu0 0
      %498 = vmatprep.subr.bf16.mxu0 0
      %499 = vmatpush1.bf16.msra.mxu0 0
      %500 = vmatprep.subr.bf16.mxu0 0
      %501 = vmatpush1.bf16.msra.mxu0 0
      %502 = vmatprep.subr.bf16.mxu0 0
      %503 = vmatpush1.bf16.msra.mxu0 0
      %504 = vmatprep.subr.bf16.mxu0 0
      %505 = vmatpush1.bf16.msra.mxu0 0
      %506 = vmatprep.subr.bf16.mxu0 0
      %507 = vmatpush1.bf16.msra.mxu0 0
      %508 = vmatprep.subr.bf16.mxu0 0
      %509 = vmatpush1.bf16.msra.mxu0 0
      %510 = vmatprep.subr.bf16.mxu0 0
      %511 = vmatpush1.bf16.msra.mxu0 0
      %512 = vmatprep.mubr.bf16.mxu0 0
      %513 = vmatmul.mubr.bf16.gmra.mrb[0].mxu0 %v478
      %v514 = vpop.f32.mrb[0].mxu0
      %v515 = vadd.f32 %v457, %v514
      %v516 = vpop.f32.mrb[0].mxu0
      %v517 = vpop.f32.mrb[0].mxu0
      %v518 = vpop.f32.mrb[0].mxu0
      %519 = vdwg.mxu0
      %v520 = vmax.f32 %v515, 0.0
      %s521 = scalar_lea.vmem [#allocation2], 24
      %522 = vst [vmem:[%s521 + $0x1] sm:$0xf] %v520
      %v523 = vld [vmem:[%s272 + $0x4] sm:$0xc]
      %v524 = vld [vmem:[%s1] sm:$0xf]
      %v525 = vld [vmem:[%s1 + $0x4] sm:$0xf]
      %v526 = vld [vmem:[%s1 + $0x8] sm:$0xf]
      %v527 = vld [vmem:[%s1 + $0xc] sm:$0xf]
      %v528 = vld [vmem:[%s1 + $0x10] sm:$0xf]
      %v529 = vld [vmem:[%s1 + $0x14] sm:$0xf]
      %v530 = vld [vmem:[%s2] sm:$0x1]
      %v532 = vlaneseq
      %v533 = vshrl.u32 %v532, 7
      %v534 = vsub.s32 0, %v533
      %v535 = vrot.slane %v530, %v534
      %v538 = vunpack.c.l.b16 %v523
      %v539 = vpack.c.b16 %v538, %v538
      %v540 = vrot.slane %v539, 2
      %v547 = vunpack.c.l.b16 %v524
      %v548 = vunpack.c.l.b16 %v525
      %v549 = vunpack.c.l.b16 %v526
      %v550 = vunpack.c.l.b16 %v527
      %v551 = vunpack.c.l.b16 %v528
      %v552 = vunpack.c.l.b16 %v529
      %v553 = vpack.c.b16 %v548, %v547
      %v554 = vpack.c.b16 %v550, %v549
      %v555 = vpack.c.b16 %v552, %v551
      %v560 = vsel %vm316, %v540, 0
      %562 = vmatprep.subr.bf16.mxu0 0
      %563 = vmatpush1.bf16.msra.mxu0 %v553
      %564 = vmatprep.subr.bf16.mxu0 0
      %565 = vmatpush1.bf16.msra.mxu0 %v554
      %566 = vmatprep.subr.bf16.mxu0 0
      %567 = vmatpush1.bf16.msra.mxu0 %v555
      %568 = vmatprep.subr.bf16.mxu0 0
      %569 = vmatpush1.bf16.msra.mxu0 0
      %570 = vmatprep.subr.bf16.mxu0 0
      %571 = vmatpush1.bf16.msra.mxu0 0
      %572 = vmatprep.subr.bf16.mxu0 0
      %573 = vmatpush1.bf16.msra.mxu0 0
      %574 = vmatprep.subr.bf16.mxu0 0
      %575 = vmatpush1.bf16.msra.mxu0 0
      %576 = vmatprep.subr.bf16.mxu0 0
      %577 = vmatpush1.bf16.msra.mxu0 0
      %578 = vmatprep.subr.bf16.mxu0 0
      %579 = vmatpush1.bf16.msra.mxu0 0
      %580 = vmatprep.subr.bf16.mxu0 0
      %581 = vmatpush1.bf16.msra.mxu0 0
      %582 = vmatprep.subr.bf16.mxu0 0
      %583 = vmatpush1.bf16.msra.mxu0 0
      %584 = vmatprep.subr.bf16.mxu0 0
      %585 = vmatpush1.bf16.msra.mxu0 0
      %586 = vmatprep.subr.bf16.mxu0 0
      %587 = vmatpush1.bf16.msra.mxu0 0
      %588 = vmatprep.subr.bf16.mxu0 0
      %589 = vmatpush1.bf16.msra.mxu0 0
      %590 = vmatprep.subr.bf16.mxu0 0
      %591 = vmatpush1.bf16.msra.mxu0 0
      %592 = vmatprep.subr.bf16.mxu0 0
      %593 = vmatpush1.bf16.msra.mxu0 0
      %594 = vmatprep.mubr.bf16.mxu0 0
      %595 = vmatmul.mubr.bf16.gmra.mrb[0].mxu0 %v560
      %v596 = vpop.f32.mrb[0].mxu0
      %v597 = vadd.f32 %v535, %v596
      %v598 = vpop.f32.mrb[0].mxu0
      %v599 = vpop.f32.mrb[0].mxu0
      %v600 = vpop.f32.mrb[0].mxu0
      %601 = vdwg.mxu0
      %v602 = vmax.f32 %v597, 0.0
      %s603 = scalar_lea.vmem [#allocation2], 32
      %604 = vst [vmem:[%s603 + $0x1] sm:$0xf] %v602
      %v605 = vld [vmem:[#allocation2] sm:$0xf]
      %v606 = vpack.c.bf16 %v605, %v605
      %v607 = vld [vmem:[%s3] sm:$0xf]
      %v608 = vld [vmem:[%s3 + $0x4] sm:$0xf]
      %v609 = vld [vmem:[%s3 + $0x8] sm:$0xf]
      %v610 = vld [vmem:[%s3 + $0xc] sm:$0xf]
      %v611 = vld [vmem:[%s3 + $0x10] sm:$0xf]
      %v612 = vld [vmem:[%s3 + $0x14] sm:$0xf]
      %v613 = vld [vmem:[%s3 + $0x18] sm:$0xf]
      %v614 = vld [vmem:[%s3 + $0x1c] sm:$0xf]
      %v615 = vld [vmem:[%s3 + $0x20] sm:$0xf]
      %v616 = vld [vmem:[%s3 + $0x24] sm:$0xf]
      %v617 = vld [vmem:[%s3 + $0x28] sm:$0xf]
      %v618 = vld [vmem:[%s3 + $0x2c] sm:$0xf]
      %v619 = vld [vmem:[%s3 + $0x30] sm:$0xf]
      %v620 = vld [vmem:[%s3 + $0x34] sm:$0xf]
      %v621 = vld [vmem:[%s3 + $0x38] sm:$0xf]
      %v622 = vld [vmem:[%s3 + $0x3c] sm:$0xf]
      %v623 = vld [vmem:[#allocation2 + $0x1] sm:$0xf]
      %v624 = vpack.c.bf16 %v623, %v623
      %s625 = scalar_lea.vmem %s3, 64
      %v626 = vld [vmem:[%s625] sm:$0xf]
      %v627 = vld [vmem:[%s625 + $0x4] sm:$0xf]
      %v628 = vld [vmem:[%s625 + $0x8] sm:$0xf]
      %v629 = vld [vmem:[%s625 + $0xc] sm:$0xf]
      %v630 = vld [vmem:[%s625 + $0x10] sm:$0xf]
      %v631 = vld [vmem:[%s625 + $0x14] sm:$0xf]
      %v632 = vld [vmem:[%s625 + $0x18] sm:$0xf]
      %v633 = vld [vmem:[%s625 + $0x1c] sm:$0xf]
      %v634 = vld [vmem:[%s625 + $0x20] sm:$0xf]
      %v635 = vld [vmem:[%s625 + $0x24] sm:$0xf]
      %v636 = vld [vmem:[%s625 + $0x28] sm:$0xf]
      %v637 = vld [vmem:[%s625 + $0x2c] sm:$0xf]
      %v638 = vld [vmem:[%s625 + $0x30] sm:$0xf]
      %v639 = vld [vmem:[%s625 + $0x34] sm:$0xf]
      %v640 = vld [vmem:[%s625 + $0x38] sm:$0xf]
      %v641 = vld [vmem:[%s625 + $0x3c] sm:$0xf]
      %v658 = vunpack.c.l.b16 %v626
      %v659 = vunpack.c.l.b16 %v627
      %v660 = vunpack.c.l.b16 %v628
      %v661 = vunpack.c.l.b16 %v629
      %v662 = vunpack.c.l.b16 %v630
      %v663 = vunpack.c.l.b16 %v631
      %v664 = vunpack.c.l.b16 %v632
      %v665 = vunpack.c.l.b16 %v633
      %v666 = vunpack.c.l.b16 %v634
      %v667 = vunpack.c.l.b16 %v635
      %v668 = vunpack.c.l.b16 %v636
      %v669 = vunpack.c.l.b16 %v637
      %v670 = vunpack.c.l.b16 %v638
      %v671 = vunpack.c.l.b16 %v639
      %v672 = vunpack.c.l.b16 %v640
      %v673 = vunpack.c.l.b16 %v641
      %v674 = vpack.c.b16 %v659, %v658
      %v675 = vpack.c.b16 %v661, %v660
      %v676 = vpack.c.b16 %v663, %v662
      %v677 = vpack.c.b16 %v665, %v664
      %v678 = vpack.c.b16 %v667, %v666
      %v679 = vpack.c.b16 %v669, %v668
      %v680 = vpack.c.b16 %v671, %v670
      %v681 = vpack.c.b16 %v673, %v672
      %690 = vmatprep.subr.bf16.mxu0 0
      %691 = vmatpush1.bf16.msra.mxu0 %v674
      %692 = vmatprep.subr.bf16.mxu0 0
      %693 = vmatpush1.bf16.msra.mxu0 %v675
      %694 = vmatprep.subr.bf16.mxu0 0
      %695 = vmatpush1.bf16.msra.mxu0 %v676
      %696 = vmatprep.subr.bf16.mxu0 0
      %697 = vmatpush1.bf16.msra.mxu0 %v677
      %698 = vmatprep.subr.bf16.mxu0 0
      %699 = vmatpush1.bf16.msra.mxu0 %v678
      %700 = vmatprep.subr.bf16.mxu0 0
      %701 = vmatpush1.bf16.msra.mxu0 %v679
      %702 = vmatprep.subr.bf16.mxu0 0
      %703 = vmatpush1.bf16.msra.mxu0 %v680
      %704 = vmatprep.subr.bf16.mxu0 0
      %705 = vmatpush1.bf16.msra.mxu0 %v681
      %706 = vmatprep.subr.bf16.mxu0 0
      %707 = vmatpush1.bf16.msra.mxu0 0
      %708 = vmatprep.subr.bf16.mxu0 0
      %709 = vmatpush1.bf16.msra.mxu0 0
      %710 = vmatprep.subr.bf16.mxu0 0
      %711 = vmatpush1.bf16.msra.mxu0 0
      %712 = vmatprep.subr.bf16.mxu0 0
      %713 = vmatpush1.bf16.msra.mxu0 0
      %714 = vmatprep.subr.bf16.mxu0 0
      %715 = vmatpush1.bf16.msra.mxu0 0
      %716 = vmatprep.subr.bf16.mxu0 0
      %717 = vmatpush1.bf16.msra.mxu0 0
      %718 = vmatprep.subr.bf16.mxu0 0
      %719 = vmatpush1.bf16.msra.mxu0 0
      %720 = vmatprep.subr.bf16.mxu0 0
      %721 = vmatpush1.bf16.msra.mxu0 0
      %722 = vmatprep.mubr.bf16.mxu0 0
      %723 = vmatmul.mubr.bf16.gmra.mrb[0].mxu0 %v624
      %v724 = vpop.f32.mrb[0].mxu0
      %v725 = vadd.f32 0.0, %v724
      %v726 = vpop.f32.mrb[0].mxu0
      %v727 = vpop.f32.mrb[0].mxu0
      %v728 = vpop.f32.mrb[0].mxu0
      %729 = vdwg.mxu0
      %v746 = vunpack.c.l.b16 %v607
      %v747 = vunpack.c.l.b16 %v608
      %v748 = vunpack.c.l.b16 %v609
      %v749 = vunpack.c.l.b16 %v610
      %v750 = vunpack.c.l.b16 %v611
      %v751 = vunpack.c.l.b16 %v612
      %v752 = vunpack.c.l.b16 %v613
      %v753 = vunpack.c.l.b16 %v614
      %v754 = vunpack.c.l.b16 %v615
      %v755 = vunpack.c.l.b16 %v616
      %v756 = vunpack.c.l.b16 %v617
      %v757 = vunpack.c.l.b16 %v618
      %v758 = vunpack.c.l.b16 %v619
      %v759 = vunpack.c.l.b16 %v620
      %v760 = vunpack.c.l.b16 %v621
      %v761 = vunpack.c.l.b16 %v622
      %v762 = vpack.c.b16 %v747, %v746
      %v763 = vpack.c.b16 %v749, %v748
      %v764 = vpack.c.b16 %v751, %v750
      %v765 = vpack.c.b16 %v753, %v752
      %v766 = vpack.c.b16 %v755, %v754
      %v767 = vpack.c.b16 %v757, %v756
      %v768 = vpack.c.b16 %v759, %v758
      %v769 = vpack.c.b16 %v761, %v760
      %778 = vmatprep.subr.bf16.mxu0 0
      %779 = vmatpush1.bf16.msra.mxu0 %v762
      %780 = vmatprep.subr.bf16.mxu0 0
      %781 = vmatpush1.bf16.msra.mxu0 %v763
      %782 = vmatprep.subr.bf16.mxu0 0
      %783 = vmatpush1.bf16.msra.mxu0 %v764
      %784 = vmatprep.subr.bf16.mxu0 0
      %785 = vmatpush1.bf16.msra.mxu0 %v765
      %786 = vmatprep.subr.bf16.mxu0 0
      %787 = vmatpush1.bf16.msra.mxu0 %v766
      %788 = vmatprep.subr.bf16.mxu0 0
      %789 = vmatpush1.bf16.msra.mxu0 %v767
      %790 = vmatprep.subr.bf16.mxu0 0
      %791 = vmatpush1.bf16.msra.mxu0 %v768
      %792 = vmatprep.subr.bf16.mxu0 0
      %793 = vmatpush1.bf16.msra.mxu0 %v769
      %794 = vmatprep.subr.bf16.mxu0 0
      %795 = vmatpush1.bf16.msra.mxu0 0
      %796 = vmatprep.subr.bf16.mxu0 0
      %797 = vmatpush1.bf16.msra.mxu0 0
      %798 = vmatprep.subr.bf16.mxu0 0
      %799 = vmatpush1.bf16.msra.mxu0 0
      %800 = vmatprep.subr.bf16.mxu0 0
      %801 = vmatpush1.bf16.msra.mxu0 0
      %802 = vmatprep.subr.bf16.mxu0 0
      %803 = vmatpush1.bf16.msra.mxu0 0
      %804 = vmatprep.subr.bf16.mxu0 0
      %805 = vmatpush1.bf16.msra.mxu0 0
      %806 = vmatprep.subr.bf16.mxu0 0
      %807 = vmatpush1.bf16.msra.mxu0 0
      %808 = vmatprep.subr.bf16.mxu0 0
      %809 = vmatpush1.bf16.msra.mxu0 0
      %810 = vmatprep.mubr.bf16.mxu0 0
      %811 = vmatmul.mubr.bf16.gmra.mrb[0].mxu0 %v606
      %v812 = vpop.f32.mrb[0].mxu0
      %v813 = vadd.f32 %v725, %v812
      %v814 = vpop.f32.mrb[0].mxu0
      %v815 = vpop.f32.mrb[0].mxu0
      %v816 = vpop.f32.mrb[0].mxu0
      %817 = vdwg.mxu0
      %v818 = vld [vmem:[#allocation2 + $0x2] sm:$0xf]
      %v819 = vpack.c.bf16 %v818, %v818
      %s820 = scalar_lea.vmem %s3, 128
      %v821 = vld [vmem:[%s820] sm:$0xf]
      %v822 = vld [vmem:[%s820 + $0x4] sm:$0xf]
      %v823 = vld [vmem:[%s820 + $0x8] sm:$0xf]
      %v824 = vld [vmem:[%s820 + $0xc] sm:$0xf]
      %v825 = vld [vmem:[%s820 + $0x10] sm:$0xf]
      %v826 = vld [vmem:[%s820 + $0x14] sm:$0xf]
      %v827 = vld [vmem:[%s820 + $0x18] sm:$0xf]
      %v828 = vld [vmem:[%s820 + $0x1c] sm:$0xf]
      %v829 = vld [vmem:[%s820 + $0x20] sm:$0xf]
      %v830 = vld [vmem:[%s820 + $0x24] sm:$0xf]
      %v831 = vld [vmem:[%s820 + $0x28] sm:$0xf]
      %v832 = vld [vmem:[%s820 + $0x2c] sm:$0xf]
      %v833 = vld [vmem:[%s820 + $0x30] sm:$0xf]
      %v834 = vld [vmem:[%s820 + $0x34] sm:$0xf]
      %v835 = vld [vmem:[%s820 + $0x38] sm:$0xf]
      %v836 = vld [vmem:[%s820 + $0x3c] sm:$0xf]
      %v853 = vunpack.c.l.b16 %v821
      %v854 = vunpack.c.l.b16 %v822
      %v855 = vunpack.c.l.b16 %v823
      %v856 = vunpack.c.l.b16 %v824
      %v857 = vunpack.c.l.b16 %v825
      %v858 = vunpack.c.l.b16 %v826
      %v859 = vunpack.c.l.b16 %v827
      %v860 = vunpack.c.l.b16 %v828
      %v861 = vunpack.c.l.b16 %v829
      %v862 = vunpack.c.l.b16 %v830
      %v863 = vunpack.c.l.b16 %v831
      %v864 = vunpack.c.l.b16 %v832
      %v865 = vunpack.c.l.b16 %v833
      %v866 = vunpack.c.l.b16 %v834
      %v867 = vunpack.c.l.b16 %v835
      %v868 = vunpack.c.l.b16 %v836
      %v869 = vpack.c.b16 %v854, %v853
      %v870 = vpack.c.b16 %v856, %v855
      %v871 = vpack.c.b16 %v858, %v857
      %v872 = vpack.c.b16 %v860, %v859
      %v873 = vpack.c.b16 %v862, %v861
      %v874 = vpack.c.b16 %v864, %v863
      %v875 = vpack.c.b16 %v866, %v865
      %v876 = vpack.c.b16 %v868, %v867
      %885 = vmatprep.subr.bf16.mxu0 0
      %886 = vmatpush1.bf16.msra.mxu0 %v869
      %887 = vmatprep.subr.bf16.mxu0 0
      %888 = vmatpush1.bf16.msra.mxu0 %v870
      %889 = vmatprep.subr.bf16.mxu0 0
      %890 = vmatpush1.bf16.msra.mxu0 %v871
      %891 = vmatprep.subr.bf16.mxu0 0
      %892 = vmatpush1.bf16.msra.mxu0 %v872
      %893 = vmatprep.subr.bf16.mxu0 0
      %894 = vmatpush1.bf16.msra.mxu0 %v873
      %895 = vmatprep.subr.bf16.mxu0 0
      %896 = vmatpush1.bf16.msra.mxu0 %v874
      %897 = vmatprep.subr.bf16.mxu0 0
      %898 = vmatpush1.bf16.msra.mxu0 %v875
      %899 = vmatprep.subr.bf16.mxu0 0
      %900 = vmatpush1.bf16.msra.mxu0 %v876
      %901 = vmatprep.subr.bf16.mxu0 0
      %902 = vmatpush1.bf16.msra.mxu0 0
      %903 = vmatprep.subr.bf16.mxu0 0
      %904 = vmatpush1.bf16.msra.mxu0 0
      %905 = vmatprep.subr.bf16.mxu0 0
      %906 = vmatpush1.bf16.msra.mxu0 0
      %907 = vmatprep.subr.bf16.mxu0 0
      %908 = vmatpush1.bf16.msra.mxu0 0
      %909 = vmatprep.subr.bf16.mxu0 0
      %910 = vmatpush1.bf16.msra.mxu0 0
      %911 = vmatprep.subr.bf16.mxu0 0
      %912 = vmatpush1.bf16.msra.mxu0 0
      %913 = vmatprep.subr.bf16.mxu0 0
      %914 = vmatpush1.bf16.msra.mxu0 0
      %915 = vmatprep.subr.bf16.mxu0 0
      %916 = vmatpush1.bf16.msra.mxu0 0
      %917 = vmatprep.mubr.bf16.mxu0 0
      %918 = vmatmul.mubr.bf16.gmra.mrb[0].mxu0 %v819
      %v919 = vpop.f32.mrb[0].mxu0
      %v920 = vadd.f32 0.0, %v919
      %v921 = vpop.f32.mrb[0].mxu0
      %v922 = vpop.f32.mrb[0].mxu0
      %v923 = vpop.f32.mrb[0].mxu0
      %924 = vdwg.mxu0
      %v925 = vadd.f32 %v813, %v920
      %v926 = vld [vmem:[%s361] sm:$0xf]
      %v927 = vpack.c.bf16 %v926, %v926
      %s928 = scalar_lea.vmem %s3, 192
      %v929 = vld [vmem:[%s928] sm:$0xf]
      %v930 = vld [vmem:[%s928 + $0x4] sm:$0xf]
      %v931 = vld [vmem:[%s928 + $0x8] sm:$0xf]
      %v932 = vld [vmem:[%s928 + $0xc] sm:$0xf]
      %v933 = vld [vmem:[%s928 + $0x10] sm:$0xf]
      %v934 = vld [vmem:[%s928 + $0x14] sm:$0xf]
      %v935 = vld [vmem:[%s928 + $0x18] sm:$0xf]
      %v936 = vld [vmem:[%s928 + $0x1c] sm:$0xf]
      %v937 = vld [vmem:[%s928 + $0x20] sm:$0xf]
      %v938 = vld [vmem:[%s928 + $0x24] sm:$0xf]
      %v939 = vld [vmem:[%s928 + $0x28] sm:$0xf]
      %v940 = vld [vmem:[%s928 + $0x2c] sm:$0xf]
      %v941 = vld [vmem:[%s928 + $0x30] sm:$0xf]
      %v942 = vld [vmem:[%s928 + $0x34] sm:$0xf]
      %v943 = vld [vmem:[%s928 + $0x38] sm:$0xf]
      %v944 = vld [vmem:[%s928 + $0x3c] sm:$0xf]
      %v961 = vunpack.c.l.b16 %v929
      %v962 = vunpack.c.l.b16 %v930
      %v963 = vunpack.c.l.b16 %v931
      %v964 = vunpack.c.l.b16 %v932
      %v965 = vunpack.c.l.b16 %v933
      %v966 = vunpack.c.l.b16 %v934
      %v967 = vunpack.c.l.b16 %v935
      %v968 = vunpack.c.l.b16 %v936
      %v969 = vunpack.c.l.b16 %v937
      %v970 = vunpack.c.l.b16 %v938
      %v971 = vunpack.c.l.b16 %v939
      %v972 = vunpack.c.l.b16 %v940
      %v973 = vunpack.c.l.b16 %v941
      %v974 = vunpack.c.l.b16 %v942
      %v975 = vunpack.c.l.b16 %v943
      %v976 = vunpack.c.l.b16 %v944
      %v977 = vpack.c.b16 %v962, %v961
      %v978 = vpack.c.b16 %v964, %v963
      %v979 = vpack.c.b16 %v966, %v965
      %v980 = vpack.c.b16 %v968, %v967
      %v981 = vpack.c.b16 %v970, %v969
      %v982 = vpack.c.b16 %v972, %v971
      %v983 = vpack.c.b16 %v974, %v973
      %v984 = vpack.c.b16 %v976, %v975
      %993 = vmatprep.subr.bf16.mxu0 0
      %994 = vmatpush1.bf16.msra.mxu0 %v977
      %995 = vmatprep.subr.bf16.mxu0 0
      %996 = vmatpush1.bf16.msra.mxu0 %v978
      %997 = vmatprep.subr.bf16.mxu0 0
      %998 = vmatpush1.bf16.msra.mxu0 %v979
      %999 = vmatprep.subr.bf16.mxu0 0
      %1000 = vmatpush1.bf16.msra.mxu0 %v980
      %1001 = vmatprep.subr.bf16.mxu0 0
      %1002 = vmatpush1.bf16.msra.mxu0 %v981
      %1003 = vmatprep.subr.bf16.mxu0 0
      %1004 = vmatpush1.bf16.msra.mxu0 %v982
      %1005 = vmatprep.subr.bf16.mxu0 0
      %1006 = vmatpush1.bf16.msra.mxu0 %v983
      %1007 = vmatprep.subr.bf16.mxu0 0
      %1008 = vmatpush1.bf16.msra.mxu0 %v984
      %1009 = vmatprep.subr.bf16.mxu0 0
      %1010 = vmatpush1.bf16.msra.mxu0 0
      %1011 = vmatprep.subr.bf16.mxu0 0
      %1012 = vmatpush1.bf16.msra.mxu0 0
      %1013 = vmatprep.subr.bf16.mxu0 0
      %1014 = vmatpush1.bf16.msra.mxu0 0
      %1015 = vmatprep.subr.bf16.mxu0 0
      %1016 = vmatpush1.bf16.msra.mxu0 0
      %1017 = vmatprep.subr.bf16.mxu0 0
      %1018 = vmatpush1.bf16.msra.mxu0 0
      %1019 = vmatprep.subr.bf16.mxu0 0
      %1020 = vmatpush1.bf16.msra.mxu0 0
      %1021 = vmatprep.subr.bf16.mxu0 0
      %1022 = vmatpush1.bf16.msra.mxu0 0
      %1023 = vmatprep.subr.bf16.mxu0 0
      %1024 = vmatpush1.bf16.msra.mxu0 0
      %1025 = vmatprep.mubr.bf16.mxu0 0
      %1026 = vmatmul.mubr.bf16.gmra.mrb[0].mxu0 %v927
      %v1027 = vpop.f32.mrb[0].mxu0
      %v1028 = vadd.f32 0.0, %v1027
      %v1029 = vpop.f32.mrb[0].mxu0
      %v1030 = vpop.f32.mrb[0].mxu0
      %v1031 = vpop.f32.mrb[0].mxu0
      %1032 = vdwg.mxu0
      %v1033 = vadd.f32 %v925, %v1028
      %v1034 = vld [vmem:[%s361 + $0x1] sm:$0xf]
      %v1035 = vpack.c.bf16 %v1034, %v1034
      %s1036 = scalar_lea.vmem %s3, 256
      %v1037 = vld [vmem:[%s1036] sm:$0xf]
      %v1038 = vld [vmem:[%s1036 + $0x4] sm:$0xf]
      %v1039 = vld [vmem:[%s1036 + $0x8] sm:$0xf]
      %v1040 = vld [vmem:[%s1036 + $0xc] sm:$0xf]
      %v1041 = vld [vmem:[%s1036 + $0x10] sm:$0xf]
      %v1042 = vld [vmem:[%s1036 + $0x14] sm:$0xf]
      %v1043 = vld [vmem:[%s1036 + $0x18] sm:$0xf]
      %v1044 = vld [vmem:[%s1036 + $0x1c] sm:$0xf]
      %v1045 = vld [vmem:[%s1036 + $0x20] sm:$0xf]
      %v1046 = vld [vmem:[%s1036 + $0x24] sm:$0xf]
      %v1047 = vld [vmem:[%s1036 + $0x28] sm:$0xf]
      %v1048 = vld [vmem:[%s1036 + $0x2c] sm:$0xf]
      %v1049 = vld [vmem:[%s1036 + $0x30] sm:$0xf]
      %v1050 = vld [vmem:[%s1036 + $0x34] sm:$0xf]
      %v1051 = vld [vmem:[%s1036 + $0x38] sm:$0xf]
      %v1052 = vld [vmem:[%s1036 + $0x3c] sm:$0xf]
      %v1069 = vunpack.c.l.b16 %v1037
      %v1070 = vunpack.c.l.b16 %v1038
      %v1071 = vunpack.c.l.b16 %v1039
      %v1072 = vunpack.c.l.b16 %v1040
      %v1073 = vunpack.c.l.b16 %v1041
      %v1074 = vunpack.c.l.b16 %v1042
      %v1075 = vunpack.c.l.b16 %v1043
      %v1076 = vunpack.c.l.b16 %v1044
      %v1077 = vunpack.c.l.b16 %v1045
      %v1078 = vunpack.c.l.b16 %v1046
      %v1079 = vunpack.c.l.b16 %v1047
      %v1080 = vunpack.c.l.b16 %v1048
      %v1081 = vunpack.c.l.b16 %v1049
      %v1082 = vunpack.c.l.b16 %v1050
      %v1083 = vunpack.c.l.b16 %v1051
      %v1084 = vunpack.c.l.b16 %v1052
      %v1085 = vpack.c.b16 %v1070, %v1069
      %v1086 = vpack.c.b16 %v1072, %v1071
      %v1087 = vpack.c.b16 %v1074, %v1073
      %v1088 = vpack.c.b16 %v1076, %v1075
      %v1089 = vpack.c.b16 %v1078, %v1077
      %v1090 = vpack.c.b16 %v1080, %v1079
      %v1091 = vpack.c.b16 %v1082, %v1081
      %v1092 = vpack.c.b16 %v1084, %v1083
      %1101 = vmatprep.subr.bf16.mxu0 0
      %1102 = vmatpush1.bf16.msra.mxu0 %v1085
      %1103 = vmatprep.subr.bf16.mxu0 0
      %1104 = vmatpush1.bf16.msra.mxu0 %v1086
      %1105 = vmatprep.subr.bf16.mxu0 0
      %1106 = vmatpush1.bf16.msra.mxu0 %v1087
      %1107 = vmatprep.subr.bf16.mxu0 0
      %1108 = vmatpush1.bf16.msra.mxu0 %v1088
      %1109 = vmatprep.subr.bf16.mxu0 0
      %1110 = vmatpush1.bf16.msra.mxu0 %v1089
      %1111 = vmatprep.subr.bf16.mxu0 0
      %1112 = vmatpush1.bf16.msra.mxu0 %v1090
      %1113 = vmatprep.subr.bf16.mxu0 0
      %1114 = vmatpush1.bf16.msra.mxu0 %v1091
      %1115 = vmatprep.subr.bf16.mxu0 0
      %1116 = vmatpush1.bf16.msra.mxu0 %v1092
      %1117 = vmatprep.subr.bf16.mxu0 0
      %1118 = vmatpush1.bf16.msra.mxu0 0
      %1119 = vmatprep.subr.bf16.mxu0 0
      %1120 = vmatpush1.bf16.msra.mxu0 0
      %1121 = vmatprep.subr.bf16.mxu0 0
      %1122 = vmatpush1.bf16.msra.mxu0 0
      %1123 = vmatprep.subr.bf16.mxu0 0
      %1124 = vmatpush1.bf16.msra.mxu0 0
      %1125 = vmatprep.subr.bf16.mxu0 0
      %1126 = vmatpush1.bf16.msra.mxu0 0
      %1127 = vmatprep.subr.bf16.mxu0 0
      %1128 = vmatpush1.bf16.msra.mxu0 0
      %1129 = vmatprep.subr.bf16.mxu0 0
      %1130 = vmatpush1.bf16.msra.mxu0 0
      %1131 = vmatprep.subr.bf16.mxu0 0
      %1132 = vmatpush1.bf16.msra.mxu0 0
      %1133 = vmatprep.mubr.bf16.mxu0 0
      %1134 = vmatmul.mubr.bf16.gmra.mrb[0].mxu0 %v1035
      %v1135 = vpop.f32.mrb[0].mxu0
      %v1136 = vadd.f32 0.0, %v1135
      %v1137 = vpop.f32.mrb[0].mxu0
      %v1138 = vpop.f32.mrb[0].mxu0
      %v1139 = vpop.f32.mrb[0].mxu0
      %1140 = vdwg.mxu0
      %v1141 = vadd.f32 %v1033, %v1136
      %v1142 = vld [vmem:[%s361 + $0x2] sm:$0xf]
      %v1143 = vpack.c.bf16 %v1142, %v1142
      %s1144 = scalar_lea.vmem %s3, 320
      %v1145 = vld [vmem:[%s1144] sm:$0xf]
      %v1146 = vld [vmem:[%s1144 + $0x4] sm:$0xf]
      %v1147 = vld [vmem:[%s1144 + $0x8] sm:$0xf]
      %v1148 = vld [vmem:[%s1144 + $0xc] sm:$0xf]
      %v1149 = vld [vmem:[%s1144 + $0x10] sm:$0xf]
      %v1150 = vld [vmem:[%s1144 + $0x14] sm:$0xf]
      %v1151 = vld [vmem:[%s1144 + $0x18] sm:$0xf]
      %v1152 = vld [vmem:[%s1144 + $0x1c] sm:$0xf]
      %v1153 = vld [vmem:[%s1144 + $0x20] sm:$0xf]
      %v1154 = vld [vmem:[%s1144 + $0x24] sm:$0xf]
      %v1155 = vld [vmem:[%s1144 + $0x28] sm:$0xf]
      %v1156 = vld [vmem:[%s1144 + $0x2c] sm:$0xf]
      %v1157 = vld [vmem:[%s1144 + $0x30] sm:$0xf]
      %v1158 = vld [vmem:[%s1144 + $0x34] sm:$0xf]
      %v1159 = vld [vmem:[%s1144 + $0x38] sm:$0xf]
      %v1160 = vld [vmem:[%s1144 + $0x3c] sm:$0xf]
      %v1177 = vunpack.c.l.b16 %v1145
      %v1178 = vunpack.c.l.b16 %v1146
      %v1179 = vunpack.c.l.b16 %v1147
      %v1180 = vunpack.c.l.b16 %v1148
      %v1181 = vunpack.c.l.b16 %v1149
      %v1182 = vunpack.c.l.b16 %v1150
      %v1183 = vunpack.c.l.b16 %v1151
      %v1184 = vunpack.c.l.b16 %v1152
      %v1185 = vunpack.c.l.b16 %v1153
      %v1186 = vunpack.c.l.b16 %v1154
      %v1187 = vunpack.c.l.b16 %v1155
      %v1188 = vunpack.c.l.b16 %v1156
      %v1189 = vunpack.c.l.b16 %v1157
      %v1190 = vunpack.c.l.b16 %v1158
      %v1191 = vunpack.c.l.b16 %v1159
      %v1192 = vunpack.c.l.b16 %v1160
      %v1193 = vpack.c.b16 %v1178, %v1177
      %v1194 = vpack.c.b16 %v1180, %v1179
      %v1195 = vpack.c.b16 %v1182, %v1181
      %v1196 = vpack.c.b16 %v1184, %v1183
      %v1197 = vpack.c.b16 %v1186, %v1185
      %v1198 = vpack.c.b16 %v1188, %v1187
      %v1199 = vpack.c.b16 %v1190, %v1189
      %v1200 = vpack.c.b16 %v1192, %v1191
      %1209 = vmatprep.subr.bf16.mxu0 0
      %1210 = vmatpush1.bf16.msra.mxu0 %v1193
      %1211 = vmatprep.subr.bf16.mxu0 0
      %1212 = vmatpush1.bf16.msra.mxu0 %v1194
      %1213 = vmatprep.subr.bf16.mxu0 0
      %1214 = vmatpush1.bf16.msra.mxu0 %v1195
      %1215 = vmatprep.subr.bf16.mxu0 0
      %1216 = vmatpush1.bf16.msra.mxu0 %v1196
      %1217 = vmatprep.subr.bf16.mxu0 0
      %1218 = vmatpush1.bf16.msra.mxu0 %v1197
      %1219 = vmatprep.subr.bf16.mxu0 0
      %1220 = vmatpush1.bf16.msra.mxu0 %v1198
      %1221 = vmatprep.subr.bf16.mxu0 0
      %1222 = vmatpush1.bf16.msra.mxu0 %v1199
      %1223 = vmatprep.subr.bf16.mxu0 0
      %1224 = vmatpush1.bf16.msra.mxu0 %v1200
      %1225 = vmatprep.subr.bf16.mxu0 0
      %1226 = vmatpush1.bf16.msra.mxu0 0
      %1227 = vmatprep.subr.bf16.mxu0 0
      %1228 = vmatpush1.bf16.msra.mxu0 0
      %1229 = vmatprep.subr.bf16.mxu0 0
      %1230 = vmatpush1.bf16.msra.mxu0 0
      %1231 = vmatprep.subr.bf16.mxu0 0
      %1232 = vmatpush1.bf16.msra.mxu0 0
      %1233 = vmatprep.subr.bf16.mxu0 0
      %1234 = vmatpush1.bf16.msra.mxu0 0
      %1235 = vmatprep.subr.bf16.mxu0 0
      %1236 = vmatpush1.bf16.msra.mxu0 0
      %1237 = vmatprep.subr.bf16.mxu0 0
      %1238 = vmatpush1.bf16.msra.mxu0 0
      %1239 = vmatprep.subr.bf16.mxu0 0
      %1240 = vmatpush1.bf16.msra.mxu0 0
      %1241 = vmatprep.mubr.bf16.mxu0 0
      %1242 = vmatmul.mubr.bf16.gmra.mrb[0].mxu0 %v1143
      %v1243 = vpop.f32.mrb[0].mxu0
      %v1244 = vadd.f32 0.0, %v1243
      %v1245 = vpop.f32.mrb[0].mxu0
      %v1246 = vpop.f32.mrb[0].mxu0
      %v1247 = vpop.f32.mrb[0].mxu0
      %1248 = vdwg.mxu0
      %v1249 = vadd.f32 %v1141, %v1244
      %v1250 = vld [vmem:[%s443] sm:$0xf]
      %v1251 = vpack.c.bf16 %v1250, %v1250
      %s1252 = scalar_lea.vmem %s3, 384
      %v1253 = vld [vmem:[%s1252] sm:$0xf]
      %v1254 = vld [vmem:[%s1252 + $0x4] sm:$0xf]
      %v1255 = vld [vmem:[%s1252 + $0x8] sm:$0xf]
      %v1256 = vld [vmem:[%s1252 + $0xc] sm:$0xf]
      %v1257 = vld [vmem:[%s1252 + $0x10] sm:$0xf]
      %v1258 = vld [vmem:[%s1252 + $0x14] sm:$0xf]
      %v1259 = vld [vmem:[%s1252 + $0x18] sm:$0xf]
      %v1260 = vld [vmem:[%s1252 + $0x1c] sm:$0xf]
      %v1261 = vld [vmem:[%s1252 + $0x20] sm:$0xf]
      %v1262 = vld [vmem:[%s1252 + $0x24] sm:$0xf]
      %v1263 = vld [vmem:[%s1252 + $0x28] sm:$0xf]
      %v1264 = vld [vmem:[%s1252 + $0x2c] sm:$0xf]
      %v1265 = vld [vmem:[%s1252 + $0x30] sm:$0xf]
      %v1266 = vld [vmem:[%s1252 + $0x34] sm:$0xf]
      %v1267 = vld [vmem:[%s1252 + $0x38] sm:$0xf]
      %v1268 = vld [vmem:[%s1252 + $0x3c] sm:$0xf]
      %v1285 = vunpack.c.l.b16 %v1253
      %v1286 = vunpack.c.l.b16 %v1254
      %v1287 = vunpack.c.l.b16 %v1255
      %v1288 = vunpack.c.l.b16 %v1256
      %v1289 = vunpack.c.l.b16 %v1257
      %v1290 = vunpack.c.l.b16 %v1258
      %v1291 = vunpack.c.l.b16 %v1259
      %v1292 = vunpack.c.l.b16 %v1260
      %v1293 = vunpack.c.l.b16 %v1261
      %v1294 = vunpack.c.l.b16 %v1262
      %v1295 = vunpack.c.l.b16 %v1263
      %v1296 = vunpack.c.l.b16 %v1264
      %v1297 = vunpack.c.l.b16 %v1265
      %v1298 = vunpack.c.l.b16 %v1266
      %v1299 = vunpack.c.l.b16 %v1267
      %v1300 = vunpack.c.l.b16 %v1268
      %v1301 = vpack.c.b16 %v1286, %v1285
      %v1302 = vpack.c.b16 %v1288, %v1287
      %v1303 = vpack.c.b16 %v1290, %v1289
      %v1304 = vpack.c.b16 %v1292, %v1291
      %v1305 = vpack.c.b16 %v1294, %v1293
      %v1306 = vpack.c.b16 %v1296, %v1295
      %v1307 = vpack.c.b16 %v1298, %v1297
      %v1308 = vpack.c.b16 %v1300, %v1299
      %1317 = vmatprep.subr.bf16.mxu0 0
      %1318 = vmatpush1.bf16.msra.mxu0 %v1301
      %1319 = vmatprep.subr.bf16.mxu0 0
      %1320 = vmatpush1.bf16.msra.mxu0 %v1302
      %1321 = vmatprep.subr.bf16.mxu0 0
      %1322 = vmatpush1.bf16.msra.mxu0 %v1303
      %1323 = vmatprep.subr.bf16.mxu0 0
      %1324 = vmatpush1.bf16.msra.mxu0 %v1304
      %1325 = vmatprep.subr.bf16.mxu0 0
      %1326 = vmatpush1.bf16.msra.mxu0 %v1305
      %1327 = vmatprep.subr.bf16.mxu0 0
      %1328 = vmatpush1.bf16.msra.mxu0 %v1306
      %1329 = vmatprep.subr.bf16.mxu0 0
      %1330 = vmatpush1.bf16.msra.mxu0 %v1307
      %1331 = vmatprep.subr.bf16.mxu0 0
      %1332 = vmatpush1.bf16.msra.mxu0 %v1308
      %1333 = vmatprep.subr.bf16.mxu0 0
      %1334 = vmatpush1.bf16.msra.mxu0 0
      %1335 = vmatprep.subr.bf16.mxu0 0
      %1336 = vmatpush1.bf16.msra.mxu0 0
      %1337 = vmatprep.subr.bf16.mxu0 0
      %1338 = vmatpush1.bf16.msra.mxu0 0
      %1339 = vmatprep.subr.bf16.mxu0 0
      %1340 = vmatpush1.bf16.msra.mxu0 0
      %1341 = vmatprep.subr.bf16.mxu0 0
      %1342 = vmatpush1.bf16.msra.mxu0 0
      %1343 = vmatprep.subr.bf16.mxu0 0
      %1344 = vmatpush1.bf16.msra.mxu0 0
      %1345 = vmatprep.subr.bf16.mxu0 0
      %1346 = vmatpush1.bf16.msra.mxu0 0
      %1347 = vmatprep.subr.bf16.mxu0 0
      %1348 = vmatpush1.bf16.msra.mxu0 0
      %1349 = vmatprep.mubr.bf16.mxu0 0
      %1350 = vmatmul.mubr.bf16.gmra.mrb[0].mxu0 %v1251
      %v1351 = vpop.f32.mrb[0].mxu0
      %v1352 = vadd.f32 0.0, %v1351
      %v1353 = vpop.f32.mrb[0].mxu0
      %v1354 = vpop.f32.mrb[0].mxu0
      %v1355 = vpop.f32.mrb[0].mxu0
      %1356 = vdwg.mxu0
      %v1357 = vadd.f32 %v1249, %v1352
      %v1358 = vld [vmem:[%s443 + $0x1] sm:$0xf]
      %v1359 = vpack.c.bf16 %v1358, %v1358
      %s1360 = scalar_lea.vmem %s3, 448
      %v1361 = vld [vmem:[%s1360] sm:$0xf]
      %v1362 = vld [vmem:[%s1360 + $0x4] sm:$0xf]
      %v1363 = vld [vmem:[%s1360 + $0x8] sm:$0xf]
      %v1364 = vld [vmem:[%s1360 + $0xc] sm:$0xf]
      %v1365 = vld [vmem:[%s1360 + $0x10] sm:$0xf]
      %v1366 = vld [vmem:[%s1360 + $0x14] sm:$0xf]
      %v1367 = vld [vmem:[%s1360 + $0x18] sm:$0xf]
      %v1368 = vld [vmem:[%s1360 + $0x1c] sm:$0xf]
      %v1369 = vld [vmem:[%s1360 + $0x20] sm:$0xf]
      %v1370 = vld [vmem:[%s1360 + $0x24] sm:$0xf]
      %v1371 = vld [vmem:[%s1360 + $0x28] sm:$0xf]
      %v1372 = vld [vmem:[%s1360 + $0x2c] sm:$0xf]
      %v1373 = vld [vmem:[%s1360 + $0x30] sm:$0xf]
      %v1374 = vld [vmem:[%s1360 + $0x34] sm:$0xf]
      %v1375 = vld [vmem:[%s1360 + $0x38] sm:$0xf]
      %v1376 = vld [vmem:[%s1360 + $0x3c] sm:$0xf]
      %v1393 = vunpack.c.l.b16 %v1361
      %v1394 = vunpack.c.l.b16 %v1362
      %v1395 = vunpack.c.l.b16 %v1363
      %v1396 = vunpack.c.l.b16 %v1364
      %v1397 = vunpack.c.l.b16 %v1365
      %v1398 = vunpack.c.l.b16 %v1366
      %v1399 = vunpack.c.l.b16 %v1367
      %v1400 = vunpack.c.l.b16 %v1368
      %v1401 = vunpack.c.l.b16 %v1369
      %v1402 = vunpack.c.l.b16 %v1370
      %v1403 = vunpack.c.l.b16 %v1371
      %v1404 = vunpack.c.l.b16 %v1372
      %v1405 = vunpack.c.l.b16 %v1373
      %v1406 = vunpack.c.l.b16 %v1374
      %v1407 = vunpack.c.l.b16 %v1375
      %v1408 = vunpack.c.l.b16 %v1376
      %v1409 = vpack.c.b16 %v1394, %v1393
      %v1410 = vpack.c.b16 %v1396, %v1395
      %v1411 = vpack.c.b16 %v1398, %v1397
      %v1412 = vpack.c.b16 %v1400, %v1399
      %v1413 = vpack.c.b16 %v1402, %v1401
      %v1414 = vpack.c.b16 %v1404, %v1403
      %v1415 = vpack.c.b16 %v1406, %v1405
      %v1416 = vpack.c.b16 %v1408, %v1407
      %1425 = vmatprep.subr.bf16.mxu0 0
      %1426 = vmatpush1.bf16.msra.mxu0 %v1409
      %1427 = vmatprep.subr.bf16.mxu0 0
      %1428 = vmatpush1.bf16.msra.mxu0 %v1410
      %1429 = vmatprep.subr.bf16.mxu0 0
      %1430 = vmatpush1.bf16.msra.mxu0 %v1411
      %1431 = vmatprep.subr.bf16.mxu0 0
      %1432 = vmatpush1.bf16.msra.mxu0 %v1412
      %1433 = vmatprep.subr.bf16.mxu0 0
      %1434 = vmatpush1.bf16.msra.mxu0 %v1413
      %1435 = vmatprep.subr.bf16.mxu0 0
      %1436 = vmatpush1.bf16.msra.mxu0 %v1414
      %1437 = vmatprep.subr.bf16.mxu0 0
      %1438 = vmatpush1.bf16.msra.mxu0 %v1415
      %1439 = vmatprep.subr.bf16.mxu0 0
      %1440 = vmatpush1.bf16.msra.mxu0 %v1416
      %1441 = vmatprep.subr.bf16.mxu0 0
      %1442 = vmatpush1.bf16.msra.mxu0 0
      %1443 = vmatprep.subr.bf16.mxu0 0
      %1444 = vmatpush1.bf16.msra.mxu0 0
      %1445 = vmatprep.subr.bf16.mxu0 0
      %1446 = vmatpush1.bf16.msra.mxu0 0
      %1447 = vmatprep.subr.bf16.mxu0 0
      %1448 = vmatpush1.bf16.msra.mxu0 0
      %1449 = vmatprep.subr.bf16.mxu0 0
      %1450 = vmatpush1.bf16.msra.mxu0 0
      %1451 = vmatprep.subr.bf16.mxu0 0
      %1452 = vmatpush1.bf16.msra.mxu0 0
      %1453 = vmatprep.subr.bf16.mxu0 0
      %1454 = vmatpush1.bf16.msra.mxu0 0
      %1455 = vmatprep.subr.bf16.mxu0 0
      %1456 = vmatpush1.bf16.msra.mxu0 0
      %1457 = vmatprep.mubr.bf16.mxu0 0
      %1458 = vmatmul.mubr.bf16.gmra.mrb[0].mxu0 %v1359
      %v1459 = vpop.f32.mrb[0].mxu0
      %v1460 = vadd.f32 0.0, %v1459
      %v1461 = vpop.f32.mrb[0].mxu0
      %v1462 = vpop.f32.mrb[0].mxu0
      %v1463 = vpop.f32.mrb[0].mxu0
      %1464 = vdwg.mxu0
      %v1465 = vadd.f32 %v1357, %v1460
      %v1466 = vld [vmem:[%s443 + $0x2] sm:$0xf]
      %v1467 = vpack.c.bf16 %v1466, %v1466
      %s1468 = scalar_lea.vmem %s3, 512
      %v1469 = vld [vmem:[%s1468] sm:$0xf]
      %v1470 = vld [vmem:[%s1468 + $0x4] sm:$0xf]
      %v1471 = vld [vmem:[%s1468 + $0x8] sm:$0xf]
      %v1472 = vld [vmem:[%s1468 + $0xc] sm:$0xf]
      %v1473 = vld [vmem:[%s1468 + $0x10] sm:$0xf]
      %v1474 = vld [vmem:[%s1468 + $0x14] sm:$0xf]
      %v1475 = vld [vmem:[%s1468 + $0x18] sm:$0xf]
      %v1476 = vld [vmem:[%s1468 + $0x1c] sm:$0xf]
      %v1477 = vld [vmem:[%s1468 + $0x20] sm:$0xf]
      %v1478 = vld [vmem:[%s1468 + $0x24] sm:$0xf]
      %v1479 = vld [vmem:[%s1468 + $0x28] sm:$0xf]
      %v1480 = vld [vmem:[%s1468 + $0x2c] sm:$0xf]
      %v1481 = vld [vmem:[%s1468 + $0x30] sm:$0xf]
      %v1482 = vld [vmem:[%s1468 + $0x34] sm:$0xf]
      %v1483 = vld [vmem:[%s1468 + $0x38] sm:$0xf]
      %v1484 = vld [vmem:[%s1468 + $0x3c] sm:$0xf]
      %v1501 = vunpack.c.l.b16 %v1469
      %v1502 = vunpack.c.l.b16 %v1470
      %v1503 = vunpack.c.l.b16 %v1471
      %v1504 = vunpack.c.l.b16 %v1472
      %v1505 = vunpack.c.l.b16 %v1473
      %v1506 = vunpack.c.l.b16 %v1474
      %v1507 = vunpack.c.l.b16 %v1475
      %v1508 = vunpack.c.l.b16 %v1476
      %v1509 = vunpack.c.l.b16 %v1477
      %v1510 = vunpack.c.l.b16 %v1478
      %v1511 = vunpack.c.l.b16 %v1479
      %v1512 = vunpack.c.l.b16 %v1480
      %v1513 = vunpack.c.l.b16 %v1481
      %v1514 = vunpack.c.l.b16 %v1482
      %v1515 = vunpack.c.l.b16 %v1483
      %v1516 = vunpack.c.l.b16 %v1484
      %v1517 = vpack.c.b16 %v1502, %v1501
      %v1518 = vpack.c.b16 %v1504, %v1503
      %v1519 = vpack.c.b16 %v1506, %v1505
      %v1520 = vpack.c.b16 %v1508, %v1507
      %v1521 = vpack.c.b16 %v1510, %v1509
      %v1522 = vpack.c.b16 %v1512, %v1511
      %v1523 = vpack.c.b16 %v1514, %v1513
      %v1524 = vpack.c.b16 %v1516, %v1515
      %1533 = vmatprep.subr.bf16.mxu0 0
      %1534 = vmatpush1.bf16.msra.mxu0 %v1517
      %1535 = vmatprep.subr.bf16.mxu0 0
      %1536 = vmatpush1.bf16.msra.mxu0 %v1518
      %1537 = vmatprep.subr.bf16.mxu0 0
      %1538 = vmatpush1.bf16.msra.mxu0 %v1519
      %1539 = vmatprep.subr.bf16.mxu0 0
      %1540 = vmatpush1.bf16.msra.mxu0 %v1520
      %1541 = vmatprep.subr.bf16.mxu0 0
      %1542 = vmatpush1.bf16.msra.mxu0 %v1521
      %1543 = vmatprep.subr.bf16.mxu0 0
      %1544 = vmatpush1.bf16.msra.mxu0 %v1522
      %1545 = vmatprep.subr.bf16.mxu0 0
      %1546 = vmatpush1.bf16.msra.mxu0 %v1523
      %1547 = vmatprep.subr.bf16.mxu0 0
      %1548 = vmatpush1.bf16.msra.mxu0 %v1524
      %1549 = vmatprep.subr.bf16.mxu0 0
      %1550 = vmatpush1.bf16.msra.mxu0 0
      %1551 = vmatprep.subr.bf16.mxu0 0
      %1552 = vmatpush1.bf16.msra.mxu0 0
      %1553 = vmatprep.subr.bf16.mxu0 0
      %1554 = vmatpush1.bf16.msra.mxu0 0
      %1555 = vmatprep.subr.bf16.mxu0 0
      %1556 = vmatpush1.bf16.msra.mxu0 0
      %1557 = vmatprep.subr.bf16.mxu0 0
      %1558 = vmatpush1.bf16.msra.mxu0 0
      %1559 = vmatprep.subr.bf16.mxu0 0
      %1560 = vmatpush1.bf16.msra.mxu0 0
      %1561 = vmatprep.subr.bf16.mxu0 0
      %1562 = vmatpush1.bf16.msra.mxu0 0
      %1563 = vmatprep.subr.bf16.mxu0 0
      %1564 = vmatpush1.bf16.msra.mxu0 0
      %1565 = vmatprep.mubr.bf16.mxu0 0
      %1566 = vmatmul.mubr.bf16.gmra.mrb[0].mxu0 %v1467
      %v1567 = vpop.f32.mrb[0].mxu0
      %v1568 = vadd.f32 0.0, %v1567
      %v1569 = vpop.f32.mrb[0].mxu0
      %v1570 = vpop.f32.mrb[0].mxu0
      %v1571 = vpop.f32.mrb[0].mxu0
      %1572 = vdwg.mxu0
      %v1573 = vadd.f32 %v1465, %v1568
      %v1574 = vld [vmem:[%s4] sm:$0x1]
      %v1576 = vlaneseq
      %v1577 = vshrl.u32 %v1576, 7
      %v1578 = vsub.s32 0, %v1577
      %v1579 = vrot.slane %v1574, %v1578
      %v1581 = vadd.f32 %v1573, %v1579
      %v1582 = vmax.f32 %v1581, 0.0
      %vm1583 = vcmask 1043456
      %v1584 = vsel %vm1583, %v1582, 0.0
      %v1585 = vrot.slane %v1584, 4
      %v1586 = vadd.f32 %v1584, %v1585
      %v1587 = vrot.slane %v1586, 2
      %v1588 = vadd.f32 %v1586, %v1587
      %v1589 = vrot.slane %v1588, 1
      %v1590 = vadd.f32 %v1588, %v1589
      %v1591 = vadd.f32 %v1590, 0.0
      %1592 = vmatprep.subr.bf16.mxu0 0
      %1593 = vmatpush1.bf16.msra.mxu0 %v674
      %1594 = vmatprep.subr.bf16.mxu0 0
      %1595 = vmatpush1.bf16.msra.mxu0 %v675
      %1596 = vmatprep.subr.bf16.mxu0 0
      %1597 = vmatpush1.bf16.msra.mxu0 %v676
      %1598 = vmatprep.subr.bf16.mxu0 0
      %1599 = vmatpush1.bf16.msra.mxu0 %v677
      %1600 = vmatprep.subr.bf16.mxu0 0
      %1601 = vmatpush1.bf16.msra.mxu0 %v678
      %1602 = vmatprep.subr.bf16.mxu0 0
      %1603 = vmatpush1.bf16.msra.mxu0 %v679
      %1604 = vmatprep.subr.bf16.mxu0 0
      %1605 = vmatpush1.bf16.msra.mxu0 %v680
      %1606 = vmatprep.subr.bf16.mxu0 0
      %1607 = vmatpush1.bf16.msra.mxu0 %v681
      %1608 = vmatprep.subr.bf16.mxu0 0
      %1609 = vmatpush1.bf16.msra.mxu0 0
      %1610 = vmatprep.subr.bf16.mxu0 0
      %1611 = vmatpush1.bf16.msra.mxu0 0
      %1612 = vmatprep.subr.bf16.mxu0 0
      %1613 = vmatpush1.bf16.msra.mxu0 0
      %1614 = vmatprep.subr.bf16.mxu0 0
      %1615 = vmatpush1.bf16.msra.mxu0 0
      %1616 = vmatprep.subr.bf16.mxu0 0
      %1617 = vmatpush1.bf16.msra.mxu0 0
      %1618 = vmatprep.subr.bf16.mxu0 0
      %1619 = vmatpush1.bf16.msra.mxu0 0
      %1620 = vmatprep.subr.bf16.mxu0 0
      %1621 = vmatpush1.bf16.msra.mxu0 0
      %1622 = vmatprep.subr.bf16.mxu0 0
      %1623 = vmatpush1.bf16.msra.mxu0 0
      %1624 = vmatprep.mubr.bf16.mxu0 0
      %1625 = vmatmul.mubr.bf16.gmra.mrb[0].mxu0 %v1035
      %v1626 = vpop.f32.mrb[0].mxu0
      %v1627 = vadd.f32 0.0, %v1626
      %v1628 = vpop.f32.mrb[0].mxu0
      %v1629 = vpop.f32.mrb[0].mxu0
      %v1630 = vpop.f32.mrb[0].mxu0
      %1631 = vdwg.mxu0
      %1632 = vmatprep.subr.bf16.mxu0 0
      %1633 = vmatpush1.bf16.msra.mxu0 %v762
      %1634 = vmatprep.subr.bf16.mxu0 0
      %1635 = vmatpush1.bf16.msra.mxu0 %v763
      %1636 = vmatprep.subr.bf16.mxu0 0
      %1637 = vmatpush1.bf16.msra.mxu0 %v764
      %1638 = vmatprep.subr.bf16.mxu0 0
      %1639 = vmatpush1.bf16.msra.mxu0 %v765
      %1640 = vmatprep.subr.bf16.mxu0 0
      %1641 = vmatpush1.bf16.msra.mxu0 %v766
      %1642 = vmatprep.subr.bf16.mxu0 0
      %1643 = vmatpush1.bf16.msra.mxu0 %v767
      %1644 = vmatprep.subr.bf16.mxu0 0
      %1645 = vmatpush1.bf16.msra.mxu0 %v768
      %1646 = vmatprep.subr.bf16.mxu0 0
      %1647 = vmatpush1.bf16.msra.mxu0 %v769
      %1648 = vmatprep.subr.bf16.mxu0 0
      %1649 = vmatpush1.bf16.msra.mxu0 0
      %1650 = vmatprep.subr.bf16.mxu0 0
      %1651 = vmatpush1.bf16.msra.mxu0 0
      %1652 = vmatprep.subr.bf16.mxu0 0
      %1653 = vmatpush1.bf16.msra.mxu0 0
      %1654 = vmatprep.subr.bf16.mxu0 0
      %1655 = vmatpush1.bf16.msra.mxu0 0
      %1656 = vmatprep.subr.bf16.mxu0 0
      %1657 = vmatpush1.bf16.msra.mxu0 0
      %1658 = vmatprep.subr.bf16.mxu0 0
      %1659 = vmatpush1.bf16.msra.mxu0 0
      %1660 = vmatprep.subr.bf16.mxu0 0
      %1661 = vmatpush1.bf16.msra.mxu0 0
      %1662 = vmatprep.subr.bf16.mxu0 0
      %1663 = vmatpush1.bf16.msra.mxu0 0
      %1664 = vmatprep.mubr.bf16.mxu0 0
      %1665 = vmatmul.mubr.bf16.gmra.mrb[0].mxu0 %v927
      %v1666 = vpop.f32.mrb[0].mxu0
      %v1667 = vadd.f32 %v1627, %v1666
      %v1668 = vpop.f32.mrb[0].mxu0
      %v1669 = vpop.f32.mrb[0].mxu0
      %v1670 = vpop.f32.mrb[0].mxu0
      %1671 = vdwg.mxu0
      %1672 = vmatprep.subr.bf16.mxu0 0
      %1673 = vmatpush1.bf16.msra.mxu0 %v869
      %1674 = vmatprep.subr.bf16.mxu0 0
      %1675 = vmatpush1.bf16.msra.mxu0 %v870
      %1676 = vmatprep.subr.bf16.mxu0 0
      %1677 = vmatpush1.bf16.msra.mxu0 %v871
      %1678 = vmatprep.subr.bf16.mxu0 0
      %1679 = vmatpush1.bf16.msra.mxu0 %v872
      %1680 = vmatprep.subr.bf16.mxu0 0
      %1681 = vmatpush1.bf16.msra.mxu0 %v873
      %1682 = vmatprep.subr.bf16.mxu0 0
      %1683 = vmatpush1.bf16.msra.mxu0 %v874
      %1684 = vmatprep.subr.bf16.mxu0 0
      %1685 = vmatpush1.bf16.msra.mxu0 %v875
      %1686 = vmatprep.subr.bf16.mxu0 0
      %1687 = vmatpush1.bf16.msra.mxu0 %v876
      %1688 = vmatprep.subr.bf16.mxu0 0
      %1689 = vmatpush1.bf16.msra.mxu0 0
      %1690 = vmatprep.subr.bf16.mxu0 0
      %1691 = vmatpush1.bf16.msra.mxu0 0
      %1692 = vmatprep.subr.bf16.mxu0 0
      %1693 = vmatpush1.bf16.msra.mxu0 0
      %1694 = vmatprep.subr.bf16.mxu0 0
      %1695 = vmatpush1.bf16.msra.mxu0 0
      %1696 = vmatprep.subr.bf16.mxu0 0
      %1697 = vmatpush1.bf16.msra.mxu0 0
      %1698 = vmatprep.subr.bf16.mxu0 0
      %1699 = vmatpush1.bf16.msra.mxu0 0
      %1700 = vmatprep.subr.bf16.mxu0 0
      %1701 = vmatpush1.bf16.msra.mxu0 0
      %1702 = vmatprep.subr.bf16.mxu0 0
      %1703 = vmatpush1.bf16.msra.mxu0 0
      %1704 = vmatprep.mubr.bf16.mxu0 0
      %1705 = vmatmul.mubr.bf16.gmra.mrb[0].mxu0 %v1143
      %v1706 = vpop.f32.mrb[0].mxu0
      %v1707 = vadd.f32 0.0, %v1706
      %v1708 = vpop.f32.mrb[0].mxu0
      %v1709 = vpop.f32.mrb[0].mxu0
      %v1710 = vpop.f32.mrb[0].mxu0
      %1711 = vdwg.mxu0
      %v1712 = vadd.f32 %v1667, %v1707
      %1713 = vmatprep.subr.bf16.mxu0 0
      %1714 = vmatpush1.bf16.msra.mxu0 %v977
      %1715 = vmatprep.subr.bf16.mxu0 0
      %1716 = vmatpush1.bf16.msra.mxu0 %v978
      %1717 = vmatprep.subr.bf16.mxu0 0
      %1718 = vmatpush1.bf16.msra.mxu0 %v979
      %1719 = vmatprep.subr.bf16.mxu0 0
      %1720 = vmatpush1.bf16.msra.mxu0 %v980
      %1721 = vmatprep.subr.bf16.mxu0 0
      %1722 = vmatpush1.bf16.msra.mxu0 %v981
      %1723 = vmatprep.subr.bf16.mxu0 0
      %1724 = vmatpush1.bf16.msra.mxu0 %v982
      %1725 = vmatprep.subr.bf16.mxu0 0
      %1726 = vmatpush1.bf16.msra.mxu0 %v983
      %1727 = vmatprep.subr.bf16.mxu0 0
      %1728 = vmatpush1.bf16.msra.mxu0 %v984
      %1729 = vmatprep.subr.bf16.mxu0 0
      %1730 = vmatpush1.bf16.msra.mxu0 0
      %1731 = vmatprep.subr.bf16.mxu0 0
      %1732 = vmatpush1.bf16.msra.mxu0 0
      %1733 = vmatprep.subr.bf16.mxu0 0
      %1734 = vmatpush1.bf16.msra.mxu0 0
      %1735 = vmatprep.subr.bf16.mxu0 0
      %1736 = vmatpush1.bf16.msra.mxu0 0
      %1737 = vmatprep.subr.bf16.mxu0 0
      %1738 = vmatpush1.bf16.msra.mxu0 0
      %1739 = vmatprep.subr.bf16.mxu0 0
      %1740 = vmatpush1.bf16.msra.mxu0 0
      %1741 = vmatprep.subr.bf16.mxu0 0
      %1742 = vmatpush1.bf16.msra.mxu0 0
      %1743 = vmatprep.subr.bf16.mxu0 0
      %1744 = vmatpush1.bf16.msra.mxu0 0
      %1745 = vmatprep.mubr.bf16.mxu0 0
      %1746 = vmatmul.mubr.bf16.gmra.mrb[0].mxu0 %v1251
      %v1747 = vpop.f32.mrb[0].mxu0
      %v1748 = vadd.f32 0.0, %v1747
      %v1749 = vpop.f32.mrb[0].mxu0
      %v1750 = vpop.f32.mrb[0].mxu0
      %v1751 = vpop.f32.mrb[0].mxu0
      %1752 = vdwg.mxu0
      %v1753 = vadd.f32 %v1712, %v1748
      %1754 = vmatprep.subr.bf16.mxu0 0
      %1755 = vmatpush1.bf16.msra.mxu0 %v1085
      %1756 = vmatprep.subr.bf16.mxu0 0
      %1757 = vmatpush1.bf16.msra.mxu0 %v1086
      %1758 = vmatprep.subr.bf16.mxu0 0
      %1759 = vmatpush1.bf16.msra.mxu0 %v1087
      %1760 = vmatprep.subr.bf16.mxu0 0
      %1761 = vmatpush1.bf16.msra.mxu0 %v1088
      %1762 = vmatprep.subr.bf16.mxu0 0
      %1763 = vmatpush1.bf16.msra.mxu0 %v1089
      %1764 = vmatprep.subr.bf16.mxu0 0
      %1765 = vmatpush1.bf16.msra.mxu0 %v1090
      %1766 = vmatprep.subr.bf16.mxu0 0
      %1767 = vmatpush1.bf16.msra.mxu0 %v1091
      %1768 = vmatprep.subr.bf16.mxu0 0
      %1769 = vmatpush1.bf16.msra.mxu0 %v1092
      %1770 = vmatprep.subr.bf16.mxu0 0
      %1771 = vmatpush1.bf16.msra.mxu0 0
      %1772 = vmatprep.subr.bf16.mxu0 0
      %1773 = vmatpush1.bf16.msra.mxu0 0
      %1774 = vmatprep.subr.bf16.mxu0 0
      %1775 = vmatpush1.bf16.msra.mxu0 0
      %1776 = vmatprep.subr.bf16.mxu0 0
      %1777 = vmatpush1.bf16.msra.mxu0 0
      %1778 = vmatprep.subr.bf16.mxu0 0
      %1779 = vmatpush1.bf16.msra.mxu0 0
      %1780 = vmatprep.subr.bf16.mxu0 0
      %1781 = vmatpush1.bf16.msra.mxu0 0
      %1782 = vmatprep.subr.bf16.mxu0 0
      %1783 = vmatpush1.bf16.msra.mxu0 0
      %1784 = vmatprep.subr.bf16.mxu0 0
      %1785 = vmatpush1.bf16.msra.mxu0 0
      %1786 = vmatprep.mubr.bf16.mxu0 0
      %1787 = vmatmul.mubr.bf16.gmra.mrb[0].mxu0 %v1359
      %v1788 = vpop.f32.mrb[0].mxu0
      %v1789 = vadd.f32 0.0, %v1788
      %v1790 = vpop.f32.mrb[0].mxu0
      %v1791 = vpop.f32.mrb[0].mxu0
      %v1792 = vpop.f32.mrb[0].mxu0
      %1793 = vdwg.mxu0
      %v1794 = vadd.f32 %v1753, %v1789
      %1795 = vmatprep.subr.bf16.mxu0 0
      %1796 = vmatpush1.bf16.msra.mxu0 %v1193
      %1797 = vmatprep.subr.bf16.mxu0 0
      %1798 = vmatpush1.bf16.msra.mxu0 %v1194
      %1799 = vmatprep.subr.bf16.mxu0 0
      %1800 = vmatpush1.bf16.msra.mxu0 %v1195
      %1801 = vmatprep.subr.bf16.mxu0 0
      %1802 = vmatpush1.bf16.msra.mxu0 %v1196
      %1803 = vmatprep.subr.bf16.mxu0 0
      %1804 = vmatpush1.bf16.msra.mxu0 %v1197
      %1805 = vmatprep.subr.bf16.mxu0 0
      %1806 = vmatpush1.bf16.msra.mxu0 %v1198
      %1807 = vmatprep.subr.bf16.mxu0 0
      %1808 = vmatpush1.bf16.msra.mxu0 %v1199
      %1809 = vmatprep.subr.bf16.mxu0 0
      %1810 = vmatpush1.bf16.msra.mxu0 %v1200
      %1811 = vmatprep.subr.bf16.mxu0 0
      %1812 = vmatpush1.bf16.msra.mxu0 0
      %1813 = vmatprep.subr.bf16.mxu0 0
      %1814 = vmatpush1.bf16.msra.mxu0 0
      %1815 = vmatprep.subr.bf16.mxu0 0
      %1816 = vmatpush1.bf16.msra.mxu0 0
      %1817 = vmatprep.subr.bf16.mxu0 0
      %1818 = vmatpush1.bf16.msra.mxu0 0
      %1819 = vmatprep.subr.bf16.mxu0 0
      %1820 = vmatpush1.bf16.msra.mxu0 0
      %1821 = vmatprep.subr.bf16.mxu0 0
      %1822 = vmatpush1.bf16.msra.mxu0 0
      %1823 = vmatprep.subr.bf16.mxu0 0
      %1824 = vmatpush1.bf16.msra.mxu0 0
      %1825 = vmatprep.subr.bf16.mxu0 0
      %1826 = vmatpush1.bf16.msra.mxu0 0
      %1827 = vmatprep.mubr.bf16.mxu0 0
      %1828 = vmatmul.mubr.bf16.gmra.mrb[0].mxu0 %v1467
      %v1829 = vpop.f32.mrb[0].mxu0
      %v1830 = vadd.f32 0.0, %v1829
      %v1831 = vpop.f32.mrb[0].mxu0
      %v1832 = vpop.f32.mrb[0].mxu0
      %v1833 = vpop.f32.mrb[0].mxu0
      %1834 = vdwg.mxu0
      %v1835 = vadd.f32 %v1794, %v1830
      %v1836 = vld [vmem:[%s521] sm:$0xf]
      %v1837 = vpack.c.bf16 %v1836, %v1836
      %1838 = vmatprep.subr.bf16.mxu0 0
      %1839 = vmatpush1.bf16.msra.mxu0 %v1301
      %1840 = vmatprep.subr.bf16.mxu0 0
      %1841 = vmatpush1.bf16.msra.mxu0 %v1302
      %1842 = vmatprep.subr.bf16.mxu0 0
      %1843 = vmatpush1.bf16.msra.mxu0 %v1303
      %1844 = vmatprep.subr.bf16.mxu0 0
      %1845 = vmatpush1.bf16.msra.mxu0 %v1304
      %1846 = vmatprep.subr.bf16.mxu0 0
      %1847 = vmatpush1.bf16.msra.mxu0 %v1305
      %1848 = vmatprep.subr.bf16.mxu0 0
      %1849 = vmatpush1.bf16.msra.mxu0 %v1306
      %1850 = vmatprep.subr.bf16.mxu0 0
      %1851 = vmatpush1.bf16.msra.mxu0 %v1307
      %1852 = vmatprep.subr.bf16.mxu0 0
      %1853 = vmatpush1.bf16.msra.mxu0 %v1308
      %1854 = vmatprep.subr.bf16.mxu0 0
      %1855 = vmatpush1.bf16.msra.mxu0 0
      %1856 = vmatprep.subr.bf16.mxu0 0
      %1857 = vmatpush1.bf16.msra.mxu0 0
      %1858 = vmatprep.subr.bf16.mxu0 0
      %1859 = vmatpush1.bf16.msra.mxu0 0
      %1860 = vmatprep.subr.bf16.mxu0 0
      %1861 = vmatpush1.bf16.msra.mxu0 0
      %1862 = vmatprep.subr.bf16.mxu0 0
      %1863 = vmatpush1.bf16.msra.mxu0 0
      %1864 = vmatprep.subr.bf16.mxu0 0
      %1865 = vmatpush1.bf16.msra.mxu0 0
      %1866 = vmatprep.subr.bf16.mxu0 0
      %1867 = vmatpush1.bf16.msra.mxu0 0
      %1868 = vmatprep.subr.bf16.mxu0 0
      %1869 = vmatpush1.bf16.msra.mxu0 0
      %1870 = vmatprep.mubr.bf16.mxu0 0
      %1871 = vmatmul.mubr.bf16.gmra.mrb[0].mxu0 %v1837
      %v1872 = vpop.f32.mrb[0].mxu0
      %v1873 = vadd.f32 0.0, %v1872
      %v1874 = vpop.f32.mrb[0].mxu0
      %v1875 = vpop.f32.mrb[0].mxu0
      %v1876 = vpop.f32.mrb[0].mxu0
      %1877 = vdwg.mxu0
      %v1878 = vadd.f32 %v1835, %v1873
      %v1879 = vld [vmem:[%s521 + $0x1] sm:$0xf]
      %v1880 = vpack.c.bf16 %v1879, %v1879
      %1881 = vmatprep.subr.bf16.mxu0 0
      %1882 = vmatpush1.bf16.msra.mxu0 %v1409
      %1883 = vmatprep.subr.bf16.mxu0 0
      %1884 = vmatpush1.bf16.msra.mxu0 %v1410
      %1885 = vmatprep.subr.bf16.mxu0 0
      %1886 = vmatpush1.bf16.msra.mxu0 %v1411
      %1887 = vmatprep.subr.bf16.mxu0 0
      %1888 = vmatpush1.bf16.msra.mxu0 %v1412
      %1889 = vmatprep.subr.bf16.mxu0 0
      %1890 = vmatpush1.bf16.msra.mxu0 %v1413
      %1891 = vmatprep.subr.bf16.mxu0 0
      %1892 = vmatpush1.bf16.msra.mxu0 %v1414
      %1893 = vmatprep.subr.bf16.mxu0 0
      %1894 = vmatpush1.bf16.msra.mxu0 %v1415
      %1895 = vmatprep.subr.bf16.mxu0 0
      %1896 = vmatpush1.bf16.msra.mxu0 %v1416
      %1897 = vmatprep.subr.bf16.mxu0 0
      %1898 = vmatpush1.bf16.msra.mxu0 0
      %1899 = vmatprep.subr.bf16.mxu0 0
      %1900 = vmatpush1.bf16.msra.mxu0 0
      %1901 = vmatprep.subr.bf16.mxu0 0
      %1902 = vmatpush1.bf16.msra.mxu0 0
      %1903 = vmatprep.subr.bf16.mxu0 0
      %1904 = vmatpush1.bf16.msra.mxu0 0
      %1905 = vmatprep.subr.bf16.mxu0 0
      %1906 = vmatpush1.bf16.msra.mxu0 0
      %1907 = vmatprep.subr.bf16.mxu0 0
      %1908 = vmatpush1.bf16.msra.mxu0 0
      %1909 = vmatprep.subr.bf16.mxu0 0
      %1910 = vmatpush1.bf16.msra.mxu0 0
      %1911 = vmatprep.subr.bf16.mxu0 0
      %1912 = vmatpush1.bf16.msra.mxu0 0
      %1913 = vmatprep.mubr.bf16.mxu0 0
      %1914 = vmatmul.mubr.bf16.gmra.mrb[0].mxu0 %v1880
      %v1915 = vpop.f32.mrb[0].mxu0
      %v1916 = vadd.f32 0.0, %v1915
      %v1917 = vpop.f32.mrb[0].mxu0
      %v1918 = vpop.f32.mrb[0].mxu0
      %v1919 = vpop.f32.mrb[0].mxu0
      %1920 = vdwg.mxu0
      %v1921 = vadd.f32 %v1878, %v1916
      %v1922 = vld [vmem:[%s521 + $0x2] sm:$0xf]
      %v1923 = vpack.c.bf16 %v1922, %v1922
      %1924 = vmatprep.subr.bf16.mxu0 0
      %1925 = vmatpush1.bf16.msra.mxu0 %v1517
      %1926 = vmatprep.subr.bf16.mxu0 0
      %1927 = vmatpush1.bf16.msra.mxu0 %v1518
      %1928 = vmatprep.subr.bf16.mxu0 0
      %1929 = vmatpush1.bf16.msra.mxu0 %v1519
      %1930 = vmatprep.subr.bf16.mxu0 0
      %1931 = vmatpush1.bf16.msra.mxu0 %v1520
      %1932 = vmatprep.subr.bf16.mxu0 0
      %1933 = vmatpush1.bf16.msra.mxu0 %v1521
      %1934 = vmatprep.subr.bf16.mxu0 0
      %1935 = vmatpush1.bf16.msra.mxu0 %v1522
      %1936 = vmatprep.subr.bf16.mxu0 0
      %1937 = vmatpush1.bf16.msra.mxu0 %v1523
      %1938 = vmatprep.subr.bf16.mxu0 0
      %1939 = vmatpush1.bf16.msra.mxu0 %v1524
      %1940 = vmatprep.subr.bf16.mxu0 0
      %1941 = vmatpush1.bf16.msra.mxu0 0
      %1942 = vmatprep.subr.bf16.mxu0 0
      %1943 = vmatpush1.bf16.msra.mxu0 0
      %1944 = vmatprep.subr.bf16.mxu0 0
      %1945 = vmatpush1.bf16.msra.mxu0 0
      %1946 = vmatprep.subr.bf16.mxu0 0
      %1947 = vmatpush1.bf16.msra.mxu0 0
      %1948 = vmatprep.subr.bf16.mxu0 0
      %1949 = vmatpush1.bf16.msra.mxu0 0
      %1950 = vmatprep.subr.bf16.mxu0 0
      %1951 = vmatpush1.bf16.msra.mxu0 0
      %1952 = vmatprep.subr.bf16.mxu0 0
      %1953 = vmatpush1.bf16.msra.mxu0 0
      %1954 = vmatprep.subr.bf16.mxu0 0
      %1955 = vmatpush1.bf16.msra.mxu0 0
      %1956 = vmatprep.mubr.bf16.mxu0 0
      %1957 = vmatmul.mubr.bf16.gmra.mrb[0].mxu0 %v1923
      %v1958 = vpop.f32.mrb[0].mxu0
      %v1959 = vadd.f32 0.0, %v1958
      %v1960 = vpop.f32.mrb[0].mxu0
      %v1961 = vpop.f32.mrb[0].mxu0
      %v1962 = vpop.f32.mrb[0].mxu0
      %1963 = vdwg.mxu0
      %v1964 = vadd.f32 %v1921, %v1959
      %v1965 = vadd.f32 %v1964, %v1579
      %v1966 = vmax.f32 %v1965, 0.0
      %v1967 = vsel %vm1583, %v1966, 0.0
      %v1968 = vrot.slane %v1967, 4
      %v1969 = vadd.f32 %v1967, %v1968
      %v1970 = vrot.slane %v1969, 2
      %v1971 = vadd.f32 %v1969, %v1970
      %v1972 = vrot.slane %v1971, 1
      %v1973 = vadd.f32 %v1971, %v1972
      %v1974 = vadd.f32 %v1591, %v1973
      %1975 = vmatprep.subr.bf16.mxu0 0
      %1976 = vmatpush1.bf16.msra.mxu0 %v674
      %1977 = vmatprep.subr.bf16.mxu0 0
      %1978 = vmatpush1.bf16.msra.mxu0 %v675
      %1979 = vmatprep.subr.bf16.mxu0 0
      %1980 = vmatpush1.bf16.msra.mxu0 %v676
      %1981 = vmatprep.subr.bf16.mxu0 0
      %1982 = vmatpush1.bf16.msra.mxu0 %v677
      %1983 = vmatprep.subr.bf16.mxu0 0
      %1984 = vmatpush1.bf16.msra.mxu0 %v678
      %1985 = vmatprep.subr.bf16.mxu0 0
      %1986 = vmatpush1.bf16.msra.mxu0 %v679
      %1987 = vmatprep.subr.bf16.mxu0 0
      %1988 = vmatpush1.bf16.msra.mxu0 %v680
      %1989 = vmatprep.subr.bf16.mxu0 0
      %1990 = vmatpush1.bf16.msra.mxu0 %v681
      %1991 = vmatprep.subr.bf16.mxu0 0
      %1992 = vmatpush1.bf16.msra.mxu0 0
      %1993 = vmatprep.subr.bf16.mxu0 0
      %1994 = vmatpush1.bf16.msra.mxu0 0
      %1995 = vmatprep.subr.bf16.mxu0 0
      %1996 = vmatpush1.bf16.msra.mxu0 0
      %1997 = vmatprep.subr.bf16.mxu0 0
      %1998 = vmatpush1.bf16.msra.mxu0 0
      %1999 = vmatprep.subr.bf16.mxu0 0
      %2000 = vmatpush1.bf16.msra.mxu0 0
      %2001 = vmatprep.subr.bf16.mxu0 0
      %2002 = vmatpush1.bf16.msra.mxu0 0
      %2003 = vmatprep.subr.bf16.mxu0 0
      %2004 = vmatpush1.bf16.msra.mxu0 0
      %2005 = vmatprep.subr.bf16.mxu0 0
      %2006 = vmatpush1.bf16.msra.mxu0 0
      %2007 = vmatprep.mubr.bf16.mxu0 0
      %2008 = vmatmul.mubr.bf16.gmra.mrb[0].mxu0 %v1359
      %v2009 = vpop.f32.mrb[0].mxu0
      %v2010 = vadd.f32 0.0, %v2009
      %v2011 = vpop.f32.mrb[0].mxu0
      %v2012 = vpop.f32.mrb[0].mxu0
      %v2013 = vpop.f32.mrb[0].mxu0
      %2014 = vdwg.mxu0
      %2015 = vmatprep.subr.bf16.mxu0 0
      %2016 = vmatpush1.bf16.msra.mxu0 %v762
      %2017 = vmatprep.subr.bf16.mxu0 0
      %2018 = vmatpush1.bf16.msra.mxu0 %v763
      %2019 = vmatprep.subr.bf16.mxu0 0
      %2020 = vmatpush1.bf16.msra.mxu0 %v764
      %2021 = vmatprep.subr.bf16.mxu0 0
      %2022 = vmatpush1.bf16.msra.mxu0 %v765
      %2023 = vmatprep.subr.bf16.mxu0 0
      %2024 = vmatpush1.bf16.msra.mxu0 %v766
      %2025 = vmatprep.subr.bf16.mxu0 0
      %2026 = vmatpush1.bf16.msra.mxu0 %v767
      %2027 = vmatprep.subr.bf16.mxu0 0
      %2028 = vmatpush1.bf16.msra.mxu0 %v768
      %2029 = vmatprep.subr.bf16.mxu0 0
      %2030 = vmatpush1.bf16.msra.mxu0 %v769
      %2031 = vmatprep.subr.bf16.mxu0 0
      %2032 = vmatpush1.bf16.msra.mxu0 0
      %2033 = vmatprep.subr.bf16.mxu0 0
      %2034 = vmatpush1.bf16.msra.mxu0 0
      %2035 = vmatprep.subr.bf16.mxu0 0
      %2036 = vmatpush1.bf16.msra.mxu0 0
      %2037 = vmatprep.subr.bf16.mxu0 0
      %2038 = vmatpush1.bf16.msra.mxu0 0
      %2039 = vmatprep.subr.bf16.mxu0 0
      %2040 = vmatpush1.bf16.msra.mxu0 0
      %2041 = vmatprep.subr.bf16.mxu0 0
      %2042 = vmatpush1.bf16.msra.mxu0 0
      %2043 = vmatprep.subr.bf16.mxu0 0
      %2044 = vmatpush1.bf16.msra.mxu0 0
      %2045 = vmatprep.subr.bf16.mxu0 0
      %2046 = vmatpush1.bf16.msra.mxu0 0
      %2047 = vmatprep.mubr.bf16.mxu0 0
      %2048 = vmatmul.mubr.bf16.gmra.mrb[0].mxu0 %v1251
      %v2049 = vpop.f32.mrb[0].mxu0
      %v2050 = vadd.f32 %v2010, %v2049
      %v2051 = vpop.f32.mrb[0].mxu0
      %v2052 = vpop.f32.mrb[0].mxu0
      %v2053 = vpop.f32.mrb[0].mxu0
      %2054 = vdwg.mxu0
      %2055 = vmatprep.subr.bf16.mxu0 0
      %2056 = vmatpush1.bf16.msra.mxu0 %v869
      %2057 = vmatprep.subr.bf16.mxu0 0
      %2058 = vmatpush1.bf16.msra.mxu0 %v870
      %2059 = vmatprep.subr.bf16.mxu0 0
      %2060 = vmatpush1.bf16.msra.mxu0 %v871
      %2061 = vmatprep.subr.bf16.mxu0 0
      %2062 = vmatpush1.bf16.msra.mxu0 %v872
      %2063 = vmatprep.subr.bf16.mxu0 0
      %2064 = vmatpush1.bf16.msra.mxu0 %v873
      %2065 = vmatprep.subr.bf16.mxu0 0
      %2066 = vmatpush1.bf16.msra.mxu0 %v874
      %2067 = vmatprep.subr.bf16.mxu0 0
      %2068 = vmatpush1.bf16.msra.mxu0 %v875
      %2069 = vmatprep.subr.bf16.mxu0 0
      %2070 = vmatpush1.bf16.msra.mxu0 %v876
      %2071 = vmatprep.subr.bf16.mxu0 0
      %2072 = vmatpush1.bf16.msra.mxu0 0
      %2073 = vmatprep.subr.bf16.mxu0 0
      %2074 = vmatpush1.bf16.msra.mxu0 0
      %2075 = vmatprep.subr.bf16.mxu0 0
      %2076 = vmatpush1.bf16.msra.mxu0 0
      %2077 = vmatprep.subr.bf16.mxu0 0
      %2078 = vmatpush1.bf16.msra.mxu0 0
      %2079 = vmatprep.subr.bf16.mxu0 0
      %2080 = vmatpush1.bf16.msra.mxu0 0
      %2081 = vmatprep.subr.bf16.mxu0 0
      %2082 = vmatpush1.bf16.msra.mxu0 0
      %2083 = vmatprep.subr.bf16.mxu0 0
      %2084 = vmatpush1.bf16.msra.mxu0 0
      %2085 = vmatprep.subr.bf16.mxu0 0
      %2086 = vmatpush1.bf16.msra.mxu0 0
      %2087 = vmatprep.mubr.bf16.mxu0 0
      %2088 = vmatmul.mubr.bf16.gmra.mrb[0].mxu0 %v1467
      %v2089 = vpop.f32.mrb[0].mxu0
      %v2090 = vadd.f32 0.0, %v2089
      %v2091 = vpop.f32.mrb[0].mxu0
      %v2092 = vpop.f32.mrb[0].mxu0
      %v2093 = vpop.f32.mrb[0].mxu0
      %2094 = vdwg.mxu0
      %v2095 = vadd.f32 %v2050, %v2090
      %2096 = vmatprep.subr.bf16.mxu0 0
      %2097 = vmatpush1.bf16.msra.mxu0 %v977
      %2098 = vmatprep.subr.bf16.mxu0 0
      %2099 = vmatpush1.bf16.msra.mxu0 %v978
      %2100 = vmatprep.subr.bf16.mxu0 0
      %2101 = vmatpush1.bf16.msra.mxu0 %v979
      %2102 = vmatprep.subr.bf16.mxu0 0
      %2103 = vmatpush1.bf16.msra.mxu0 %v980
      %2104 = vmatprep.subr.bf16.mxu0 0
      %2105 = vmatpush1.bf16.msra.mxu0 %v981
      %2106 = vmatprep.subr.bf16.mxu0 0
      %2107 = vmatpush1.bf16.msra.mxu0 %v982
      %2108 = vmatprep.subr.bf16.mxu0 0
      %2109 = vmatpush1.bf16.msra.mxu0 %v983
      %2110 = vmatprep.subr.bf16.mxu0 0
      %2111 = vmatpush1.bf16.msra.mxu0 %v984
      %2112 = vmatprep.subr.bf16.mxu0 0
      %2113 = vmatpush1.bf16.msra.mxu0 0
      %2114 = vmatprep.subr.bf16.mxu0 0
      %2115 = vmatpush1.bf16.msra.mxu0 0
      %2116 = vmatprep.subr.bf16.mxu0 0
      %2117 = vmatpush1.bf16.msra.mxu0 0
      %2118 = vmatprep.subr.bf16.mxu0 0
      %2119 = vmatpush1.bf16.msra.mxu0 0
      %2120 = vmatprep.subr.bf16.mxu0 0
      %2121 = vmatpush1.bf16.msra.mxu0 0
      %2122 = vmatprep.subr.bf16.mxu0 0
      %2123 = vmatpush1.bf16.msra.mxu0 0
      %2124 = vmatprep.subr.bf16.mxu0 0
      %2125 = vmatpush1.bf16.msra.mxu0 0
      %2126 = vmatprep.subr.bf16.mxu0 0
      %2127 = vmatpush1.bf16.msra.mxu0 0
      %2128 = vmatprep.mubr.bf16.mxu0 0
      %2129 = vmatmul.mubr.bf16.gmra.mrb[0].mxu0 %v1837
      %v2130 = vpop.f32.mrb[0].mxu0
      %v2131 = vadd.f32 0.0, %v2130
      %v2132 = vpop.f32.mrb[0].mxu0
      %v2133 = vpop.f32.mrb[0].mxu0
      %v2134 = vpop.f32.mrb[0].mxu0
      %2135 = vdwg.mxu0
      %v2136 = vadd.f32 %v2095, %v2131
      %2137 = vmatprep.subr.bf16.mxu0 0
      %2138 = vmatpush1.bf16.msra.mxu0 %v1085
      %2139 = vmatprep.subr.bf16.mxu0 0
      %2140 = vmatpush1.bf16.msra.mxu0 %v1086
      %2141 = vmatprep.subr.bf16.mxu0 0
      %2142 = vmatpush1.bf16.msra.mxu0 %v1087
      %2143 = vmatprep.subr.bf16.mxu0 0
      %2144 = vmatpush1.bf16.msra.mxu0 %v1088
      %2145 = vmatprep.subr.bf16.mxu0 0
      %2146 = vmatpush1.bf16.msra.mxu0 %v1089
      %2147 = vmatprep.subr.bf16.mxu0 0
      %2148 = vmatpush1.bf16.msra.mxu0 %v1090
      %2149 = vmatprep.subr.bf16.mxu0 0
      %2150 = vmatpush1.bf16.msra.mxu0 %v1091
      %2151 = vmatprep.subr.bf16.mxu0 0
      %2152 = vmatpush1.bf16.msra.mxu0 %v1092
      %2153 = vmatprep.subr.bf16.mxu0 0
      %2154 = vmatpush1.bf16.msra.mxu0 0
      %2155 = vmatprep.subr.bf16.mxu0 0
      %2156 = vmatpush1.bf16.msra.mxu0 0
      %2157 = vmatprep.subr.bf16.mxu0 0
      %2158 = vmatpush1.bf16.msra.mxu0 0
      %2159 = vmatprep.subr.bf16.mxu0 0
      %2160 = vmatpush1.bf16.msra.mxu0 0
      %2161 = vmatprep.subr.bf16.mxu0 0
      %2162 = vmatpush1.bf16.msra.mxu0 0
      %2163 = vmatprep.subr.bf16.mxu0 0
      %2164 = vmatpush1.bf16.msra.mxu0 0
      %2165 = vmatprep.subr.bf16.mxu0 0
      %2166 = vmatpush1.bf16.msra.mxu0 0
      %2167 = vmatprep.subr.bf16.mxu0 0
      %2168 = vmatpush1.bf16.msra.mxu0 0
      %2169 = vmatprep.mubr.bf16.mxu0 0
      %2170 = vmatmul.mubr.bf16.gmra.mrb[0].mxu0 %v1880
      %v2171 = vpop.f32.mrb[0].mxu0
      %v2172 = vadd.f32 0.0, %v2171
      %v2173 = vpop.f32.mrb[0].mxu0
      %v2174 = vpop.f32.mrb[0].mxu0
      %v2175 = vpop.f32.mrb[0].mxu0
      %2176 = vdwg.mxu0
      %v2177 = vadd.f32 %v2136, %v2172
      %2178 = vmatprep.subr.bf16.mxu0 0
      %2179 = vmatpush1.bf16.msra.mxu0 %v1193
      %2180 = vmatprep.subr.bf16.mxu0 0
      %2181 = vmatpush1.bf16.msra.mxu0 %v1194
      %2182 = vmatprep.subr.bf16.mxu0 0
      %2183 = vmatpush1.bf16.msra.mxu0 %v1195
      %2184 = vmatprep.subr.bf16.mxu0 0
      %2185 = vmatpush1.bf16.msra.mxu0 %v1196
      %2186 = vmatprep.subr.bf16.mxu0 0
      %2187 = vmatpush1.bf16.msra.mxu0 %v1197
      %2188 = vmatprep.subr.bf16.mxu0 0
      %2189 = vmatpush1.bf16.msra.mxu0 %v1198
      %2190 = vmatprep.subr.bf16.mxu0 0
      %2191 = vmatpush1.bf16.msra.mxu0 %v1199
      %2192 = vmatprep.subr.bf16.mxu0 0
      %2193 = vmatpush1.bf16.msra.mxu0 %v1200
      %2194 = vmatprep.subr.bf16.mxu0 0
      %2195 = vmatpush1.bf16.msra.mxu0 0
      %2196 = vmatprep.subr.bf16.mxu0 0
      %2197 = vmatpush1.bf16.msra.mxu0 0
      %2198 = vmatprep.subr.bf16.mxu0 0
      %2199 = vmatpush1.bf16.msra.mxu0 0
      %2200 = vmatprep.subr.bf16.mxu0 0
      %2201 = vmatpush1.bf16.msra.mxu0 0
      %2202 = vmatprep.subr.bf16.mxu0 0
      %2203 = vmatpush1.bf16.msra.mxu0 0
      %2204 = vmatprep.subr.bf16.mxu0 0
      %2205 = vmatpush1.bf16.msra.mxu0 0
      %2206 = vmatprep.subr.bf16.mxu0 0
      %2207 = vmatpush1.bf16.msra.mxu0 0
      %2208 = vmatprep.subr.bf16.mxu0 0
      %2209 = vmatpush1.bf16.msra.mxu0 0
      %2210 = vmatprep.mubr.bf16.mxu0 0
      %2211 = vmatmul.mubr.bf16.gmra.mrb[0].mxu0 %v1923
      %v2212 = vpop.f32.mrb[0].mxu0
      %v2213 = vadd.f32 0.0, %v2212
      %v2214 = vpop.f32.mrb[0].mxu0
      %v2215 = vpop.f32.mrb[0].mxu0
      %v2216 = vpop.f32.mrb[0].mxu0
      %2217 = vdwg.mxu0
      %v2218 = vadd.f32 %v2177, %v2213
      %v2219 = vld [vmem:[%s603] sm:$0xf]
      %v2220 = vpack.c.bf16 %v2219, %v2219
      %2221 = vmatprep.subr.bf16.mxu0 0
      %2222 = vmatpush1.bf16.msra.mxu0 %v1301
      %2223 = vmatprep.subr.bf16.mxu0 0
      %2224 = vmatpush1.bf16.msra.mxu0 %v1302
      %2225 = vmatprep.subr.bf16.mxu0 0
      %2226 = vmatpush1.bf16.msra.mxu0 %v1303
      %2227 = vmatprep.subr.bf16.mxu0 0
      %2228 = vmatpush1.bf16.msra.mxu0 %v1304
      %2229 = vmatprep.subr.bf16.mxu0 0
      %2230 = vmatpush1.bf16.msra.mxu0 %v1305
      %2231 = vmatprep.subr.bf16.mxu0 0
      %2232 = vmatpush1.bf16.msra.mxu0 %v1306
      %2233 = vmatprep.subr.bf16.mxu0 0
      %2234 = vmatpush1.bf16.msra.mxu0 %v1307
      %2235 = vmatprep.subr.bf16.mxu0 0
      %2236 = vmatpush1.bf16.msra.mxu0 %v1308
      %2237 = vmatprep.subr.bf16.mxu0 0
      %2238 = vmatpush1.bf16.msra.mxu0 0
      %2239 = vmatprep.subr.bf16.mxu0 0
      %2240 = vmatpush1.bf16.msra.mxu0 0
      %2241 = vmatprep.subr.bf16.mxu0 0
      %2242 = vmatpush1.bf16.msra.mxu0 0
      %2243 = vmatprep.subr.bf16.mxu0 0
      %2244 = vmatpush1.bf16.msra.mxu0 0
      %2245 = vmatprep.subr.bf16.mxu0 0
      %2246 = vmatpush1.bf16.msra.mxu0 0
      %2247 = vmatprep.subr.bf16.mxu0 0
      %2248 = vmatpush1.bf16.msra.mxu0 0
      %2249 = vmatprep.subr.bf16.mxu0 0
      %2250 = vmatpush1.bf16.msra.mxu0 0
      %2251 = vmatprep.subr.bf16.mxu0 0
      %2252 = vmatpush1.bf16.msra.mxu0 0
      %2253 = vmatprep.mubr.bf16.mxu0 0
      %2254 = vmatmul.mubr.bf16.gmra.mrb[0].mxu0 %v2220
      %v2255 = vpop.f32.mrb[0].mxu0
      %v2256 = vadd.f32 0.0, %v2255
      %v2257 = vpop.f32.mrb[0].mxu0
      %v2258 = vpop.f32.mrb[0].mxu0
      %v2259 = vpop.f32.mrb[0].mxu0
      %2260 = vdwg.mxu0
      %v2261 = vadd.f32 %v2218, %v2256
      %v2262 = vld [vmem:[%s603 + $0x1] sm:$0xf]
      %v2263 = vpack.c.bf16 %v2262, %v2262
      %2264 = vmatprep.subr.bf16.mxu0 0
      %2265 = vmatpush1.bf16.msra.mxu0 %v1409
      %2266 = vmatprep.subr.bf16.mxu0 0
      %2267 = vmatpush1.bf16.msra.mxu0 %v1410
      %2268 = vmatprep.subr.bf16.mxu0 0
      %2269 = vmatpush1.bf16.msra.mxu0 %v1411
      %2270 = vmatprep.subr.bf16.mxu0 0
      %2271 = vmatpush1.bf16.msra.mxu0 %v1412
      %2272 = vmatprep.subr.bf16.mxu0 0
      %2273 = vmatpush1.bf16.msra.mxu0 %v1413
      %2274 = vmatprep.subr.bf16.mxu0 0
      %2275 = vmatpush1.bf16.msra.mxu0 %v1414
      %2276 = vmatprep.subr.bf16.mxu0 0
      %2277 = vmatpush1.bf16.msra.mxu0 %v1415
      %2278 = vmatprep.subr.bf16.mxu0 0
      %2279 = vmatpush1.bf16.msra.mxu0 %v1416
      %2280 = vmatprep.subr.bf16.mxu0 0
      %2281 = vmatpush1.bf16.msra.mxu0 0
      %2282 = vmatprep.subr.bf16.mxu0 0
      %2283 = vmatpush1.bf16.msra.mxu0 0
      %2284 = vmatprep.subr.bf16.mxu0 0
      %2285 = vmatpush1.bf16.msra.mxu0 0
      %2286 = vmatprep.subr.bf16.mxu0 0
      %2287 = vmatpush1.bf16.msra.mxu0 0
      %2288 = vmatprep.subr.bf16.mxu0 0
      %2289 = vmatpush1.bf16.msra.mxu0 0
      %2290 = vmatprep.subr.bf16.mxu0 0
      %2291 = vmatpush1.bf16.msra.mxu0 0
      %2292 = vmatprep.subr.bf16.mxu0 0
      %2293 = vmatpush1.bf16.msra.mxu0 0
      %2294 = vmatprep.subr.bf16.mxu0 0
      %2295 = vmatpush1.bf16.msra.mxu0 0
      %2296 = vmatprep.mubr.bf16.mxu0 0
      %2297 = vmatmul.mubr.bf16.gmra.mrb[0].mxu0 %v2263
      %v2298 = vpop.f32.mrb[0].mxu0
      %v2299 = vadd.f32 0.0, %v2298
      %v2300 = vpop.f32.mrb[0].mxu0
      %v2301 = vpop.f32.mrb[0].mxu0
      %v2302 = vpop.f32.mrb[0].mxu0
      %2303 = vdwg.mxu0
      %v2304 = vadd.f32 %v2261, %v2299
      %v2305 = vld [vmem:[%s603 + $0x2] sm:$0xf]
      %v2306 = vpack.c.bf16 %v2305, %v2305
      %2307 = vmatprep.subr.bf16.mxu0 0
      %2308 = vmatpush1.bf16.msra.mxu0 %v1517
      %2309 = vmatprep.subr.bf16.mxu0 0
      %2310 = vmatpush1.bf16.msra.mxu0 %v1518
      %2311 = vmatprep.subr.bf16.mxu0 0
      %2312 = vmatpush1.bf16.msra.mxu0 %v1519
      %2313 = vmatprep.subr.bf16.mxu0 0
      %2314 = vmatpush1.bf16.msra.mxu0 %v1520
      %2315 = vmatprep.subr.bf16.mxu0 0
      %2316 = vmatpush1.bf16.msra.mxu0 %v1521
      %2317 = vmatprep.subr.bf16.mxu0 0
      %2318 = vmatpush1.bf16.msra.mxu0 %v1522
      %2319 = vmatprep.subr.bf16.mxu0 0
      %2320 = vmatpush1.bf16.msra.mxu0 %v1523
      %2321 = vmatprep.subr.bf16.mxu0 0
      %2322 = vmatpush1.bf16.msra.mxu0 %v1524
      %2323 = vmatprep.subr.bf16.mxu0 0
      %2324 = vmatpush1.bf16.msra.mxu0 0
      %2325 = vmatprep.subr.bf16.mxu0 0
      %2326 = vmatpush1.bf16.msra.mxu0 0
      %2327 = vmatprep.subr.bf16.mxu0 0
      %2328 = vmatpush1.bf16.msra.mxu0 0
      %2329 = vmatprep.subr.bf16.mxu0 0
      %2330 = vmatpush1.bf16.msra.mxu0 0
      %2331 = vmatprep.subr.bf16.mxu0 0
      %2332 = vmatpush1.bf16.msra.mxu0 0
      %2333 = vmatprep.subr.bf16.mxu0 0
      %2334 = vmatpush1.bf16.msra.mxu0 0
      %2335 = vmatprep.subr.bf16.mxu0 0
      %2336 = vmatpush1.bf16.msra.mxu0 0
      %2337 = vmatprep.subr.bf16.mxu0 0
      %2338 = vmatpush1.bf16.msra.mxu0 0
      %2339 = vmatprep.mubr.bf16.mxu0 0
      %2340 = vmatmul.mubr.bf16.gmra.mrb[0].mxu0 %v2306
      %v2341 = vpop.f32.mrb[0].mxu0
      %v2342 = vadd.f32 0.0, %v2341
      %v2343 = vpop.f32.mrb[0].mxu0
      %v2344 = vpop.f32.mrb[0].mxu0
      %v2345 = vpop.f32.mrb[0].mxu0
      %2346 = vdwg.mxu0
      %v2347 = vadd.f32 %v2304, %v2342
      %v2348 = vadd.f32 %v2347, %v1579
      %v2349 = vmax.f32 %v2348, 0.0
      %v2350 = vsel %vm1583, %v2349, 0.0
      %v2351 = vrot.slane %v2350, 4
      %v2352 = vadd.f32 %v2350, %v2351
      %v2353 = vrot.slane %v2352, 2
      %v2354 = vadd.f32 %v2352, %v2353
      %v2355 = vrot.slane %v2354, 1
      %v2356 = vadd.f32 %v2354, %v2355
      %v2357 = vadd.f32 %v1974, %v2356
      %2358 = vmatprep.subr.bf16.mxu0 0
      %2359 = vmatpush1.bf16.msra.mxu0 %v674
      %2360 = vmatprep.subr.bf16.mxu0 0
      %2361 = vmatpush1.bf16.msra.mxu0 %v675
      %2362 = vmatprep.subr.bf16.mxu0 0
      %2363 = vmatpush1.bf16.msra.mxu0 %v676
      %2364 = vmatprep.subr.bf16.mxu0 0
      %2365 = vmatpush1.bf16.msra.mxu0 %v677
      %2366 = vmatprep.subr.bf16.mxu0 0
      %2367 = vmatpush1.bf16.msra.mxu0 %v678
      %2368 = vmatprep.subr.bf16.mxu0 0
      %2369 = vmatpush1.bf16.msra.mxu0 %v679
      %2370 = vmatprep.subr.bf16.mxu0 0
      %2371 = vmatpush1.bf16.msra.mxu0 %v680
      %2372 = vmatprep.subr.bf16.mxu0 0
      %2373 = vmatpush1.bf16.msra.mxu0 %v681
      %2374 = vmatprep.subr.bf16.mxu0 0
      %2375 = vmatpush1.bf16.msra.mxu0 0
      %2376 = vmatprep.subr.bf16.mxu0 0
      %2377 = vmatpush1.bf16.msra.mxu0 0
      %2378 = vmatprep.subr.bf16.mxu0 0
      %2379 = vmatpush1.bf16.msra.mxu0 0
      %2380 = vmatprep.subr.bf16.mxu0 0
      %2381 = vmatpush1.bf16.msra.mxu0 0
      %2382 = vmatprep.subr.bf16.mxu0 0
      %2383 = vmatpush1.bf16.msra.mxu0 0
      %2384 = vmatprep.subr.bf16.mxu0 0
      %2385 = vmatpush1.bf16.msra.mxu0 0
      %2386 = vmatprep.subr.bf16.mxu0 0
      %2387 = vmatpush1.bf16.msra.mxu0 0
      %2388 = vmatprep.subr.bf16.mxu0 0
      %2389 = vmatpush1.bf16.msra.mxu0 0
      %2390 = vmatprep.mubr.bf16.mxu0 0
      %2391 = vmatmul.mubr.bf16.gmra.mrb[0].mxu0 %v1880
      %v2392 = vpop.f32.mrb[0].mxu0
      %v2393 = vadd.f32 0.0, %v2392
      %v2394 = vpop.f32.mrb[0].mxu0
      %v2395 = vpop.f32.mrb[0].mxu0
      %v2396 = vpop.f32.mrb[0].mxu0
      %2397 = vdwg.mxu0
      %2398 = vmatprep.subr.bf16.mxu0 0
      %2399 = vmatpush1.bf16.msra.mxu0 %v762
      %2400 = vmatprep.subr.bf16.mxu0 0
      %2401 = vmatpush1.bf16.msra.mxu0 %v763
      %2402 = vmatprep.subr.bf16.mxu0 0
      %2403 = vmatpush1.bf16.msra.mxu0 %v764
      %2404 = vmatprep.subr.bf16.mxu0 0
      %2405 = vmatpush1.bf16.msra.mxu0 %v765
      %2406 = vmatprep.subr.bf16.mxu0 0
      %2407 = vmatpush1.bf16.msra.mxu0 %v766
      %2408 = vmatprep.subr.bf16.mxu0 0
      %2409 = vmatpush1.bf16.msra.mxu0 %v767
      %2410 = vmatprep.subr.bf16.mxu0 0
      %2411 = vmatpush1.bf16.msra.mxu0 %v768
      %2412 = vmatprep.subr.bf16.mxu0 0
      %2413 = vmatpush1.bf16.msra.mxu0 %v769
      %2414 = vmatprep.subr.bf16.mxu0 0
      %2415 = vmatpush1.bf16.msra.mxu0 0
      %2416 = vmatprep.subr.bf16.mxu0 0
      %2417 = vmatpush1.bf16.msra.mxu0 0
      %2418 = vmatprep.subr.bf16.mxu0 0
      %2419 = vmatpush1.bf16.msra.mxu0 0
      %2420 = vmatprep.subr.bf16.mxu0 0
      %2421 = vmatpush1.bf16.msra.mxu0 0
      %2422 = vmatprep.subr.bf16.mxu0 0
      %2423 = vmatpush1.bf16.msra.mxu0 0
      %2424 = vmatprep.subr.bf16.mxu0 0
      %2425 = vmatpush1.bf16.msra.mxu0 0
      %2426 = vmatprep.subr.bf16.mxu0 0
      %2427 = vmatpush1.bf16.msra.mxu0 0
      %2428 = vmatprep.subr.bf16.mxu0 0
      %2429 = vmatpush1.bf16.msra.mxu0 0
      %2430 = vmatprep.mubr.bf16.mxu0 0
      %2431 = vmatmul.mubr.bf16.gmra.mrb[0].mxu0 %v1837
      %v2432 = vpop.f32.mrb[0].mxu0
      %v2433 = vadd.f32 %v2393, %v2432
      %v2434 = vpop.f32.mrb[0].mxu0
      %v2435 = vpop.f32.mrb[0].mxu0
      %v2436 = vpop.f32.mrb[0].mxu0
      %2437 = vdwg.mxu0
      %2438 = vmatprep.subr.bf16.mxu0 0
      %2439 = vmatpush1.bf16.msra.mxu0 %v869
      %2440 = vmatprep.subr.bf16.mxu0 0
      %2441 = vmatpush1.bf16.msra.mxu0 %v870
      %2442 = vmatprep.subr.bf16.mxu0 0
      %2443 = vmatpush1.bf16.msra.mxu0 %v871
      %2444 = vmatprep.subr.bf16.mxu0 0
      %2445 = vmatpush1.bf16.msra.mxu0 %v872
      %2446 = vmatprep.subr.bf16.mxu0 0
      %2447 = vmatpush1.bf16.msra.mxu0 %v873
      %2448 = vmatprep.subr.bf16.mxu0 0
      %2449 = vmatpush1.bf16.msra.mxu0 %v874
      %2450 = vmatprep.subr.bf16.mxu0 0
      %2451 = vmatpush1.bf16.msra.mxu0 %v875
      %2452 = vmatprep.subr.bf16.mxu0 0
      %2453 = vmatpush1.bf16.msra.mxu0 %v876
      %2454 = vmatprep.subr.bf16.mxu0 0
      %2455 = vmatpush1.bf16.msra.mxu0 0
      %2456 = vmatprep.subr.bf16.mxu0 0
      %2457 = vmatpush1.bf16.msra.mxu0 0
      %2458 = vmatprep.subr.bf16.mxu0 0
      %2459 = vmatpush1.bf16.msra.mxu0 0
      %2460 = vmatprep.subr.bf16.mxu0 0
      %2461 = vmatpush1.bf16.msra.mxu0 0
      %2462 = vmatprep.subr.bf16.mxu0 0
      %2463 = vmatpush1.bf16.msra.mxu0 0
      %2464 = vmatprep.subr.bf16.mxu0 0
      %2465 = vmatpush1.bf16.msra.mxu0 0
      %2466 = vmatprep.subr.bf16.mxu0 0
      %2467 = vmatpush1.bf16.msra.mxu0 0
      %2468 = vmatprep.subr.bf16.mxu0 0
      %2469 = vmatpush1.bf16.msra.mxu0 0
      %2470 = vmatprep.mubr.bf16.mxu0 0
      %2471 = vmatmul.mubr.bf16.gmra.mrb[0].mxu0 %v1923
      %v2472 = vpop.f32.mrb[0].mxu0
      %v2473 = vadd.f32 0.0, %v2472
      %v2474 = vpop.f32.mrb[0].mxu0
      %v2475 = vpop.f32.mrb[0].mxu0
      %v2476 = vpop.f32.mrb[0].mxu0
      %2477 = vdwg.mxu0
      %v2478 = vadd.f32 %v2433, %v2473
      %2479 = vmatprep.subr.bf16.mxu0 0
      %2480 = vmatpush1.bf16.msra.mxu0 %v977
      %2481 = vmatprep.subr.bf16.mxu0 0
      %2482 = vmatpush1.bf16.msra.mxu0 %v978
      %2483 = vmatprep.subr.bf16.mxu0 0
      %2484 = vmatpush1.bf16.msra.mxu0 %v979
      %2485 = vmatprep.subr.bf16.mxu0 0
      %2486 = vmatpush1.bf16.msra.mxu0 %v980
      %2487 = vmatprep.subr.bf16.mxu0 0
      %2488 = vmatpush1.bf16.msra.mxu0 %v981
      %2489 = vmatprep.subr.bf16.mxu0 0
      %2490 = vmatpush1.bf16.msra.mxu0 %v982
      %2491 = vmatprep.subr.bf16.mxu0 0
      %2492 = vmatpush1.bf16.msra.mxu0 %v983
      %2493 = vmatprep.subr.bf16.mxu0 0
      %2494 = vmatpush1.bf16.msra.mxu0 %v984
      %2495 = vmatprep.subr.bf16.mxu0 0
      %2496 = vmatpush1.bf16.msra.mxu0 0
      %2497 = vmatprep.subr.bf16.mxu0 0
      %2498 = vmatpush1.bf16.msra.mxu0 0
      %2499 = vmatprep.subr.bf16.mxu0 0
      %2500 = vmatpush1.bf16.msra.mxu0 0
      %2501 = vmatprep.subr.bf16.mxu0 0
      %2502 = vmatpush1.bf16.msra.mxu0 0
      %2503 = vmatprep.subr.bf16.mxu0 0
      %2504 = vmatpush1.bf16.msra.mxu0 0
      %2505 = vmatprep.subr.bf16.mxu0 0
      %2506 = vmatpush1.bf16.msra.mxu0 0
      %2507 = vmatprep.subr.bf16.mxu0 0
      %2508 = vmatpush1.bf16.msra.mxu0 0
      %2509 = vmatprep.subr.bf16.mxu0 0
      %2510 = vmatpush1.bf16.msra.mxu0 0
      %2511 = vmatprep.mubr.bf16.mxu0 0
      %2512 = vmatmul.mubr.bf16.gmra.mrb[0].mxu0 %v2220
      %v2513 = vpop.f32.mrb[0].mxu0
      %v2514 = vadd.f32 0.0, %v2513
      %v2515 = vpop.f32.mrb[0].mxu0
      %v2516 = vpop.f32.mrb[0].mxu0
      %v2517 = vpop.f32.mrb[0].mxu0
      %2518 = vdwg.mxu0
      %v2519 = vadd.f32 %v2478, %v2514
      %2520 = vmatprep.subr.bf16.mxu0 0
      %2521 = vmatpush1.bf16.msra.mxu0 %v1085
      %2522 = vmatprep.subr.bf16.mxu0 0
      %2523 = vmatpush1.bf16.msra.mxu0 %v1086
      %2524 = vmatprep.subr.bf16.mxu0 0
      %2525 = vmatpush1.bf16.msra.mxu0 %v1087
      %2526 = vmatprep.subr.bf16.mxu0 0
      %2527 = vmatpush1.bf16.msra.mxu0 %v1088
      %2528 = vmatprep.subr.bf16.mxu0 0
      %2529 = vmatpush1.bf16.msra.mxu0 %v1089
      %2530 = vmatprep.subr.bf16.mxu0 0
      %2531 = vmatpush1.bf16.msra.mxu0 %v1090
      %2532 = vmatprep.subr.bf16.mxu0 0
      %2533 = vmatpush1.bf16.msra.mxu0 %v1091
      %2534 = vmatprep.subr.bf16.mxu0 0
      %2535 = vmatpush1.bf16.msra.mxu0 %v1092
      %2536 = vmatprep.subr.bf16.mxu0 0
      %2537 = vmatpush1.bf16.msra.mxu0 0
      %2538 = vmatprep.subr.bf16.mxu0 0
      %2539 = vmatpush1.bf16.msra.mxu0 0
      %2540 = vmatprep.subr.bf16.mxu0 0
      %2541 = vmatpush1.bf16.msra.mxu0 0
      %2542 = vmatprep.subr.bf16.mxu0 0
      %2543 = vmatpush1.bf16.msra.mxu0 0
      %2544 = vmatprep.subr.bf16.mxu0 0
      %2545 = vmatpush1.bf16.msra.mxu0 0
      %2546 = vmatprep.subr.bf16.mxu0 0
      %2547 = vmatpush1.bf16.msra.mxu0 0
      %2548 = vmatprep.subr.bf16.mxu0 0
      %2549 = vmatpush1.bf16.msra.mxu0 0
      %2550 = vmatprep.subr.bf16.mxu0 0
      %2551 = vmatpush1.bf16.msra.mxu0 0
      %2552 = vmatprep.mubr.bf16.mxu0 0
      %2553 = vmatmul.mubr.bf16.gmra.mrb[0].mxu0 %v2263
      %v2554 = vpop.f32.mrb[0].mxu0
      %v2555 = vadd.f32 0.0, %v2554
      %v2556 = vpop.f32.mrb[0].mxu0
      %v2557 = vpop.f32.mrb[0].mxu0
      %v2558 = vpop.f32.mrb[0].mxu0
      %2559 = vdwg.mxu0
      %v2560 = vadd.f32 %v2519, %v2555
      %2561 = vmatprep.subr.bf16.mxu0 0
      %2562 = vmatpush1.bf16.msra.mxu0 %v1193
      %2563 = vmatprep.subr.bf16.mxu0 0
      %2564 = vmatpush1.bf16.msra.mxu0 %v1194
      %2565 = vmatprep.subr.bf16.mxu0 0
      %2566 = vmatpush1.bf16.msra.mxu0 %v1195
      %2567 = vmatprep.subr.bf16.mxu0 0
      %2568 = vmatpush1.bf16.msra.mxu0 %v1196
      %2569 = vmatprep.subr.bf16.mxu0 0
      %2570 = vmatpush1.bf16.msra.mxu0 %v1197
      %2571 = vmatprep.subr.bf16.mxu0 0
      %2572 = vmatpush1.bf16.msra.mxu0 %v1198
      %2573 = vmatprep.subr.bf16.mxu0 0
      %2574 = vmatpush1.bf16.msra.mxu0 %v1199
      %2575 = vmatprep.subr.bf16.mxu0 0
      %2576 = vmatpush1.bf16.msra.mxu0 %v1200
      %2577 = vmatprep.subr.bf16.mxu0 0
      %2578 = vmatpush1.bf16.msra.mxu0 0
      %2579 = vmatprep.subr.bf16.mxu0 0
      %2580 = vmatpush1.bf16.msra.mxu0 0
      %2581 = vmatprep.subr.bf16.mxu0 0
      %2582 = vmatpush1.bf16.msra.mxu0 0
      %2583 = vmatprep.subr.bf16.mxu0 0
      %2584 = vmatpush1.bf16.msra.mxu0 0
      %2585 = vmatprep.subr.bf16.mxu0 0
      %2586 = vmatpush1.bf16.msra.mxu0 0
      %2587 = vmatprep.subr.bf16.mxu0 0
      %2588 = vmatpush1.bf16.msra.mxu0 0
      %2589 = vmatprep.subr.bf16.mxu0 0
      %2590 = vmatpush1.bf16.msra.mxu0 0
      %2591 = vmatprep.subr.bf16.mxu0 0
      %2592 = vmatpush1.bf16.msra.mxu0 0
      %2593 = vmatprep.mubr.bf16.mxu0 0
      %2594 = vmatmul.mubr.bf16.gmra.mrb[0].mxu0 %v2306
      %v2595 = vpop.f32.mrb[0].mxu0
      %v2596 = vadd.f32 0.0, %v2595
      %v2597 = vpop.f32.mrb[0].mxu0
      %v2598 = vpop.f32.mrb[0].mxu0
      %v2599 = vpop.f32.mrb[0].mxu0
      %2600 = vdwg.mxu0
      %v2601 = vadd.f32 %v2560, %v2596
      %s2602 = scalar_lea.vmem [#allocation2], 40
      %v2603 = vld [vmem:[%s2602] sm:$0xf]
      %v2604 = vpack.c.bf16 %v2603, %v2603
      %2605 = vmatprep.subr.bf16.mxu0 0
      %2606 = vmatpush1.bf16.msra.mxu0 %v1301
      %2607 = vmatprep.subr.bf16.mxu0 0
      %2608 = vmatpush1.bf16.msra.mxu0 %v1302
      %2609 = vmatprep.subr.bf16.mxu0 0
      %2610 = vmatpush1.bf16.msra.mxu0 %v1303
      %2611 = vmatprep.subr.bf16.mxu0 0
      %2612 = vmatpush1.bf16.msra.mxu0 %v1304
      %2613 = vmatprep.subr.bf16.mxu0 0
      %2614 = vmatpush1.bf16.msra.mxu0 %v1305
      %2615 = vmatprep.subr.bf16.mxu0 0
      %2616 = vmatpush1.bf16.msra.mxu0 %v1306
      %2617 = vmatprep.subr.bf16.mxu0 0
      %2618 = vmatpush1.bf16.msra.mxu0 %v1307
      %2619 = vmatprep.subr.bf16.mxu0 0
      %2620 = vmatpush1.bf16.msra.mxu0 %v1308
      %2621 = vmatprep.subr.bf16.mxu0 0
      %2622 = vmatpush1.bf16.msra.mxu0 0
      %2623 = vmatprep.subr.bf16.mxu0 0
      %2624 = vmatpush1.bf16.msra.mxu0 0
      %2625 = vmatprep.subr.bf16.mxu0 0
      %2626 = vmatpush1.bf16.msra.mxu0 0
      %2627 = vmatprep.subr.bf16.mxu0 0
      %2628 = vmatpush1.bf16.msra.mxu0 0
      %2629 = vmatprep.subr.bf16.mxu0 0
      %2630 = vmatpush1.bf16.msra.mxu0 0
      %2631 = vmatprep.subr.bf16.mxu0 0
      %2632 = vmatpush1.bf16.msra.mxu0 0
      %2633 = vmatprep.subr.bf16.mxu0 0
      %2634 = vmatpush1.bf16.msra.mxu0 0
      %2635 = vmatprep.subr.bf16.mxu0 0
      %2636 = vmatpush1.bf16.msra.mxu0 0
      %2637 = vmatprep.mubr.bf16.mxu0 0
      %2638 = vmatmul.mubr.bf16.gmra.mrb[0].mxu0 %v2604
      %v2639 = vpop.f32.mrb[0].mxu0
      %v2640 = vadd.f32 0.0, %v2639
      %v2641 = vpop.f32.mrb[0].mxu0
      %v2642 = vpop.f32.mrb[0].mxu0
      %v2643 = vpop.f32.mrb[0].mxu0
      %2644 = vdwg.mxu0
      %v2645 = vadd.f32 %v2601, %v2640
      %v2646 = vld [vmem:[%s2602 + $0x1] sm:$0xf]
      %v2647 = vpack.c.bf16 %v2646, %v2646
      %2648 = vmatprep.subr.bf16.mxu0 0
      %2649 = vmatpush1.bf16.msra.mxu0 %v1409
      %2650 = vmatprep.subr.bf16.mxu0 0
      %2651 = vmatpush1.bf16.msra.mxu0 %v1410
      %2652 = vmatprep.subr.bf16.mxu0 0
      %2653 = vmatpush1.bf16.msra.mxu0 %v1411
      %2654 = vmatprep.subr.bf16.mxu0 0
      %2655 = vmatpush1.bf16.msra.mxu0 %v1412
      %2656 = vmatprep.subr.bf16.mxu0 0
      %2657 = vmatpush1.bf16.msra.mxu0 %v1413
      %2658 = vmatprep.subr.bf16.mxu0 0
      %2659 = vmatpush1.bf16.msra.mxu0 %v1414
      %2660 = vmatprep.subr.bf16.mxu0 0
      %2661 = vmatpush1.bf16.msra.mxu0 %v1415
      %2662 = vmatprep.subr.bf16.mxu0 0
      %2663 = vmatpush1.bf16.msra.mxu0 %v1416
      %2664 = vmatprep.subr.bf16.mxu0 0
      %2665 = vmatpush1.bf16.msra.mxu0 0
      %2666 = vmatprep.subr.bf16.mxu0 0
      %2667 = vmatpush1.bf16.msra.mxu0 0
      %2668 = vmatprep.subr.bf16.mxu0 0
      %2669 = vmatpush1.bf16.msra.mxu0 0
      %2670 = vmatprep.subr.bf16.mxu0 0
      %2671 = vmatpush1.bf16.msra.mxu0 0
      %2672 = vmatprep.subr.bf16.mxu0 0
      %2673 = vmatpush1.bf16.msra.mxu0 0
      %2674 = vmatprep.subr.bf16.mxu0 0
      %2675 = vmatpush1.bf16.msra.mxu0 0
      %2676 = vmatprep.subr.bf16.mxu0 0
      %2677 = vmatpush1.bf16.msra.mxu0 0
      %2678 = vmatprep.subr.bf16.mxu0 0
      %2679 = vmatpush1.bf16.msra.mxu0 0
      %2680 = vmatprep.mubr.bf16.mxu0 0
      %2681 = vmatmul.mubr.bf16.gmra.mrb[0].mxu0 %v2647
      %v2682 = vpop.f32.mrb[0].mxu0
      %v2683 = vadd.f32 0.0, %v2682
      %v2684 = vpop.f32.mrb[0].mxu0
      %v2685 = vpop.f32.mrb[0].mxu0
      %v2686 = vpop.f32.mrb[0].mxu0
      %2687 = vdwg.mxu0
      %v2688 = vadd.f32 %v2645, %v2683
      %v2689 = vld [vmem:[%s2602 + $0x2] sm:$0xf]
      %v2690 = vpack.c.bf16 %v2689, %v2689
      %2691 = vmatprep.subr.bf16.mxu0 0
      %2692 = vmatpush1.bf16.msra.mxu0 %v1517
      %2693 = vmatprep.subr.bf16.mxu0 0
      %2694 = vmatpush1.bf16.msra.mxu0 %v1518
      %2695 = vmatprep.subr.bf16.mxu0 0
      %2696 = vmatpush1.bf16.msra.mxu0 %v1519
      %2697 = vmatprep.subr.bf16.mxu0 0
      %2698 = vmatpush1.bf16.msra.mxu0 %v1520
      %2699 = vmatprep.subr.bf16.mxu0 0
      %2700 = vmatpush1.bf16.msra.mxu0 %v1521
      %2701 = vmatprep.subr.bf16.mxu0 0
      %2702 = vmatpush1.bf16.msra.mxu0 %v1522
      %2703 = vmatprep.subr.bf16.mxu0 0
      %2704 = vmatpush1.bf16.msra.mxu0 %v1523
      %2705 = vmatprep.subr.bf16.mxu0 0
      %2706 = vmatpush1.bf16.msra.mxu0 %v1524
      %2707 = vmatprep.subr.bf16.mxu0 0
      %2708 = vmatpush1.bf16.msra.mxu0 0
      %2709 = vmatprep.subr.bf16.mxu0 0
      %2710 = vmatpush1.bf16.msra.mxu0 0
      %2711 = vmatprep.subr.bf16.mxu0 0
      %2712 = vmatpush1.bf16.msra.mxu0 0
      %2713 = vmatprep.subr.bf16.mxu0 0
      %2714 = vmatpush1.bf16.msra.mxu0 0
      %2715 = vmatprep.subr.bf16.mxu0 0
      %2716 = vmatpush1.bf16.msra.mxu0 0
      %2717 = vmatprep.subr.bf16.mxu0 0
      %2718 = vmatpush1.bf16.msra.mxu0 0
      %2719 = vmatprep.subr.bf16.mxu0 0
      %2720 = vmatpush1.bf16.msra.mxu0 0
      %2721 = vmatprep.subr.bf16.mxu0 0
      %2722 = vmatpush1.bf16.msra.mxu0 0
      %2723 = vmatprep.mubr.bf16.mxu0 0
      %2724 = vmatmul.mubr.bf16.gmra.mrb[0].mxu0 %v2690
      %v2725 = vpop.f32.mrb[0].mxu0
      %v2726 = vadd.f32 0.0, %v2725
      %v2727 = vpop.f32.mrb[0].mxu0
      %v2728 = vpop.f32.mrb[0].mxu0
      %v2729 = vpop.f32.mrb[0].mxu0
      %2730 = vdwg.mxu0
      %v2731 = vadd.f32 %v2688, %v2726
      %v2732 = vadd.f32 %v2731, %v1579
      %v2733 = vmax.f32 %v2732, 0.0
      %v2734 = vsel %vm1583, %v2733, 0.0
      %v2735 = vrot.slane %v2734, 4
      %v2736 = vadd.f32 %v2734, %v2735
      %v2737 = vrot.slane %v2736, 2
      %v2738 = vadd.f32 %v2736, %v2737
      %v2739 = vrot.slane %v2738, 1
      %v2740 = vadd.f32 %v2738, %v2739
      %v2741 = vadd.f32 %v2357, %v2740
      %v2742 = vmul.f32 %v2741, 0.0625
      %v2743 = vpack.c.bf16 %v2742, %v2742
      %v2744 = vld [vmem:[%s5] sm:$0xff]
      %v2745 = vld [vmem:[%s5 + $0x8] sm:$0xff]
      %v2746 = vld [vmem:[%s5 + $0x10] sm:$0xff]
      %v2747 = vld [vmem:[%s5 + $0x18] sm:$0xff]
      %v2748 = vld [vmem:[%s5 + $0x20] sm:$0xff]
      %v2749 = vld [vmem:[%s5 + $0x28] sm:$0xff]
      %v2750 = vld [vmem:[%s5 + $0x30] sm:$0xff]
      %v2751 = vld [vmem:[%s5 + $0x38] sm:$0xff]
      %v2752 = vld [vmem:[%s5 + $0x40] sm:$0xff]
      %v2753 = vld [vmem:[%s5 + $0x48] sm:$0xff]
      %v2754 = vld [vmem:[%s5 + $0x50] sm:$0xff]
      %v2755 = vld [vmem:[%s5 + $0x58] sm:$0xf]
      %v2756 = vld [vmem:[%s5 + $0x5c] sm:$0xff]
      %v2757 = vld [vmem:[%s5 + $0x64] sm:$0xff]
      %v2758 = vld [vmem:[%s5 + $0x6c] sm:$0xff]
      %v2759 = vld [vmem:[%s5 + $0x74] sm:$0xff]
      %v2760 = vld [vmem:[%s5 + $0x7c] sm:$0xff]
      %v2761 = vld [vmem:[%s5 + $0x84] sm:$0xff]
      %v2762 = vld [vmem:[%s5 + $0x8c] sm:$0xff]
      %v2763 = vld [vmem:[%s5 + $0x94] sm:$0xff]
      %v2764 = vld [vmem:[%s5 + $0x9c] sm:$0xff]
      %v2765 = vld [vmem:[%s5 + $0xa4] sm:$0xff]
      %v2766 = vld [vmem:[%s5 + $0xac] sm:$0xff]
      %v2767 = vld [vmem:[%s5 + $0xb4] sm:$0xf]
      %v2768 = vld [vmem:[%s5 + $0xb8] sm:$0xff]
      %v2769 = vld [vmem:[%s5 + $0xc0] sm:$0xff]
      %v2770 = vld [vmem:[%s5 + $0xc8] sm:$0xff]
      %v2771 = vld [vmem:[%s5 + $0xd0] sm:$0xff]
      %v2772 = vld [vmem:[%s5 + $0xd8] sm:$0xff]
      %v2773 = vld [vmem:[%s5 + $0xe0] sm:$0xff]
      %v2774 = vld [vmem:[%s5 + $0xe8] sm:$0xff]
      %v2775 = vld [vmem:[%s5 + $0xf0] sm:$0xff]
      %v2776 = vld [vmem:[%s5 + $0xf8] sm:$0xff]
      %v2777 = vld [vmem:[%s5 + $0x100] sm:$0xff]
      %v2778 = vld [vmem:[%s5 + $0x108] sm:$0xff]
      %v2779 = vld [vmem:[%s5 + $0x110] sm:$0xf]
      %v2780 = vld [vmem:[%s5 + $0x114] sm:$0xff]
      %v2781 = vld [vmem:[%s5 + $0x11c] sm:$0xff]
      %v2782 = vld [vmem:[%s5 + $0x124] sm:$0xff]
      %v2783 = vld [vmem:[%s5 + $0x12c] sm:$0xff]
      %v2784 = vld [vmem:[%s5 + $0x134] sm:$0xff]
      %v2785 = vld [vmem:[%s5 + $0x13c] sm:$0xff]
      %v2786 = vld [vmem:[%s5 + $0x144] sm:$0xff]
      %v2787 = vld [vmem:[%s5 + $0x14c] sm:$0xff]
      %v2788 = vld [vmem:[%s5 + $0x154] sm:$0xff]
      %v2789 = vld [vmem:[%s5 + $0x15c] sm:$0xff]
      %v2790 = vld [vmem:[%s5 + $0x164] sm:$0xff]
      %v2791 = vld [vmem:[%s5 + $0x16c] sm:$0xf]
      %v2792 = vld [vmem:[%s5 + $0x170] sm:$0xff]
      %v2793 = vld [vmem:[%s5 + $0x178] sm:$0xff]
      %v2794 = vld [vmem:[%s5 + $0x180] sm:$0xff]
      %v2795 = vld [vmem:[%s5 + $0x188] sm:$0xff]
      %v2796 = vld [vmem:[%s5 + $0x190] sm:$0xff]
      %v2797 = vld [vmem:[%s5 + $0x198] sm:$0xff]
      %v2798 = vld [vmem:[%s5 + $0x1a0] sm:$0xff]
      %v2799 = vld [vmem:[%s5 + $0x1a8] sm:$0xff]
      %v2800 = vld [vmem:[%s5 + $0x1b0] sm:$0xff]
      %v2801 = vld [vmem:[%s5 + $0x1b8] sm:$0xff]
      %v2802 = vld [vmem:[%s5 + $0x1c0] sm:$0xff]
      %v2803 = vld [vmem:[%s5 + $0x1c8] sm:$0xf]
      %v2804 = vld [vmem:[%s5 + $0x1cc] sm:$0xff]
      %v2805 = vld [vmem:[%s5 + $0x1d4] sm:$0xff]
      %v2806 = vld [vmem:[%s5 + $0x1dc] sm:$0xff]
      %v2807 = vld [vmem:[%s5 + $0x1e4] sm:$0xff]
      %v2808 = vld [vmem:[%s5 + $0x1ec] sm:$0xff]
      %v2809 = vld [vmem:[%s5 + $0x1f4] sm:$0xff]
      %v2810 = vld [vmem:[%s5 + $0x1fc] sm:$0xff]
      %v2811 = vld [vmem:[%s5 + $0x204] sm:$0xff]
      %v2812 = vld [vmem:[%s5 + $0x20c] sm:$0xff]
      %v2813 = vld [vmem:[%s5 + $0x214] sm:$0xff]
      %v2814 = vld [vmem:[%s5 + $0x21c] sm:$0xff]
      %v2815 = vld [vmem:[%s5 + $0x224] sm:$0xf]
      %v2816 = vld [vmem:[%s5 + $0x228] sm:$0xff]
      %v2817 = vld [vmem:[%s5 + $0x230] sm:$0xff]
      %v2818 = vld [vmem:[%s5 + $0x238] sm:$0xff]
      %v2819 = vld [vmem:[%s5 + $0x240] sm:$0xff]
      %v2820 = vld [vmem:[%s5 + $0x248] sm:$0xff]
      %v2821 = vld [vmem:[%s5 + $0x250] sm:$0xff]
      %v2822 = vld [vmem:[%s5 + $0x258] sm:$0xff]
      %v2823 = vld [vmem:[%s5 + $0x260] sm:$0xff]
      %v2824 = vld [vmem:[%s5 + $0x268] sm:$0xff]
      %v2825 = vld [vmem:[%s5 + $0x270] sm:$0xff]
      %v2826 = vld [vmem:[%s5 + $0x278] sm:$0xff]
      %v2827 = vld [vmem:[%s5 + $0x280] sm:$0xf]
      %v2828 = vld [vmem:[%s5 + $0x284] sm:$0xff]
      %v2829 = vld [vmem:[%s5 + $0x28c] sm:$0xff]
      %v2830 = vld [vmem:[%s5 + $0x294] sm:$0xff]
      %v2831 = vld [vmem:[%s5 + $0x29c] sm:$0xff]
      %v2832 = vld [vmem:[%s5 + $0x2a4] sm:$0xff]
      %v2833 = vld [vmem:[%s5 + $0x2ac] sm:$0xff]
      %v2834 = vld [vmem:[%s5 + $0x2b4] sm:$0xff]
      %v2835 = vld [vmem:[%s5 + $0x2bc] sm:$0xff]
      %v2836 = vld [vmem:[%s5 + $0x2c4] sm:$0xff]
      %v2837 = vld [vmem:[%s5 + $0x2cc] sm:$0xff]
      %v2838 = vld [vmem:[%s5 + $0x2d4] sm:$0xff]
      %v2839 = vld [vmem:[%s5 + $0x2dc] sm:$0xf]
      %v2840 = vld [vmem:[%s5 + $0x2e0] sm:$0xff]
      %v2841 = vld [vmem:[%s5 + $0x2e8] sm:$0xff]
      %v2842 = vld [vmem:[%s5 + $0x2f0] sm:$0xff]
      %v2843 = vld [vmem:[%s5 + $0x2f8] sm:$0xff]
      %v2844 = vld [vmem:[%s5 + $0x300] sm:$0xff]
      %v2845 = vld [vmem:[%s5 + $0x308] sm:$0xff]
      %v2846 = vld [vmem:[%s5 + $0x310] sm:$0xff]
      %v2847 = vld [vmem:[%s5 + $0x318] sm:$0xff]
      %v2848 = vld [vmem:[%s5 + $0x320] sm:$0xff]
      %v2849 = vld [vmem:[%s5 + $0x328] sm:$0xff]
      %v2850 = vld [vmem:[%s5 + $0x330] sm:$0xff]
      %v2851 = vld [vmem:[%s5 + $0x338] sm:$0xf]
      %v2852 = vld [vmem:[%s5 + $0x33c] sm:$0xff]
      %v2853 = vld [vmem:[%s5 + $0x344] sm:$0xff]
      %v2854 = vld [vmem:[%s5 + $0x34c] sm:$0xff]
      %v2855 = vld [vmem:[%s5 + $0x354] sm:$0xff]
      %v2856 = vld [vmem:[%s5 + $0x35c] sm:$0xff]
      %v2857 = vld [vmem:[%s5 + $0x364] sm:$0xff]
      %v2858 = vld [vmem:[%s5 + $0x36c] sm:$0xff]
      %v2859 = vld [vmem:[%s5 + $0x374] sm:$0xff]
      %v2860 = vld [vmem:[%s5 + $0x37c] sm:$0xff]
      %v2861 = vld [vmem:[%s5 + $0x384] sm:$0xff]
      %v2862 = vld [vmem:[%s5 + $0x38c] sm:$0xff]
      %v2863 = vld [vmem:[%s5 + $0x394] sm:$0xf]
      %v2864 = vld [vmem:[%s5 + $0x398] sm:$0xff]
      %v2865 = vld [vmem:[%s5 + $0x3a0] sm:$0xff]
      %v2866 = vld [vmem:[%s5 + $0x3a8] sm:$0xff]
      %v2867 = vld [vmem:[%s5 + $0x3b0] sm:$0xff]
      %v2868 = vld [vmem:[%s5 + $0x3b8] sm:$0xff]
      %v2869 = vld [vmem:[%s5 + $0x3c0] sm:$0xff]
      %v2870 = vld [vmem:[%s5 + $0x3c8] sm:$0xff]
      %v2871 = vld [vmem:[%s5 + $0x3d0] sm:$0xff]
      %v2872 = vld [vmem:[%s5 + $0x3d8] sm:$0xff]
      %v2873 = vld [vmem:[%s5 + $0x3e0] sm:$0xff]
      %v2874 = vld [vmem:[%s5 + $0x3e8] sm:$0xff]
      %v2875 = vld [vmem:[%s5 + $0x3f0] sm:$0xf]
      %v2876 = vld [vmem:[%s5 + $0x3f4] sm:$0xff]
      %v2877 = vld [vmem:[%s5 + $0x3fc] sm:$0xff]
      %v2878 = vld [vmem:[%s5 + $0x404] sm:$0xff]
      %v2879 = vld [vmem:[%s5 + $0x40c] sm:$0xff]
      %v2880 = vld [vmem:[%s5 + $0x414] sm:$0xff]
      %v2881 = vld [vmem:[%s5 + $0x41c] sm:$0xff]
      %v2882 = vld [vmem:[%s5 + $0x424] sm:$0xff]
      %v2883 = vld [vmem:[%s5 + $0x42c] sm:$0xff]
      %v2884 = vld [vmem:[%s5 + $0x434] sm:$0xff]
      %v2885 = vld [vmem:[%s5 + $0x43c] sm:$0xff]
      %v2886 = vld [vmem:[%s5 + $0x444] sm:$0xff]
      %v2887 = vld [vmem:[%s5 + $0x44c] sm:$0xf]
      %v2888 = vld [vmem:[%s5 + $0x450] sm:$0xff]
      %v2889 = vld [vmem:[%s5 + $0x458] sm:$0xff]
      %v2890 = vld [vmem:[%s5 + $0x460] sm:$0xff]
      %v2891 = vld [vmem:[%s5 + $0x468] sm:$0xff]
      %v2892 = vld [vmem:[%s5 + $0x470] sm:$0xff]
      %v2893 = vld [vmem:[%s5 + $0x478] sm:$0xff]
      %v2894 = vld [vmem:[%s5 + $0x480] sm:$0xff]
      %v2895 = vld [vmem:[%s5 + $0x488] sm:$0xff]
      %v2896 = vld [vmem:[%s5 + $0x490] sm:$0xff]
      %v2897 = vld [vmem:[%s5 + $0x498] sm:$0xff]
      %v2898 = vld [vmem:[%s5 + $0x4a0] sm:$0xff]
      %v2899 = vld [vmem:[%s5 + $0x4a8] sm:$0xf]
      %v2900 = vld [vmem:[%s5 + $0x4ac] sm:$0xff]
      %v2901 = vld [vmem:[%s5 + $0x4b4] sm:$0xff]
      %v2902 = vld [vmem:[%s5 + $0x4bc] sm:$0xff]
      %v2903 = vld [vmem:[%s5 + $0x4c4] sm:$0xff]
      %v2904 = vld [vmem:[%s5 + $0x4cc] sm:$0xff]
      %v2905 = vld [vmem:[%s5 + $0x4d4] sm:$0xff]
      %v2906 = vld [vmem:[%s5 + $0x4dc] sm:$0xff]
      %v2907 = vld [vmem:[%s5 + $0x4e4] sm:$0xff]
      %v2908 = vld [vmem:[%s5 + $0x4ec] sm:$0xff]
      %v2909 = vld [vmem:[%s5 + $0x4f4] sm:$0xff]
      %v2910 = vld [vmem:[%s5 + $0x4fc] sm:$0xff]
      %v2911 = vld [vmem:[%s5 + $0x504] sm:$0xf]
      %v2912 = vld [vmem:[%s5 + $0x508] sm:$0xff]
      %v2913 = vld [vmem:[%s5 + $0x510] sm:$0xff]
      %v2914 = vld [vmem:[%s5 + $0x518] sm:$0xff]
      %v2915 = vld [vmem:[%s5 + $0x520] sm:$0xff]
      %v2916 = vld [vmem:[%s5 + $0x528] sm:$0xff]
      %v2917 = vld [vmem:[%s5 + $0x530] sm:$0xff]
      %v2918 = vld [vmem:[%s5 + $0x538] sm:$0xff]
      %v2919 = vld [vmem:[%s5 + $0x540] sm:$0xff]
      %v2920 = vld [vmem:[%s5 + $0x548] sm:$0xff]
      %v2921 = vld [vmem:[%s5 + $0x550] sm:$0xff]
      %v2922 = vld [vmem:[%s5 + $0x558] sm:$0xff]
      %v2923 = vld [vmem:[%s5 + $0x560] sm:$0xf]
      %v2924 = vld [vmem:[%s5 + $0x564] sm:$0xff]
      %v2925 = vld [vmem:[%s5 + $0x56c] sm:$0xff]
      %v2926 = vld [vmem:[%s5 + $0x574] sm:$0xff]
      %v2927 = vld [vmem:[%s5 + $0x57c] sm:$0xff]
      %v2928 = vld [vmem:[%s5 + $0x584] sm:$0xff]
      %v2929 = vld [vmem:[%s5 + $0x58c] sm:$0xff]
      %v2930 = vld [vmem:[%s5 + $0x594] sm:$0xff]
      %v2931 = vld [vmem:[%s5 + $0x59c] sm:$0xff]
      %v2932 = vld [vmem:[%s5 + $0x5a4] sm:$0xff]
      %v2933 = vld [vmem:[%s5 + $0x5ac] sm:$0xff]
      %v2934 = vld [vmem:[%s5 + $0x5b4] sm:$0xff]
      %v2935 = vld [vmem:[%s5 + $0x5bc] sm:$0xf]
      %v2936 = vld [vmem:[%s6] sm:$0xff]
      %v2937 = vld [vmem:[%s6 + $0x8] sm:$0xff]
      %v2938 = vld [vmem:[%s6 + $0x10] sm:$0x7f]
      %v3131 = vunpack.c.l.b16 %v2744
      %v3132 = vunpack.c.h.b16 %v2744
      %v3133 = vunpack.c.l.b16 %v2745
      %v3134 = vunpack.c.h.b16 %v2745
      %v3135 = vunpack.c.l.b16 %v2746
      %v3136 = vunpack.c.h.b16 %v2746
      %v3137 = vunpack.c.l.b16 %v2747
      %v3138 = vunpack.c.h.b16 %v2747
      %v3139 = vunpack.c.l.b16 %v2748
      %v3140 = vunpack.c.h.b16 %v2748
      %v3141 = vunpack.c.l.b16 %v2749
      %v3142 = vunpack.c.h.b16 %v2749
      %v3143 = vunpack.c.l.b16 %v2750
      %v3144 = vunpack.c.h.b16 %v2750
      %v3145 = vunpack.c.l.b16 %v2751
      %v3146 = vunpack.c.h.b16 %v2751
      %v3147 = vunpack.c.l.b16 %v2752
      %v3148 = vunpack.c.h.b16 %v2752
      %v3149 = vunpack.c.l.b16 %v2753
      %v3150 = vunpack.c.h.b16 %v2753
      %v3151 = vunpack.c.l.b16 %v2754
      %v3152 = vunpack.c.h.b16 %v2754
      %v3153 = vunpack.c.l.b16 %v2755
      %v3154 = vunpack.c.l.b16 %v2756
      %v3155 = vunpack.c.h.b16 %v2756
      %v3156 = vunpack.c.l.b16 %v2757
      %v3157 = vunpack.c.h.b16 %v2757
      %v3158 = vunpack.c.l.b16 %v2758
      %v3159 = vunpack.c.h.b16 %v2758
      %v3160 = vunpack.c.l.b16 %v2759
      %v3161 = vunpack.c.h.b16 %v2759
      %v3162 = vunpack.c.l.b16 %v2760
      %v3163 = vunpack.c.h.b16 %v2760
      %v3164 = vunpack.c.l.b16 %v2761
      %v3165 = vunpack.c.h.b16 %v2761
      %v3166 = vunpack.c.l.b16 %v2762
      %v3167 = vunpack.c.h.b16 %v2762
      %v3168 = vunpack.c.l.b16 %v2763
      %v3169 = vunpack.c.h.b16 %v2763
      %v3170 = vunpack.c.l.b16 %v2764
      %v3171 = vunpack.c.h.b16 %v2764
      %v3172 = vunpack.c.l.b16 %v2765
      %v3173 = vunpack.c.h.b16 %v2765
      %v3174 = vunpack.c.l.b16 %v2766
      %v3175 = vunpack.c.h.b16 %v2766
      %v3176 = vunpack.c.l.b16 %v2767
      %v3177 = vunpack.c.l.b16 %v2768
      %v3178 = vunpack.c.h.b16 %v2768
      %v3179 = vunpack.c.l.b16 %v2769
      %v3180 = vunpack.c.h.b16 %v2769
      %v3181 = vunpack.c.l.b16 %v2770
      %v3182 = vunpack.c.h.b16 %v2770
      %v3183 = vunpack.c.l.b16 %v2771
      %v3184 = vunpack.c.h.b16 %v2771
      %v3185 = vunpack.c.l.b16 %v2772
      %v3186 = vunpack.c.h.b16 %v2772
      %v3187 = vunpack.c.l.b16 %v2773
      %v3188 = vunpack.c.h.b16 %v2773
      %v3189 = vunpack.c.l.b16 %v2774
      %v3190 = vunpack.c.h.b16 %v2774
      %v3191 = vunpack.c.l.b16 %v2775
      %v3192 = vunpack.c.h.b16 %v2775
      %v3193 = vunpack.c.l.b16 %v2776
      %v3194 = vunpack.c.h.b16 %v2776
      %v3195 = vunpack.c.l.b16 %v2777
      %v3196 = vunpack.c.h.b16 %v2777
      %v3197 = vunpack.c.l.b16 %v2778
      %v3198 = vunpack.c.h.b16 %v2778
      %v3199 = vunpack.c.l.b16 %v2779
      %v3200 = vunpack.c.l.b16 %v2780
      %v3201 = vunpack.c.h.b16 %v2780
      %v3202 = vunpack.c.l.b16 %v2781
      %v3203 = vunpack.c.h.b16 %v2781
      %v3204 = vunpack.c.l.b16 %v2782
      %v3205 = vunpack.c.h.b16 %v2782
      %v3206 = vunpack.c.l.b16 %v2783
      %v3207 = vunpack.c.h.b16 %v2783
      %v3208 = vunpack.c.l.b16 %v2784
      %v3209 = vunpack.c.h.b16 %v2784
      %v3210 = vunpack.c.l.b16 %v2785
      %v3211 = vunpack.c.h.b16 %v2785
      %v3212 = vunpack.c.l.b16 %v2786
      %v3213 = vunpack.c.h.b16 %v2786
      %v3214 = vunpack.c.l.b16 %v2787
      %v3215 = vunpack.c.h.b16 %v2787
      %v3216 = vunpack.c.l.b16 %v2788
      %v3217 = vunpack.c.h.b16 %v2788
      %v3218 = vunpack.c.l.b16 %v2789
      %v3219 = vunpack.c.h.b16 %v2789
      %v3220 = vunpack.c.l.b16 %v2790
      %v3221 = vunpack.c.h.b16 %v2790
      %v3222 = vunpack.c.l.b16 %v2791
      %v3223 = vunpack.c.l.b16 %v2792
      %v3224 = vunpack.c.h.b16 %v2792
      %v3225 = vunpack.c.l.b16 %v2793
      %v3226 = vunpack.c.h.b16 %v2793
      %v3227 = vunpack.c.l.b16 %v2794
      %v3228 = vunpack.c.h.b16 %v2794
      %v3229 = vunpack.c.l.b16 %v2795
      %v3230 = vunpack.c.h.b16 %v2795
      %v3231 = vunpack.c.l.b16 %v2796
      %v3232 = vunpack.c.h.b16 %v2796
      %v3233 = vunpack.c.l.b16 %v2797
      %v3234 = vunpack.c.h.b16 %v2797
      %v3235 = vunpack.c.l.b16 %v2798
      %v3236 = vunpack.c.h.b16 %v2798
      %v3237 = vunpack.c.l.b16 %v2799
      %v3238 = vunpack.c.h.b16 %v2799
      %v3239 = vunpack.c.l.b16 %v2800
      %v3240 = vunpack.c.h.b16 %v2800
      %v3241 = vunpack.c.l.b16 %v2801
      %v3242 = vunpack.c.h.b16 %v2801
      %v3243 = vunpack.c.l.b16 %v2802
      %v3244 = vunpack.c.h.b16 %v2802
      %v3245 = vunpack.c.l.b16 %v2803
      %v3246 = vunpack.c.l.b16 %v2804
      %v3247 = vunpack.c.h.b16 %v2804
      %v3248 = vunpack.c.l.b16 %v2805
      %v3249 = vunpack.c.h.b16 %v2805
      %v3250 = vunpack.c.l.b16 %v2806
      %v3251 = vunpack.c.h.b16 %v2806
      %v3252 = vunpack.c.l.b16 %v2807
      %v3253 = vunpack.c.h.b16 %v2807
      %v3254 = vunpack.c.l.b16 %v2808
      %v3255 = vunpack.c.h.b16 %v2808
      %v3256 = vunpack.c.l.b16 %v2809
      %v3257 = vunpack.c.h.b16 %v2809
      %v3258 = vunpack.c.l.b16 %v2810
      %v3259 = vunpack.c.h.b16 %v2810
      %v3260 = vunpack.c.l.b16 %v2811
      %v3261 = vunpack.c.h.b16 %v2811
      %v3262 = vunpack.c.l.b16 %v2812
      %v3263 = vunpack.c.h.b16 %v2812
      %v3264 = vunpack.c.l.b16 %v2813
      %v3265 = vunpack.c.h.b16 %v2813
      %v3266 = vunpack.c.l.b16 %v2814
      %v3267 = vunpack.c.h.b16 %v2814
      %v3268 = vunpack.c.l.b16 %v2815
      %v3269 = vunpack.c.l.b16 %v2816
      %v3270 = vunpack.c.h.b16 %v2816
      %v3271 = vunpack.c.l.b16 %v2817
      %v3272 = vunpack.c.h.b16 %v2817
      %v3273 = vunpack.c.l.b16 %v2818
      %v3274 = vunpack.c.h.b16 %v2818
      %v3275 = vunpack.c.l.b16 %v2819
      %v3276 = vunpack.c.h.b16 %v2819
      %v3277 = vunpack.c.l.b16 %v2820
      %v3278 = vunpack.c.h.b16 %v2820
      %v3279 = vunpack.c.l.b16 %v2821
      %v3280 = vunpack.c.h.b16 %v2821
      %v3281 = vunpack.c.l.b16 %v2822
      %v3282 = vunpack.c.h.b16 %v2822
      %v3283 = vunpack.c.l.b16 %v2823
      %v3284 = vunpack.c.h.b16 %v2823
      %v3285 = vunpack.c.l.b16 %v2824
      %v3286 = vunpack.c.h.b16 %v2824
      %v3287 = vunpack.c.l.b16 %v2825
      %v3288 = vunpack.c.h.b16 %v2825
      %v3289 = vunpack.c.l.b16 %v2826
      %v3290 = vunpack.c.h.b16 %v2826
      %v3291 = vunpack.c.l.b16 %v2827
      %v3292 = vunpack.c.l.b16 %v2828
      %v3293 = vunpack.c.h.b16 %v2828
      %v3294 = vunpack.c.l.b16 %v2829
      %v3295 = vunpack.c.h.b16 %v2829
      %v3296 = vunpack.c.l.b16 %v2830
      %v3297 = vunpack.c.h.b16 %v2830
      %v3298 = vunpack.c.l.b16 %v2831
      %v3299 = vunpack.c.h.b16 %v2831
      %v3300 = vunpack.c.l.b16 %v2832
      %v3301 = vunpack.c.h.b16 %v2832
      %v3302 = vunpack.c.l.b16 %v2833
      %v3303 = vunpack.c.h.b16 %v2833
      %v3304 = vunpack.c.l.b16 %v2834
      %v3305 = vunpack.c.h.b16 %v2834
      %v3306 = vunpack.c.l.b16 %v2835
      %v3307 = vunpack.c.h.b16 %v2835
      %v3308 = vunpack.c.l.b16 %v2836
      %v3309 = vunpack.c.h.b16 %v2836
      %v3310 = vunpack.c.l.b16 %v2837
      %v3311 = vunpack.c.h.b16 %v2837
      %v3312 = vunpack.c.l.b16 %v2838
      %v3313 = vunpack.c.h.b16 %v2838
      %v3314 = vunpack.c.l.b16 %v2839
      %v3315 = vunpack.c.l.b16 %v2840
      %v3316 = vunpack.c.h.b16 %v2840
      %v3317 = vunpack.c.l.b16 %v2841
      %v3318 = vunpack.c.h.b16 %v2841
      %v3319 = vunpack.c.l.b16 %v2842
      %v3320 = vunpack.c.h.b16 %v2842
      %v3321 = vunpack.c.l.b16 %v2843
      %v3322 = vunpack.c.h.b16 %v2843
      %v3323 = vunpack.c.l.b16 %v2844
      %v3324 = vunpack.c.h.b16 %v2844
      %v3325 = vunpack.c.l.b16 %v2845
      %v3326 = vunpack.c.h.b16 %v2845
      %v3327 = vunpack.c.l.b16 %v2846
      %v3328 = vunpack.c.h.b16 %v2846
      %v3329 = vunpack.c.l.b16 %v2847
      %v3330 = vunpack.c.h.b16 %v2847
      %v3331 = vunpack.c.l.b16 %v2848
      %v3332 = vunpack.c.h.b16 %v2848
      %v3333 = vunpack.c.l.b16 %v2849
      %v3334 = vunpack.c.h.b16 %v2849
      %v3335 = vunpack.c.l.b16 %v2850
      %v3336 = vunpack.c.h.b16 %v2850
      %v3337 = vunpack.c.l.b16 %v2851
      %v3338 = vunpack.c.l.b16 %v2852
      %v3339 = vunpack.c.h.b16 %v2852
      %v3340 = vunpack.c.l.b16 %v2853
      %v3341 = vunpack.c.h.b16 %v2853
      %v3342 = vunpack.c.l.b16 %v2854
      %v3343 = vunpack.c.h.b16 %v2854
      %v3344 = vunpack.c.l.b16 %v2855
      %v3345 = vunpack.c.h.b16 %v2855
      %v3346 = vunpack.c.l.b16 %v2856
      %v3347 = vunpack.c.h.b16 %v2856
      %v3348 = vunpack.c.l.b16 %v2857
      %v3349 = vunpack.c.h.b16 %v2857
      %v3350 = vunpack.c.l.b16 %v2858
      %v3351 = vunpack.c.h.b16 %v2858
      %v3352 = vunpack.c.l.b16 %v2859
      %v3353 = vunpack.c.h.b16 %v2859
      %v3354 = vunpack.c.l.b16 %v2860
      %v3355 = vunpack.c.h.b16 %v2860
      %v3356 = vunpack.c.l.b16 %v2861
      %v3357 = vunpack.c.h.b16 %v2861
      %v3358 = vunpack.c.l.b16 %v2862
      %v3359 = vunpack.c.h.b16 %v2862
      %v3360 = vunpack.c.l.b16 %v2863
      %v3361 = vunpack.c.l.b16 %v2864
      %v3362 = vunpack.c.h.b16 %v2864
      %v3363 = vunpack.c.l.b16 %v2865
      %v3364 = vunpack.c.h.b16 %v2865
      %v3365 = vunpack.c.l.b16 %v2866
      %v3366 = vunpack.c.h.b16 %v2866
      %v3367 = vunpack.c.l.b16 %v2867
      %v3368 = vunpack.c.h.b16 %v2867
      %v3369 = vunpack.c.l.b16 %v2868
      %v3370 = vunpack.c.h.b16 %v2868
      %v3371 = vunpack.c.l.b16 %v2869
      %v3372 = vunpack.c.h.b16 %v2869
      %v3373 = vunpack.c.l.b16 %v2870
      %v3374 = vunpack.c.h.b16 %v2870
      %v3375 = vunpack.c.l.b16 %v2871
      %v3376 = vunpack.c.h.b16 %v2871
      %v3377 = vunpack.c.l.b16 %v2872
      %v3378 = vunpack.c.h.b16 %v2872
      %v3379 = vunpack.c.l.b16 %v2873
      %v3380 = vunpack.c.h.b16 %v2873
      %v3381 = vunpack.c.l.b16 %v2874
      %v3382 = vunpack.c.h.b16 %v2874
      %v3383 = vunpack.c.l.b16 %v2875
      %v3384 = vunpack.c.l.b16 %v2876
      %v3385 = vunpack.c.h.b16 %v2876
      %v3386 = vunpack.c.l.b16 %v2877
      %v3387 = vunpack.c.h.b16 %v2877
      %v3388 = vunpack.c.l.b16 %v2878
      %v3389 = vunpack.c.h.b16 %v2878
      %v3390 = vunpack.c.l.b16 %v2879
      %v3391 = vunpack.c.h.b16 %v2879
      %v3392 = vunpack.c.l.b16 %v2880
      %v3393 = vunpack.c.h.b16 %v2880
      %v3394 = vunpack.c.l.b16 %v2881
      %v3395 = vunpack.c.h.b16 %v2881
      %v3396 = vunpack.c.l.b16 %v2882
      %v3397 = vunpack.c.h.b16 %v2882
      %v3398 = vunpack.c.l.b16 %v2883
      %v3399 = vunpack.c.h.b16 %v2883
      %v3400 = vunpack.c.l.b16 %v2884
      %v3401 = vunpack.c.h.b16 %v2884
      %v3402 = vunpack.c.l.b16 %v2885
      %v3403 = vunpack.c.h.b16 %v2885
      %v3404 = vunpack.c.l.b16 %v2886
      %v3405 = vunpack.c.h.b16 %v2886
      %v3406 = vunpack.c.l.b16 %v2887
      %v3407 = vunpack.c.l.b16 %v2888
      %v3408 = vunpack.c.h.b16 %v2888
      %v3409 = vunpack.c.l.b16 %v2889
      %v3410 = vunpack.c.h.b16 %v2889
      %v3411 = vunpack.c.l.b16 %v2890
      %v3412 = vunpack.c.h.b16 %v2890
      %v3413 = vunpack.c.l.b16 %v2891
      %v3414 = vunpack.c.h.b16 %v2891
      %v3415 = vunpack.c.l.b16 %v2892
      %v3416 = vunpack.c.h.b16 %v2892
      %v3417 = vunpack.c.l.b16 %v2893
      %v3418 = vunpack.c.h.b16 %v2893
      %v3419 = vunpack.c.l.b16 %v2894
      %v3420 = vunpack.c.h.b16 %v2894
      %v3421 = vunpack.c.l.b16 %v2895
      %v3422 = vunpack.c.h.b16 %v2895
      %v3423 = vunpack.c.l.b16 %v2896
      %v3424 = vunpack.c.h.b16 %v2896
      %v3425 = vunpack.c.l.b16 %v2897
      %v3426 = vunpack.c.h.b16 %v2897
      %v3427 = vunpack.c.l.b16 %v2898
      %v3428 = vunpack.c.h.b16 %v2898
      %v3429 = vunpack.c.l.b16 %v2899
      %v3430 = vunpack.c.l.b16 %v2900
      %v3431 = vunpack.c.h.b16 %v2900
      %v3432 = vunpack.c.l.b16 %v2901
      %v3433 = vunpack.c.h.b16 %v2901
      %v3434 = vunpack.c.l.b16 %v2902
      %v3435 = vunpack.c.h.b16 %v2902
      %v3436 = vunpack.c.l.b16 %v2903
      %v3437 = vunpack.c.h.b16 %v2903
      %v3438 = vunpack.c.l.b16 %v2904
      %v3439 = vunpack.c.h.b16 %v2904
      %v3440 = vunpack.c.l.b16 %v2905
      %v3441 = vunpack.c.h.b16 %v2905
      %v3442 = vunpack.c.l.b16 %v2906
      %v3443 = vunpack.c.h.b16 %v2906
      %v3444 = vunpack.c.l.b16 %v2907
      %v3445 = vunpack.c.h.b16 %v2907
      %v3446 = vunpack.c.l.b16 %v2908
      %v3447 = vunpack.c.h.b16 %v2908
      %v3448 = vunpack.c.l.b16 %v2909
      %v3449 = vunpack.c.h.b16 %v2909
      %v3450 = vunpack.c.l.b16 %v2910
      %v3451 = vunpack.c.h.b16 %v2910
      %v3452 = vunpack.c.l.b16 %v2911
      %v3453 = vunpack.c.l.b16 %v2912
      %v3454 = vunpack.c.h.b16 %v2912
      %v3455 = vunpack.c.l.b16 %v2913
      %v3456 = vunpack.c.h.b16 %v2913
      %v3457 = vunpack.c.l.b16 %v2914
      %v3458 = vunpack.c.h.b16 %v2914
      %v3459 = vunpack.c.l.b16 %v2915
      %v3460 = vunpack.c.h.b16 %v2915
      %v3461 = vunpack.c.l.b16 %v2916
      %v3462 = vunpack.c.h.b16 %v2916
      %v3463 = vunpack.c.l.b16 %v2917
      %v3464 = vunpack.c.h.b16 %v2917
      %v3465 = vunpack.c.l.b16 %v2918
      %v3466 = vunpack.c.h.b16 %v2918
      %v3467 = vunpack.c.l.b16 %v2919
      %v3468 = vunpack.c.h.b16 %v2919
      %v3469 = vunpack.c.l.b16 %v2920
      %v3470 = vunpack.c.h.b16 %v2920
      %v3471 = vunpack.c.l.b16 %v2921
      %v3472 = vunpack.c.h.b16 %v2921
      %v3473 = vunpack.c.l.b16 %v2922
      %v3474 = vunpack.c.h.b16 %v2922
      %v3475 = vunpack.c.l.b16 %v2923
      %v3476 = vunpack.c.l.b16 %v2924
      %v3477 = vunpack.c.h.b16 %v2924
      %v3478 = vunpack.c.l.b16 %v2925
      %v3479 = vunpack.c.h.b16 %v2925
      %v3480 = vunpack.c.l.b16 %v2926
      %v3481 = vunpack.c.h.b16 %v2926
      %v3482 = vunpack.c.l.b16 %v2927
      %v3483 = vunpack.c.h.b16 %v2927
      %v3484 = vunpack.c.l.b16 %v2928
      %v3485 = vunpack.c.h.b16 %v2928
      %v3486 = vunpack.c.l.b16 %v2929
      %v3487 = vunpack.c.h.b16 %v2929
      %v3488 = vunpack.c.l.b16 %v2930
      %v3489 = vunpack.c.h.b16 %v2930
      %v3490 = vunpack.c.l.b16 %v2931
      %v3491 = vunpack.c.h.b16 %v2931
      %v3492 = vunpack.c.l.b16 %v2932
      %v3493 = vunpack.c.h.b16 %v2932
      %v3494 = vunpack.c.l.b16 %v2933
      %v3495 = vunpack.c.h.b16 %v2933
      %v3496 = vunpack.c.l.b16 %v2934
      %v3497 = vunpack.c.h.b16 %v2934
      %v3498 = vunpack.c.l.b16 %v2935
      %v3499 = vpack.c.b16 %v3154, %v3131
      %v3500 = vpack.c.b16 %v3155, %v3132
      %v3501 = vpack.c.b16 %v3156, %v3133
      %v3502 = vpack.c.b16 %v3157, %v3134
      %v3503 = vpack.c.b16 %v3158, %v3135
      %v3504 = vpack.c.b16 %v3159, %v3136
      %v3505 = vpack.c.b16 %v3160, %v3137
      %v3506 = vpack.c.b16 %v3161, %v3138
      %v3507 = vpack.c.b16 %v3162, %v3139
      %v3508 = vpack.c.b16 %v3163, %v3140
      %v3509 = vpack.c.b16 %v3164, %v3141
      %v3510 = vpack.c.b16 %v3165, %v3142
      %v3511 = vpack.c.b16 %v3166, %v3143
      %v3512 = vpack.c.b16 %v3167, %v3144
      %v3513 = vpack.c.b16 %v3168, %v3145
      %v3514 = vpack.c.b16 %v3169, %v3146
      %v3515 = vpack.c.b16 %v3170, %v3147
      %v3516 = vpack.c.b16 %v3171, %v3148
      %v3517 = vpack.c.b16 %v3172, %v3149
      %v3518 = vpack.c.b16 %v3173, %v3150
      %v3519 = vpack.c.b16 %v3174, %v3151
      %v3520 = vpack.c.b16 %v3175, %v3152
      %v3521 = vpack.c.b16 %v3176, %v3153
      %v3522 = vpack.c.b16 %v3200, %v3177
      %v3523 = vpack.c.b16 %v3201, %v3178
      %v3524 = vpack.c.b16 %v3202, %v3179
      %v3525 = vpack.c.b16 %v3203, %v3180
      %v3526 = vpack.c.b16 %v3204, %v3181
      %v3527 = vpack.c.b16 %v3205, %v3182
      %v3528 = vpack.c.b16 %v3206, %v3183
      %v3529 = vpack.c.b16 %v3207, %v3184
      %v3530 = vpack.c.b16 %v3208, %v3185
      %v3531 = vpack.c.b16 %v3209, %v3186
      %v3532 = vpack.c.b16 %v3210, %v3187
      %v3533 = vpack.c.b16 %v3211, %v3188
      %v3534 = vpack.c.b16 %v3212, %v3189
      %v3535 = vpack.c.b16 %v3213, %v3190
      %v3536 = vpack.c.b16 %v3214, %v3191
      %v3537 = vpack.c.b16 %v3215, %v3192
      %v3538 = vpack.c.b16 %v3216, %v3193
      %v3539 = vpack.c.b16 %v3217, %v3194
      %v3540 = vpack.c.b16 %v3218, %v3195
      %v3541 = vpack.c.b16 %v3219, %v3196
      %v3542 = vpack.c.b16 %v3220, %v3197
      %v3543 = vpack.c.b16 %v3221, %v3198
      %v3544 = vpack.c.b16 %v3222, %v3199
      %v3545 = vpack.c.b16 %v3246, %v3223
      %v3546 = vpack.c.b16 %v3247, %v3224
      %v3547 = vpack.c.b16 %v3248, %v3225
      %v3548 = vpack.c.b16 %v3249, %v3226
      %v3549 = vpack.c.b16 %v3250, %v3227
      %v3550 = vpack.c.b16 %v3251, %v3228
      %v3551 = vpack.c.b16 %v3252, %v3229
      %v3552 = vpack.c.b16 %v3253, %v3230
      %v3553 = vpack.c.b16 %v3254, %v3231
      %v3554 = vpack.c.b16 %v3255, %v3232
      %v3555 = vpack.c.b16 %v3256, %v3233
      %v3556 = vpack.c.b16 %v3257, %v3234
      %v3557 = vpack.c.b16 %v3258, %v3235
      %v3558 = vpack.c.b16 %v3259, %v3236
      %v3559 = vpack.c.b16 %v3260, %v3237
      %v3560 = vpack.c.b16 %v3261, %v3238
      %v3561 = vpack.c.b16 %v3262, %v3239
      %v3562 = vpack.c.b16 %v3263, %v3240
      %v3563 = vpack.c.b16 %v3264, %v3241
      %v3564 = vpack.c.b16 %v3265, %v3242
      %v3565 = vpack.c.b16 %v3266, %v3243
      %v3566 = vpack.c.b16 %v3267, %v3244
      %v3567 = vpack.c.b16 %v3268, %v3245
      %v3568 = vpack.c.b16 %v3292, %v3269
      %v3569 = vpack.c.b16 %v3293, %v3270
      %v3570 = vpack.c.b16 %v3294, %v3271
      %v3571 = vpack.c.b16 %v3295, %v3272
      %v3572 = vpack.c.b16 %v3296, %v3273
      %v3573 = vpack.c.b16 %v3297, %v3274
      %v3574 = vpack.c.b16 %v3298, %v3275
      %v3575 = vpack.c.b16 %v3299, %v3276
      %v3576 = vpack.c.b16 %v3300, %v3277
      %v3577 = vpack.c.b16 %v3301, %v3278
      %v3578 = vpack.c.b16 %v3302, %v3279
      %v3579 = vpack.c.b16 %v3303, %v3280
      %v3580 = vpack.c.b16 %v3304, %v3281
      %v3581 = vpack.c.b16 %v3305, %v3282
      %v3582 = vpack.c.b16 %v3306, %v3283
      %v3583 = vpack.c.b16 %v3307, %v3284
      %v3584 = vpack.c.b16 %v3308, %v3285
      %v3585 = vpack.c.b16 %v3309, %v3286
      %v3586 = vpack.c.b16 %v3310, %v3287
      %v3587 = vpack.c.b16 %v3311, %v3288
      %v3588 = vpack.c.b16 %v3312, %v3289
      %v3589 = vpack.c.b16 %v3313, %v3290
      %v3590 = vpack.c.b16 %v3314, %v3291
      %v3591 = vpack.c.b16 %v3338, %v3315
      %v3592 = vpack.c.b16 %v3339, %v3316
      %v3593 = vpack.c.b16 %v3340, %v3317
      %v3594 = vpack.c.b16 %v3341, %v3318
      %v3595 = vpack.c.b16 %v3342, %v3319
      %v3596 = vpack.c.b16 %v3343, %v3320
      %v3597 = vpack.c.b16 %v3344, %v3321
      %v3598 = vpack.c.b16 %v3345, %v3322
      %v3599 = vpack.c.b16 %v3346, %v3323
      %v3600 = vpack.c.b16 %v3347, %v3324
      %v3601 = vpack.c.b16 %v3348, %v3325
      %v3602 = vpack.c.b16 %v3349, %v3326
      %v3603 = vpack.c.b16 %v3350, %v3327
      %v3604 = vpack.c.b16 %v3351, %v3328
      %v3605 = vpack.c.b16 %v3352, %v3329
      %v3606 = vpack.c.b16 %v3353, %v3330
      %v3607 = vpack.c.b16 %v3354, %v3331
      %v3608 = vpack.c.b16 %v3355, %v3332
      %v3609 = vpack.c.b16 %v3356, %v3333
      %v3610 = vpack.c.b16 %v3357, %v3334
      %v3611 = vpack.c.b16 %v3358, %v3335
      %v3612 = vpack.c.b16 %v3359, %v3336
      %v3613 = vpack.c.b16 %v3360, %v3337
      %v3614 = vpack.c.b16 %v3384, %v3361
      %v3615 = vpack.c.b16 %v3385, %v3362
      %v3616 = vpack.c.b16 %v3386, %v3363
      %v3617 = vpack.c.b16 %v3387, %v3364
      %v3618 = vpack.c.b16 %v3388, %v3365
      %v3619 = vpack.c.b16 %v3389, %v3366
      %v3620 = vpack.c.b16 %v3390, %v3367
      %v3621 = vpack.c.b16 %v3391, %v3368
      %v3622 = vpack.c.b16 %v3392, %v3369
      %v3623 = vpack.c.b16 %v3393, %v3370
      %v3624 = vpack.c.b16 %v3394, %v3371
      %v3625 = vpack.c.b16 %v3395, %v3372
      %v3626 = vpack.c.b16 %v3396, %v3373
      %v3627 = vpack.c.b16 %v3397, %v3374
      %v3628 = vpack.c.b16 %v3398, %v3375
      %v3629 = vpack.c.b16 %v3399, %v3376
      %v3630 = vpack.c.b16 %v3400, %v3377
      %v3631 = vpack.c.b16 %v3401, %v3378
      %v3632 = vpack.c.b16 %v3402, %v3379
      %v3633 = vpack.c.b16 %v3403, %v3380
      %v3634 = vpack.c.b16 %v3404, %v3381
      %v3635 = vpack.c.b16 %v3405, %v3382
      %v3636 = vpack.c.b16 %v3406, %v3383
      %v3637 = vpack.c.b16 %v3430, %v3407
      %v3638 = vpack.c.b16 %v3431, %v3408
      %v3639 = vpack.c.b16 %v3432, %v3409
      %v3640 = vpack.c.b16 %v3433, %v3410
      %v3641 = vpack.c.b16 %v3434, %v3411
      %v3642 = vpack.c.b16 %v3435, %v3412
      %v3643 = vpack.c.b16 %v3436, %v3413
      %v3644 = vpack.c.b16 %v3437, %v3414
      %v3645 = vpack.c.b16 %v3438, %v3415
      %v3646 = vpack.c.b16 %v3439, %v3416
      %v3647 = vpack.c.b16 %v3440, %v3417
      %v3648 = vpack.c.b16 %v3441, %v3418
      %v3649 = vpack.c.b16 %v3442, %v3419
      %v3650 = vpack.c.b16 %v3443, %v3420
      %v3651 = vpack.c.b16 %v3444, %v3421
      %v3652 = vpack.c.b16 %v3445, %v3422
      %v3653 = vpack.c.b16 %v3446, %v3423
      %v3654 = vpack.c.b16 %v3447, %v3424
      %v3655 = vpack.c.b16 %v3448, %v3425
      %v3656 = vpack.c.b16 %v3449, %v3426
      %v3657 = vpack.c.b16 %v3450, %v3427
      %v3658 = vpack.c.b16 %v3451, %v3428
      %v3659 = vpack.c.b16 %v3452, %v3429
      %v3660 = vpack.c.b16 %v3476, %v3453
      %v3661 = vpack.c.b16 %v3477, %v3454
      %v3662 = vpack.c.b16 %v3478, %v3455
      %v3663 = vpack.c.b16 %v3479, %v3456
      %v3664 = vpack.c.b16 %v3480, %v3457
      %v3665 = vpack.c.b16 %v3481, %v3458
      %v3666 = vpack.c.b16 %v3482, %v3459
      %v3667 = vpack.c.b16 %v3483, %v3460
      %v3668 = vpack.c.b16 %v3484, %v3461
      %v3669 = vpack.c.b16 %v3485, %v3462
      %v3670 = vpack.c.b16 %v3486, %v3463
      %v3671 = vpack.c.b16 %v3487, %v3464
      %v3672 = vpack.c.b16 %v3488, %v3465
      %v3673 = vpack.c.b16 %v3489, %v3466
      %v3674 = vpack.c.b16 %v3490, %v3467
      %v3675 = vpack.c.b16 %v3491, %v3468
      %v3676 = vpack.c.b16 %v3492, %v3469
      %v3677 = vpack.c.b16 %v3493, %v3470
      %v3678 = vpack.c.b16 %v3494, %v3471
      %v3679 = vpack.c.b16 %v3495, %v3472
      %v3680 = vpack.c.b16 %v3496, %v3473
      %v3681 = vpack.c.b16 %v3497, %v3474
      %v3682 = vpack.c.b16 %v3498, %v3475
      %v3870 = vlaneseq
      %v3871 = vshrl.u32 %v3870, 7
      %v3872 = vsub.s32 0, %v3871
      %v3873 = vrot.slane %v2936, %v3872
      %v3874 = vlaneseq
      %v3875 = vshrl.u32 %v3874, 7
      %v3876 = vsub.s32 1, %v3875
      %v3877 = vrot.slane %v2936, %v3876
      %v3878 = vlaneseq
      %v3879 = vshrl.u32 %v3878, 7
      %v3880 = vsub.s32 2, %v3879
      %v3881 = vrot.slane %v2936, %v3880
      %v3882 = vlaneseq
      %v3883 = vshrl.u32 %v3882, 7
      %v3884 = vsub.s32 3, %v3883
      %v3885 = vrot.slane %v2936, %v3884
      %v3886 = vlaneseq
      %v3887 = vshrl.u32 %v3886, 7
      %v3888 = vsub.s32 4, %v3887
      %v3889 = vrot.slane %v2936, %v3888
      %v3890 = vlaneseq
      %v3891 = vshrl.u32 %v3890, 7
      %v3892 = vsub.s32 5, %v3891
      %v3893 = vrot.slane %v2936, %v3892
      %v3894 = vlaneseq
      %v3895 = vshrl.u32 %v3894, 7
      %v3896 = vsub.s32 6, %v3895
      %v3897 = vrot.slane %v2936, %v3896
      %v3898 = vlaneseq
      %v3899 = vshrl.u32 %v3898, 7
      %v3900 = vsub.s32 7, %v3899
      %v3901 = vrot.slane %v2936, %v3900
      %v3902 = vlaneseq
      %v3903 = vshrl.u32 %v3902, 7
      %v3904 = vsub.s32 0, %v3903
      %v3905 = vrot.slane %v2937, %v3904
      %v3906 = vlaneseq
      %v3907 = vshrl.u32 %v3906, 7
      %v3908 = vsub.s32 1, %v3907
      %v3909 = vrot.slane %v2937, %v3908
      %v3910 = vlaneseq
      %v3911 = vshrl.u32 %v3910, 7
      %v3912 = vsub.s32 2, %v3911
      %v3913 = vrot.slane %v2937, %v3912
      %v3914 = vlaneseq
      %v3915 = vshrl.u32 %v3914, 7
      %v3916 = vsub.s32 3, %v3915
      %v3917 = vrot.slane %v2937, %v3916
      %v3918 = vlaneseq
      %v3919 = vshrl.u32 %v3918, 7
      %v3920 = vsub.s32 4, %v3919
      %v3921 = vrot.slane %v2937, %v3920
      %v3922 = vlaneseq
      %v3923 = vshrl.u32 %v3922, 7
      %v3924 = vsub.s32 5, %v3923
      %v3925 = vrot.slane %v2937, %v3924
      %v3926 = vlaneseq
      %v3927 = vshrl.u32 %v3926, 7
      %v3928 = vsub.s32 6, %v3927
      %v3929 = vrot.slane %v2937, %v3928
      %v3930 = vlaneseq
      %v3931 = vshrl.u32 %v3930, 7
      %v3932 = vsub.s32 7, %v3931
      %v3933 = vrot.slane %v2937, %v3932
      %v3934 = vlaneseq
      %v3935 = vshrl.u32 %v3934, 7
      %v3936 = vsub.s32 0, %v3935
      %v3937 = vrot.slane %v2938, %v3936
      %v3938 = vlaneseq
      %v3939 = vshrl.u32 %v3938, 7
      %v3940 = vsub.s32 1, %v3939
      %v3941 = vrot.slane %v2938, %v3940
      %v3942 = vlaneseq
      %v3943 = vshrl.u32 %v3942, 7
      %v3944 = vsub.s32 2, %v3943
      %v3945 = vrot.slane %v2938, %v3944
      %v3946 = vlaneseq
      %v3947 = vshrl.u32 %v3946, 7
      %v3948 = vsub.s32 3, %v3947
      %v3949 = vrot.slane %v2938, %v3948
      %v3950 = vlaneseq
      %v3951 = vshrl.u32 %v3950, 7
      %v3952 = vsub.s32 4, %v3951
      %v3953 = vrot.slane %v2938, %v3952
      %v3954 = vlaneseq
      %v3955 = vshrl.u32 %v3954, 7
      %v3956 = vsub.s32 5, %v3955
      %v3957 = vrot.slane %v2938, %v3956
      %v3958 = vlaneseq
      %v3959 = vshrl.u32 %v3958, 7
      %v3960 = vsub.s32 6, %v3959
      %v3961 = vrot.slane %v2938, %v3960
      %3985 = vmatprep.subr.bf16.mxu0 %v3500
      %3986 = vmatpush1.bf16.msra.mxu0 %v3499
      %3987 = vmatprep.subr.bf16.mxu0 %v3523
      %3988 = vmatpush1.bf16.msra.mxu0 %v3522
      %3989 = vmatprep.subr.bf16.mxu0 %v3546
      %3990 = vmatpush1.bf16.msra.mxu0 %v3545
      %3991 = vmatprep.subr.bf16.mxu0 %v3569
      %3992 = vmatpush1.bf16.msra.mxu0 %v3568
      %3993 = vmatprep.subr.bf16.mxu0 %v3592
      %3994 = vmatpush1.bf16.msra.mxu0 %v3591
      %3995 = vmatprep.subr.bf16.mxu0 %v3615
      %3996 = vmatpush1.bf16.msra.mxu0 %v3614
      %3997 = vmatprep.subr.bf16.mxu0 %v3638
      %3998 = vmatpush1.bf16.msra.mxu0 %v3637
      %3999 = vmatprep.subr.bf16.mxu0 %v3661
      %4000 = vmatpush1.bf16.msra.mxu0 %v3660
      %4001 = vmatprep.subr.bf16.mxu0 0
      %4002 = vmatpush1.bf16.msra.mxu0 0
      %4003 = vmatprep.subr.bf16.mxu0 0
      %4004 = vmatpush1.bf16.msra.mxu0 0
      %4005 = vmatprep.subr.bf16.mxu0 0
      %4006 = vmatpush1.bf16.msra.mxu0 0
      %4007 = vmatprep.subr.bf16.mxu0 0
      %4008 = vmatpush1.bf16.msra.mxu0 0
      %4009 = vmatprep.subr.bf16.mxu0 0
      %4010 = vmatpush1.bf16.msra.mxu0 0
      %4011 = vmatprep.subr.bf16.mxu0 0
      %4012 = vmatpush1.bf16.msra.mxu0 0
      %4013 = vmatprep.subr.bf16.mxu0 0
      %4014 = vmatpush1.bf16.msra.mxu0 0
      %4015 = vmatprep.subr.bf16.mxu0 0
      %4016 = vmatpush1.bf16.msra.mxu0 0
      %4017 = vmatprep.mubr.bf16.mxu0 0
      %4018 = vmatmul.mubr.bf16.gmra.mrb[0].mxu0 %v2743
      %v4019 = vpop.f32.mrb[0].mxu0
      %v4020 = vadd.f32 %v3873, %v4019
      %v4021 = vpop.f32.mrb[0].mxu0
      %v4022 = vadd.f32 %v3877, %v4021
      %v4023 = vpop.f32.mrb[0].mxu0
      %v4024 = vpop.f32.mrb[0].mxu0
      %4025 = vdwg.mxu0
      %4026 = vmatprep.subr.bf16.mxu0 %v3502
      %4027 = vmatpush1.bf16.msra.mxu0 %v3501
      %4028 = vmatprep.subr.bf16.mxu0 %v3525
      %4029 = vmatpush1.bf16.msra.mxu0 %v3524
      %4030 = vmatprep.subr.bf16.mxu0 %v3548
      %4031 = vmatpush1.bf16.msra.mxu0 %v3547
      %4032 = vmatprep.subr.bf16.mxu0 %v3571
      %4033 = vmatpush1.bf16.msra.mxu0 %v3570
      %4034 = vmatprep.subr.bf16.mxu0 %v3594
      %4035 = vmatpush1.bf16.msra.mxu0 %v3593
      %4036 = vmatprep.subr.bf16.mxu0 %v3617
      %4037 = vmatpush1.bf16.msra.mxu0 %v3616
      %4038 = vmatprep.subr.bf16.mxu0 %v3640
      %4039 = vmatpush1.bf16.msra.mxu0 %v3639
      %4040 = vmatprep.subr.bf16.mxu0 %v3663
      %4041 = vmatpush1.bf16.msra.mxu0 %v3662
      %4042 = vmatprep.subr.bf16.mxu0 0
      %4043 = vmatpush1.bf16.msra.mxu0 0
      %4044 = vmatprep.subr.bf16.mxu0 0
      %4045 = vmatpush1.bf16.msra.mxu0 0
      %4046 = vmatprep.subr.bf16.mxu0 0
      %4047 = vmatpush1.bf16.msra.mxu0 0
      %4048 = vmatprep.subr.bf16.mxu0 0
      %4049 = vmatpush1.bf16.msra.mxu0 0
      %4050 = vmatprep.subr.bf16.mxu0 0
      %4051 = vmatpush1.bf16.msra.mxu0 0
      %4052 = vmatprep.subr.bf16.mxu0 0
      %4053 = vmatpush1.bf16.msra.mxu0 0
      %4054 = vmatprep.subr.bf16.mxu0 0
      %4055 = vmatpush1.bf16.msra.mxu0 0
      %4056 = vmatprep.subr.bf16.mxu0 0
      %4057 = vmatpush1.bf16.msra.mxu0 0
      %4058 = vmatprep.mubr.bf16.mxu0 0
      %4059 = vmatmul.mubr.bf16.gmra.mrb[0].mxu0 %v2743
      %v4060 = vpop.f32.mrb[0].mxu0
      %v4061 = vadd.f32 %v3881, %v4060
      %v4062 = vpop.f32.mrb[0].mxu0
      %v4063 = vadd.f32 %v3885, %v4062
      %v4064 = vpop.f32.mrb[0].mxu0
      %v4065 = vpop.f32.mrb[0].mxu0
      %4066 = vdwg.mxu0
      %4067 = vmatprep.subr.bf16.mxu0 %v3504
      %4068 = vmatpush1.bf16.msra.mxu0 %v3503
      %4069 = vmatprep.subr.bf16.mxu0 %v3527
      %4070 = vmatpush1.bf16.msra.mxu0 %v3526
      %4071 = vmatprep.subr.bf16.mxu0 %v3550
      %4072 = vmatpush1.bf16.msra.mxu0 %v3549
      %4073 = vmatprep.subr.bf16.mxu0 %v3573
      %4074 = vmatpush1.bf16.msra.mxu0 %v3572
      %4075 = vmatprep.subr.bf16.mxu0 %v3596
      %4076 = vmatpush1.bf16.msra.mxu0 %v3595
      %4077 = vmatprep.subr.bf16.mxu0 %v3619
      %4078 = vmatpush1.bf16.msra.mxu0 %v3618
      %4079 = vmatprep.subr.bf16.mxu0 %v3642
      %4080 = vmatpush1.bf16.msra.mxu0 %v3641
      %4081 = vmatprep.subr.bf16.mxu0 %v3665
      %4082 = vmatpush1.bf16.msra.mxu0 %v3664
      %4083 = vmatprep.subr.bf16.mxu0 0
      %4084 = vmatpush1.bf16.msra.mxu0 0
      %4085 = vmatprep.subr.bf16.mxu0 0
      %4086 = vmatpush1.bf16.msra.mxu0 0
      %4087 = vmatprep.subr.bf16.mxu0 0
      %4088 = vmatpush1.bf16.msra.mxu0 0
      %4089 = vmatprep.subr.bf16.mxu0 0
      %4090 = vmatpush1.bf16.msra.mxu0 0
      %4091 = vmatprep.subr.bf16.mxu0 0
      %4092 = vmatpush1.bf16.msra.mxu0 0
      %4093 = vmatprep.subr.bf16.mxu0 0
      %4094 = vmatpush1.bf16.msra.mxu0 0
      %4095 = vmatprep.subr.bf16.mxu0 0
      %4096 = vmatpush1.bf16.msra.mxu0 0
      %4097 = vmatprep.subr.bf16.mxu0 0
      %4098 = vmatpush1.bf16.msra.mxu0 0
      %4099 = vmatprep.mubr.bf16.mxu0 0
      %4100 = vmatmul.mubr.bf16.gmra.mrb[0].mxu0 %v2743
      %v4101 = vpop.f32.mrb[0].mxu0
      %v4102 = vadd.f32 %v3889, %v4101
      %v4103 = vpop.f32.mrb[0].mxu0
      %v4104 = vadd.f32 %v3893, %v4103
      %v4105 = vpop.f32.mrb[0].mxu0
      %v4106 = vpop.f32.mrb[0].mxu0
      %4107 = vdwg.mxu0
      %4108 = vmatprep.subr.bf16.mxu0 %v3506
      %4109 = vmatpush1.bf16.msra.mxu0 %v3505
      %4110 = vmatprep.subr.bf16.mxu0 %v3529
      %4111 = vmatpush1.bf16.msra.mxu0 %v3528
      %4112 = vmatprep.subr.bf16.mxu0 %v3552
      %4113 = vmatpush1.bf16.msra.mxu0 %v3551
      %4114 = vmatprep.subr.bf16.mxu0 %v3575
      %4115 = vmatpush1.bf16.msra.mxu0 %v3574
      %4116 = vmatprep.subr.bf16.mxu0 %v3598
      %4117 = vmatpush1.bf16.msra.mxu0 %v3597
      %4118 = vmatprep.subr.bf16.mxu0 %v3621
      %4119 = vmatpush1.bf16.msra.mxu0 %v3620
      %4120 = vmatprep.subr.bf16.mxu0 %v3644
      %4121 = vmatpush1.bf16.msra.mxu0 %v3643
      %4122 = vmatprep.subr.bf16.mxu0 %v3667
      %4123 = vmatpush1.bf16.msra.mxu0 %v3666
      %4124 = vmatprep.subr.bf16.mxu0 0
      %4125 = vmatpush1.bf16.msra.mxu0 0
      %4126 = vmatprep.subr.bf16.mxu0 0
      %4127 = vmatpush1.bf16.msra.mxu0 0
      %4128 = vmatprep.subr.bf16.mxu0 0
      %4129 = vmatpush1.bf16.msra.mxu0 0
      %4130 = vmatprep.subr.bf16.mxu0 0
      %4131 = vmatpush1.bf16.msra.mxu0 0
      %4132 = vmatprep.subr.bf16.mxu0 0
      %4133 = vmatpush1.bf16.msra.mxu0 0
      %4134 = vmatprep.subr.bf16.mxu0 0
      %4135 = vmatpush1.bf16.msra.mxu0 0
      %4136 = vmatprep.subr.bf16.mxu0 0
      %4137 = vmatpush1.bf16.msra.mxu0 0
      %4138 = vmatprep.subr.bf16.mxu0 0
      %4139 = vmatpush1.bf16.msra.mxu0 0
      %4140 = vmatprep.mubr.bf16.mxu0 0
      %4141 = vmatmul.mubr.bf16.gmra.mrb[0].mxu0 %v2743
      %v4142 = vpop.f32.mrb[0].mxu0
      %v4143 = vadd.f32 %v3897, %v4142
      %v4144 = vpop.f32.mrb[0].mxu0
      %v4145 = vadd.f32 %v3901, %v4144
      %v4146 = vpop.f32.mrb[0].mxu0
      %v4147 = vpop.f32.mrb[0].mxu0
      %4148 = vdwg.mxu0
      %4149 = vmatprep.subr.bf16.mxu0 %v3508
      %4150 = vmatpush1.bf16.msra.mxu0 %v3507
      %4151 = vmatprep.subr.bf16.mxu0 %v3531
      %4152 = vmatpush1.bf16.msra.mxu0 %v3530
      %4153 = vmatprep.subr.bf16.mxu0 %v3554
      %4154 = vmatpush1.bf16.msra.mxu0 %v3553
      %4155 = vmatprep.subr.bf16.mxu0 %v3577
      %4156 = vmatpush1.bf16.msra.mxu0 %v3576
      %4157 = vmatprep.subr.bf16.mxu0 %v3600
      %4158 = vmatpush1.bf16.msra.mxu0 %v3599
      %4159 = vmatprep.subr.bf16.mxu0 %v3623
      %4160 = vmatpush1.bf16.msra.mxu0 %v3622
      %4161 = vmatprep.subr.bf16.mxu0 %v3646
      %4162 = vmatpush1.bf16.msra.mxu0 %v3645
      %4163 = vmatprep.subr.bf16.mxu0 %v3669
      %4164 = vmatpush1.bf16.msra.mxu0 %v3668
      %4165 = vmatprep.subr.bf16.mxu0 0
      %4166 = vmatpush1.bf16.msra.mxu0 0
      %4167 = vmatprep.subr.bf16.mxu0 0
      %4168 = vmatpush1.bf16.msra.mxu0 0
      %4169 = vmatprep.subr.bf16.mxu0 0
      %4170 = vmatpush1.bf16.msra.mxu0 0
      %4171 = vmatprep.subr.bf16.mxu0 0
      %4172 = vmatpush1.bf16.msra.mxu0 0
      %4173 = vmatprep.subr.bf16.mxu0 0
      %4174 = vmatpush1.bf16.msra.mxu0 0
      %4175 = vmatprep.subr.bf16.mxu0 0
      %4176 = vmatpush1.bf16.msra.mxu0 0
      %4177 = vmatprep.subr.bf16.mxu0 0
      %4178 = vmatpush1.bf16.msra.mxu0 0
      %4179 = vmatprep.subr.bf16.mxu0 0
      %4180 = vmatpush1.bf16.msra.mxu0 0
      %4181 = vmatprep.mubr.bf16.mxu0 0
      %4182 = vmatmul.mubr.bf16.gmra.mrb[0].mxu0 %v2743
      %v4183 = vpop.f32.mrb[0].mxu0
      %v4184 = vadd.f32 %v3905, %v4183
      %v4185 = vpop.f32.mrb[0].mxu0
      %v4186 = vadd.f32 %v3909, %v4185
      %v4187 = vpop.f32.mrb[0].mxu0
      %v4188 = vpop.f32.mrb[0].mxu0
      %4189 = vdwg.mxu0
      %4190 = vmatprep.subr.bf16.mxu0 %v3510
      %4191 = vmatpush1.bf16.msra.mxu0 %v3509
      %4192 = vmatprep.subr.bf16.mxu0 %v3533
      %4193 = vmatpush1.bf16.msra.mxu0 %v3532
      %4194 = vmatprep.subr.bf16.mxu0 %v3556
      %4195 = vmatpush1.bf16.msra.mxu0 %v3555
      %4196 = vmatprep.subr.bf16.mxu0 %v3579
      %4197 = vmatpush1.bf16.msra.mxu0 %v3578
      %4198 = vmatprep.subr.bf16.mxu0 %v3602
      %4199 = vmatpush1.bf16.msra.mxu0 %v3601
      %4200 = vmatprep.subr.bf16.mxu0 %v3625
      %4201 = vmatpush1.bf16.msra.mxu0 %v3624
      %4202 = vmatprep.subr.bf16.mxu0 %v3648
      %4203 = vmatpush1.bf16.msra.mxu0 %v3647
      %4204 = vmatprep.subr.bf16.mxu0 %v3671
      %4205 = vmatpush1.bf16.msra.mxu0 %v3670
      %4206 = vmatprep.subr.bf16.mxu0 0
      %4207 = vmatpush1.bf16.msra.mxu0 0
      %4208 = vmatprep.subr.bf16.mxu0 0
      %4209 = vmatpush1.bf16.msra.mxu0 0
      %4210 = vmatprep.subr.bf16.mxu0 0
      %4211 = vmatpush1.bf16.msra.mxu0 0
      %4212 = vmatprep.subr.bf16.mxu0 0
      %4213 = vmatpush1.bf16.msra.mxu0 0
      %4214 = vmatprep.subr.bf16.mxu0 0
      %4215 = vmatpush1.bf16.msra.mxu0 0
      %4216 = vmatprep.subr.bf16.mxu0 0
      %4217 = vmatpush1.bf16.msra.mxu0 0
      %4218 = vmatprep.subr.bf16.mxu0 0
      %4219 = vmatpush1.bf16.msra.mxu0 0
      %4220 = vmatprep.subr.bf16.mxu0 0
      %4221 = vmatpush1.bf16.msra.mxu0 0
      %4222 = vmatprep.mubr.bf16.mxu0 0
      %4223 = vmatmul.mubr.bf16.gmra.mrb[0].mxu0 %v2743
      %v4224 = vpop.f32.mrb[0].mxu0
      %v4225 = vadd.f32 %v3913, %v4224
      %v4226 = vpop.f32.mrb[0].mxu0
      %v4227 = vadd.f32 %v3917, %v4226
      %v4228 = vpop.f32.mrb[0].mxu0
      %v4229 = vpop.f32.mrb[0].mxu0
      %4230 = vdwg.mxu0
      %4231 = vmatprep.subr.bf16.mxu0 %v3512
      %4232 = vmatpush1.bf16.msra.mxu0 %v3511
      %4233 = vmatprep.subr.bf16.mxu0 %v3535
      %4234 = vmatpush1.bf16.msra.mxu0 %v3534
      %4235 = vmatprep.subr.bf16.mxu0 %v3558
      %4236 = vmatpush1.bf16.msra.mxu0 %v3557
      %4237 = vmatprep.subr.bf16.mxu0 %v3581
      %4238 = vmatpush1.bf16.msra.mxu0 %v3580
      %4239 = vmatprep.subr.bf16.mxu0 %v3604
      %4240 = vmatpush1.bf16.msra.mxu0 %v3603
      %4241 = vmatprep.subr.bf16.mxu0 %v3627
      %4242 = vmatpush1.bf16.msra.mxu0 %v3626
      %4243 = vmatprep.subr.bf16.mxu0 %v3650
      %4244 = vmatpush1.bf16.msra.mxu0 %v3649
      %4245 = vmatprep.subr.bf16.mxu0 %v3673
      %4246 = vmatpush1.bf16.msra.mxu0 %v3672
      %4247 = vmatprep.subr.bf16.mxu0 0
      %4248 = vmatpush1.bf16.msra.mxu0 0
      %4249 = vmatprep.subr.bf16.mxu0 0
      %4250 = vmatpush1.bf16.msra.mxu0 0
      %4251 = vmatprep.subr.bf16.mxu0 0
      %4252 = vmatpush1.bf16.msra.mxu0 0
      %4253 = vmatprep.subr.bf16.mxu0 0
      %4254 = vmatpush1.bf16.msra.mxu0 0
      %4255 = vmatprep.subr.bf16.mxu0 0
      %4256 = vmatpush1.bf16.msra.mxu0 0
      %4257 = vmatprep.subr.bf16.mxu0 0
      %4258 = vmatpush1.bf16.msra.mxu0 0
      %4259 = vmatprep.subr.bf16.mxu0 0
      %4260 = vmatpush1.bf16.msra.mxu0 0
      %4261 = vmatprep.subr.bf16.mxu0 0
      %4262 = vmatpush1.bf16.msra.mxu0 0
      %4263 = vmatprep.mubr.bf16.mxu0 0
      %4264 = vmatmul.mubr.bf16.gmra.mrb[0].mxu0 %v2743
      %v4265 = vpop.f32.mrb[0].mxu0
      %v4266 = vadd.f32 %v3921, %v4265
      %v4267 = vpop.f32.mrb[0].mxu0
      %v4268 = vadd.f32 %v3925, %v4267
      %v4269 = vpop.f32.mrb[0].mxu0
      %v4270 = vpop.f32.mrb[0].mxu0
      %4271 = vdwg.mxu0
      %4272 = vmatprep.subr.bf16.mxu0 %v3514
      %4273 = vmatpush1.bf16.msra.mxu0 %v3513
      %4274 = vmatprep.subr.bf16.mxu0 %v3537
      %4275 = vmatpush1.bf16.msra.mxu0 %v3536
      %4276 = vmatprep.subr.bf16.mxu0 %v3560
      %4277 = vmatpush1.bf16.msra.mxu0 %v3559
      %4278 = vmatprep.subr.bf16.mxu0 %v3583
      %4279 = vmatpush1.bf16.msra.mxu0 %v3582
      %4280 = vmatprep.subr.bf16.mxu0 %v3606
      %4281 = vmatpush1.bf16.msra.mxu0 %v3605
      %4282 = vmatprep.subr.bf16.mxu0 %v3629
      %4283 = vmatpush1.bf16.msra.mxu0 %v3628
      %4284 = vmatprep.subr.bf16.mxu0 %v3652
      %4285 = vmatpush1.bf16.msra.mxu0 %v3651
      %4286 = vmatprep.subr.bf16.mxu0 %v3675
      %4287 = vmatpush1.bf16.msra.mxu0 %v3674
      %4288 = vmatprep.subr.bf16.mxu0 0
      %4289 = vmatpush1.bf16.msra.mxu0 0
      %4290 = vmatprep.subr.bf16.mxu0 0
      %4291 = vmatpush1.bf16.msra.mxu0 0
      %4292 = vmatprep.subr.bf16.mxu0 0
      %4293 = vmatpush1.bf16.msra.mxu0 0
      %4294 = vmatprep.subr.bf16.mxu0 0
      %4295 = vmatpush1.bf16.msra.mxu0 0
      %4296 = vmatprep.subr.bf16.mxu0 0
      %4297 = vmatpush1.bf16.msra.mxu0 0
      %4298 = vmatprep.subr.bf16.mxu0 0
      %4299 = vmatpush1.bf16.msra.mxu0 0
      %4300 = vmatprep.subr.bf16.mxu0 0
      %4301 = vmatpush1.bf16.msra.mxu0 0
      %4302 = vmatprep.subr.bf16.mxu0 0
      %4303 = vmatpush1.bf16.msra.mxu0 0
      %4304 = vmatprep.mubr.bf16.mxu0 0
      %4305 = vmatmul.mubr.bf16.gmra.mrb[0].mxu0 %v2743
      %v4306 = vpop.f32.mrb[0].mxu0
      %v4307 = vadd.f32 %v3929, %v4306
      %v4308 = vpop.f32.mrb[0].mxu0
      %v4309 = vadd.f32 %v3933, %v4308
      %v4310 = vpop.f32.mrb[0].mxu0
      %v4311 = vpop.f32.mrb[0].mxu0
      %4312 = vdwg.mxu0
      %4313 = vmatprep.subr.bf16.mxu0 %v3516
      %4314 = vmatpush1.bf16.msra.mxu0 %v3515
      %4315 = vmatprep.subr.bf16.mxu0 %v3539
      %4316 = vmatpush1.bf16.msra.mxu0 %v3538
      %4317 = vmatprep.subr.bf16.mxu0 %v3562
      %4318 = vmatpush1.bf16.msra.mxu0 %v3561
      %4319 = vmatprep.subr.bf16.mxu0 %v3585
      %4320 = vmatpush1.bf16.msra.mxu0 %v3584
      %4321 = vmatprep.subr.bf16.mxu0 %v3608
      %4322 = vmatpush1.bf16.msra.mxu0 %v3607
      %4323 = vmatprep.subr.bf16.mxu0 %v3631
      %4324 = vmatpush1.bf16.msra.mxu0 %v3630
      %4325 = vmatprep.subr.bf16.mxu0 %v3654
      %4326 = vmatpush1.bf16.msra.mxu0 %v3653
      %4327 = vmatprep.subr.bf16.mxu0 %v3677
      %4328 = vmatpush1.bf16.msra.mxu0 %v3676
      %4329 = vmatprep.subr.bf16.mxu0 0
      %4330 = vmatpush1.bf16.msra.mxu0 0
      %4331 = vmatprep.subr.bf16.mxu0 0
      %4332 = vmatpush1.bf16.msra.mxu0 0
      %4333 = vmatprep.subr.bf16.mxu0 0
      %4334 = vmatpush1.bf16.msra.mxu0 0
      %4335 = vmatprep.subr.bf16.mxu0 0
      %4336 = vmatpush1.bf16.msra.mxu0 0
      %4337 = vmatprep.subr.bf16.mxu0 0
      %4338 = vmatpush1.bf16.msra.mxu0 0
      %4339 = vmatprep.subr.bf16.mxu0 0
      %4340 = vmatpush1.bf16.msra.mxu0 0
      %4341 = vmatprep.subr.bf16.mxu0 0
      %4342 = vmatpush1.bf16.msra.mxu0 0
      %4343 = vmatprep.subr.bf16.mxu0 0
      %4344 = vmatpush1.bf16.msra.mxu0 0
      %4345 = vmatprep.mubr.bf16.mxu0 0
      %4346 = vmatmul.mubr.bf16.gmra.mrb[0].mxu0 %v2743
      %v4347 = vpop.f32.mrb[0].mxu0
      %v4348 = vadd.f32 %v3937, %v4347
      %v4349 = vpop.f32.mrb[0].mxu0
      %v4350 = vadd.f32 %v3941, %v4349
      %v4351 = vpop.f32.mrb[0].mxu0
      %v4352 = vpop.f32.mrb[0].mxu0
      %4353 = vdwg.mxu0
      %4354 = vmatprep.subr.bf16.mxu0 %v3518
      %4355 = vmatpush1.bf16.msra.mxu0 %v3517
      %4356 = vmatprep.subr.bf16.mxu0 %v3541
      %4357 = vmatpush1.bf16.msra.mxu0 %v3540
      %4358 = vmatprep.subr.bf16.mxu0 %v3564
      %4359 = vmatpush1.bf16.msra.mxu0 %v3563
      %4360 = vmatprep.subr.bf16.mxu0 %v3587
      %4361 = vmatpush1.bf16.msra.mxu0 %v3586
      %4362 = vmatprep.subr.bf16.mxu0 %v3610
      %4363 = vmatpush1.bf16.msra.mxu0 %v3609
      %4364 = vmatprep.subr.bf16.mxu0 %v3633
      %4365 = vmatpush1.bf16.msra.mxu0 %v3632
      %4366 = vmatprep.subr.bf16.mxu0 %v3656
      %4367 = vmatpush1.bf16.msra.mxu0 %v3655
      %4368 = vmatprep.subr.bf16.mxu0 %v3679
      %4369 = vmatpush1.bf16.msra.mxu0 %v3678
      %4370 = vmatprep.subr.bf16.mxu0 0
      %4371 = vmatpush1.bf16.msra.mxu0 0
      %4372 = vmatprep.subr.bf16.mxu0 0
      %4373 = vmatpush1.bf16.msra.mxu0 0
      %4374 = vmatprep.subr.bf16.mxu0 0
      %4375 = vmatpush1.bf16.msra.mxu0 0
      %4376 = vmatprep.subr.bf16.mxu0 0
      %4377 = vmatpush1.bf16.msra.mxu0 0
      %4378 = vmatprep.subr.bf16.mxu0 0
      %4379 = vmatpush1.bf16.msra.mxu0 0
      %4380 = vmatprep.subr.bf16.mxu0 0
      %4381 = vmatpush1.bf16.msra.mxu0 0
      %4382 = vmatprep.subr.bf16.mxu0 0
      %4383 = vmatpush1.bf16.msra.mxu0 0
      %4384 = vmatprep.subr.bf16.mxu0 0
      %4385 = vmatpush1.bf16.msra.mxu0 0
      %4386 = vmatprep.mubr.bf16.mxu0 0
      %4387 = vmatmul.mubr.bf16.gmra.mrb[0].mxu0 %v2743
      %v4388 = vpop.f32.mrb[0].mxu0
      %v4389 = vadd.f32 %v3945, %v4388
      %v4390 = vpop.f32.mrb[0].mxu0
      %v4391 = vadd.f32 %v3949, %v4390
      %v4392 = vpop.f32.mrb[0].mxu0
      %v4393 = vpop.f32.mrb[0].mxu0
      %4394 = vdwg.mxu0
      %4395 = vmatprep.subr.bf16.mxu0 %v3520
      %4396 = vmatpush1.bf16.msra.mxu0 %v3519
      %4397 = vmatprep.subr.bf16.mxu0 %v3543
      %4398 = vmatpush1.bf16.msra.mxu0 %v3542
      %4399 = vmatprep.subr.bf16.mxu0 %v3566
      %4400 = vmatpush1.bf16.msra.mxu0 %v3565
      %4401 = vmatprep.subr.bf16.mxu0 %v3589
      %4402 = vmatpush1.bf16.msra.mxu0 %v3588
      %4403 = vmatprep.subr.bf16.mxu0 %v3612
      %4404 = vmatpush1.bf16.msra.mxu0 %v3611
      %4405 = vmatprep.subr.bf16.mxu0 %v3635
      %4406 = vmatpush1.bf16.msra.mxu0 %v3634
      %4407 = vmatprep.subr.bf16.mxu0 %v3658
      %4408 = vmatpush1.bf16.msra.mxu0 %v3657
      %4409 = vmatprep.subr.bf16.mxu0 %v3681
      %4410 = vmatpush1.bf16.msra.mxu0 %v3680
      %4411 = vmatprep.subr.bf16.mxu0 0
      %4412 = vmatpush1.bf16.msra.mxu0 0
      %4413 = vmatprep.subr.bf16.mxu0 0
      %4414 = vmatpush1.bf16.msra.mxu0 0
      %4415 = vmatprep.subr.bf16.mxu0 0
      %4416 = vmatpush1.bf16.msra.mxu0 0
      %4417 = vmatprep.subr.bf16.mxu0 0
      %4418 = vmatpush1.bf16.msra.mxu0 0
      %4419 = vmatprep.subr.bf16.mxu0 0
      %4420 = vmatpush1.bf16.msra.mxu0 0
      %4421 = vmatprep.subr.bf16.mxu0 0
      %4422 = vmatpush1.bf16.msra.mxu0 0
      %4423 = vmatprep.subr.bf16.mxu0 0
      %4424 = vmatpush1.bf16.msra.mxu0 0
      %4425 = vmatprep.subr.bf16.mxu0 0
      %4426 = vmatpush1.bf16.msra.mxu0 0
      %4427 = vmatprep.mubr.bf16.mxu0 0
      %4428 = vmatmul.mubr.bf16.gmra.mrb[0].mxu0 %v2743
      %v4429 = vpop.f32.mrb[0].mxu0
      %v4430 = vadd.f32 %v3953, %v4429
      %v4431 = vpop.f32.mrb[0].mxu0
      %v4432 = vadd.f32 %v3957, %v4431
      %v4433 = vpop.f32.mrb[0].mxu0
      %v4434 = vpop.f32.mrb[0].mxu0
      %4435 = vdwg.mxu0
      %4436 = vmatprep.subr.bf16.mxu0 0
      %4437 = vmatpush1.bf16.msra.mxu0 %v3521
      %4438 = vmatprep.subr.bf16.mxu0 0
      %4439 = vmatpush1.bf16.msra.mxu0 %v3544
      %4440 = vmatprep.subr.bf16.mxu0 0
      %4441 = vmatpush1.bf16.msra.mxu0 %v3567
      %4442 = vmatprep.subr.bf16.mxu0 0
      %4443 = vmatpush1.bf16.msra.mxu0 %v3590
      %4444 = vmatprep.subr.bf16.mxu0 0
      %4445 = vmatpush1.bf16.msra.mxu0 %v3613
      %4446 = vmatprep.subr.bf16.mxu0 0
      %4447 = vmatpush1.bf16.msra.mxu0 %v3636
      %4448 = vmatprep.subr.bf16.mxu0 0
      %4449 = vmatpush1.bf16.msra.mxu0 %v3659
      %4450 = vmatprep.subr.bf16.mxu0 0
      %4451 = vmatpush1.bf16.msra.mxu0 %v3682
      %4452 = vmatprep.subr.bf16.mxu0 0
      %4453 = vmatpush1.bf16.msra.mxu0 0
      %4454 = vmatprep.subr.bf16.mxu0 0
      %4455 = vmatpush1.bf16.msra.mxu0 0
      %4456 = vmatprep.subr.bf16.mxu0 0
      %4457 = vmatpush1.bf16.msra.mxu0 0
      %4458 = vmatprep.subr.bf16.mxu0 0
      %4459 = vmatpush1.bf16.msra.mxu0 0
      %4460 = vmatprep.subr.bf16.mxu0 0
      %4461 = vmatpush1.bf16.msra.mxu0 0
      %4462 = vmatprep.subr.bf16.mxu0 0
      %4463 = vmatpush1.bf16.msra.mxu0 0
      %4464 = vmatprep.subr.bf16.mxu0 0
      %4465 = vmatpush1.bf16.msra.mxu0 0
      %4466 = vmatprep.subr.bf16.mxu0 0
      %4467 = vmatpush1.bf16.msra.mxu0 0
      %4468 = vmatprep.mubr.bf16.mxu0 0
      %4469 = vmatmul.mubr.bf16.gmra.mrb[0].mxu0 %v2743
      %v4470 = vpop.f32.mrb[0].mxu0
      %v4471 = vadd.f32 %v3961, %v4470
      %v4472 = vpop.f32.mrb[0].mxu0
      %v4473 = vpop.f32.mrb[0].mxu0
      %v4474 = vpop.f32.mrb[0].mxu0
      %4475 = vdwg.mxu0
      %v4499 = vcombine.low %v4020, %v4022
      %v4500 = vcombine.low %v4061, %v4063
      %v4501 = vcombine.low %v4102, %v4104
      %v4502 = vcombine.low %v4143, %v4145
      %v4504 = vunpack.c.l.s4 1966171168
      %v4505 = vunpack.c.0.s8 %v4504
      %v4506 = vlaneseq
      %v4507 = vshrl.u32 %v4506, 7
      %v4508 = vsub.s32 %v4505, %v4507
      %v4509 = vrot.slane %v4499, %v4508
      %v4511 = vunpack.c.l.s4 1966171168
      %v4512 = vunpack.c.0.s8 %v4511
      %v4513 = vlaneseq
      %v4514 = vshrl.u32 %v4513, 7
      %v4515 = vsub.s32 %v4512, %v4514
      %v4516 = vrot.slane %v4500, %v4515
      %v4518 = vunpack.c.l.s4 1966171168
      %v4519 = vunpack.c.0.s8 %v4518
      %v4520 = vlaneseq
      %v4521 = vshrl.u32 %v4520, 7
      %v4522 = vsub.s32 %v4519, %v4521
      %v4523 = vrot.slane %v4501, %v4522
      %v4525 = vunpack.c.l.s4 1966171168
      %v4526 = vunpack.c.0.s8 %v4525
      %v4527 = vlaneseq
      %v4528 = vshrl.u32 %v4527, 7
      %v4529 = vsub.s32 %v4526, %v4528
      %v4530 = vrot.slane %v4502, %v4529
      %v4531 = vcombine.low %v4509, %v4516
      %v4532 = vcombine.low %v4523, %v4530
      %v4534 = vunpack.c.l.s4 1966171168
      %v4535 = vunpack.c.0.s8 %v4534
      %v4536 = vlaneseq
      %v4537 = vshrl.u32 %v4536, 7
      %v4538 = vsub.s32 %v4535, %v4537
      %v4539 = vrot.slane %v4531, %v4538
      %v4541 = vunpack.c.l.s4 1966171168
      %v4542 = vunpack.c.0.s8 %v4541
      %v4543 = vlaneseq
      %v4544 = vshrl.u32 %v4543, 7
      %v4545 = vsub.s32 %v4542, %v4544
      %v4546 = vrot.slane %v4532, %v4545
      %v4547 = vcombine.low %v4539, %v4546
      %v4548 = vcombine.low %v4184, %v4186
      %v4549 = vcombine.low %v4225, %v4227
      %v4550 = vcombine.low %v4266, %v4268
      %v4551 = vcombine.low %v4307, %v4309
      %v4553 = vunpack.c.l.s4 1966171168
      %v4554 = vunpack.c.0.s8 %v4553
      %v4555 = vlaneseq
      %v4556 = vshrl.u32 %v4555, 7
      %v4557 = vsub.s32 %v4554, %v4556
      %v4558 = vrot.slane %v4548, %v4557
      %v4560 = vunpack.c.l.s4 1966171168
      %v4561 = vunpack.c.0.s8 %v4560
      %v4562 = vlaneseq
      %v4563 = vshrl.u32 %v4562, 7
      %v4564 = vsub.s32 %v4561, %v4563
      %v4565 = vrot.slane %v4549, %v4564
      %v4567 = vunpack.c.l.s4 1966171168
      %v4568 = vunpack.c.0.s8 %v4567
      %v4569 = vlaneseq
      %v4570 = vshrl.u32 %v4569, 7
      %v4571 = vsub.s32 %v4568, %v4570
      %v4572 = vrot.slane %v4550, %v4571
      %v4574 = vunpack.c.l.s4 1966171168
      %v4575 = vunpack.c.0.s8 %v4574
      %v4576 = vlaneseq
      %v4577 = vshrl.u32 %v4576, 7
      %v4578 = vsub.s32 %v4575, %v4577
      %v4579 = vrot.slane %v4551, %v4578
      %v4580 = vcombine.low %v4558, %v4565
      %v4581 = vcombine.low %v4572, %v4579
      %v4583 = vunpack.c.l.s4 1966171168
      %v4584 = vunpack.c.0.s8 %v4583
      %v4585 = vlaneseq
      %v4586 = vshrl.u32 %v4585, 7
      %v4587 = vsub.s32 %v4584, %v4586
      %v4588 = vrot.slane %v4580, %v4587
      %v4590 = vunpack.c.l.s4 1966171168
      %v4591 = vunpack.c.0.s8 %v4590
      %v4592 = vlaneseq
      %v4593 = vshrl.u32 %v4592, 7
      %v4594 = vsub.s32 %v4591, %v4593
      %v4595 = vrot.slane %v4581, %v4594
      %v4596 = vcombine.low %v4588, %v4595
      %v4597 = vcombine.low %v4348, %v4350
      %v4598 = vcombine.low %v4389, %v4391
      %v4599 = vcombine.low %v4430, %v4432
      %v4601 = vunpack.c.l.s4 1966171168
      %v4602 = vunpack.c.0.s8 %v4601
      %v4603 = vlaneseq
      %v4604 = vshrl.u32 %v4603, 7
      %v4605 = vsub.s32 %v4602, %v4604
      %v4606 = vrot.slane %v4597, %v4605
      %v4608 = vunpack.c.l.s4 1966171168
      %v4609 = vunpack.c.0.s8 %v4608
      %v4610 = vlaneseq
      %v4611 = vshrl.u32 %v4610, 7
      %v4612 = vsub.s32 %v4609, %v4611
      %v4613 = vrot.slane %v4598, %v4612
      %v4615 = vunpack.c.l.s4 1966171168
      %v4616 = vunpack.c.0.s8 %v4615
      %v4617 = vlaneseq
      %v4618 = vshrl.u32 %v4617, 7
      %v4619 = vsub.s32 %v4616, %v4618
      %v4620 = vrot.slane %v4599, %v4619
      %v4622 = vunpack.c.l.s4 1966171168
      %v4623 = vunpack.c.0.s8 %v4622
      %v4624 = vlaneseq
      %v4625 = vshrl.u32 %v4624, 7
      %v4626 = vsub.s32 %v4623, %v4625
      %v4627 = vrot.slane %v4471, %v4626
      %v4628 = vcombine.low %v4606, %v4613
      %v4629 = vcombine.low %v4620, %v4627
      %v4631 = vunpack.c.l.s4 1966171168
      %v4632 = vunpack.c.0.s8 %v4631
      %v4633 = vlaneseq
      %v4634 = vshrl.u32 %v4633, 7
      %v4635 = vsub.s32 %v4632, %v4634
      %v4636 = vrot.slane %v4628, %v4635
      %v4638 = vunpack.c.l.s4 1966171168
      %v4639 = vunpack.c.0.s8 %v4638
      %v4640 = vlaneseq
      %v4641 = vshrl.u32 %v4640, 7
      %v4642 = vsub.s32 %v4639, %v4641
      %v4643 = vrot.slane %v4629, %v4642
      %v4644 = vcombine.low %v4636, %v4643
      %4648 = vst [vmem:[%s276] sm:$0xff] %v4547
      %4649 = vst [vmem:[%s276 + $0x8] sm:$0xff] %v4596
      %v4650 = vlaneseq
      %vm4651 = vcmp.ge.s32.totalorder %v4650, 0
      %vm4652 = vcmp.lt.s32.totalorder %v4650, 838
      %vm4653 = vmand %vm4651, %vm4652
      %4654 = vst.msk [vmem:[%s276 + $0x10] sm:$0x7f] %vm4653, %v4644
      %p4655 = scmp.lt.s32.totalorder %s18, 1
      %s4656 = scalar_select %p4655, %s18, 1
      %s4657 = smul.addr %s4656, 23
      %s4658 = scalar_lea.vmem %s7, %s4657
      // Predicated region
      $region49: #{gazenet_forward.1} parent=47 // pred_check
        %p4659 = pneg %p188
      $region50: #{gazenet_forward.1} parent=47 // pred_check_branch
        %4661 = sbr.rel (%p4659) target = $region52
      $region51: #{gazenet_forward.1} parent=47 // pred_region
        _
      $region52: #{gazenet_forward.1} parent=47 // pred_fallthru
        _
    $region48: #{gazenet_forward.1} parent=5 // pred_fallthru
      _
    %p4662 = scmp.le.s32.totalorder 2, %s13
    // Predicated region
    $region53: #{gazenet_forward.1} parent=5 // pred_check
      %p4663 = pneg %p4662
    $region54: #{gazenet_forward.1} parent=5 // pred_check_branch
      %4665 = sbr.rel (%p4663) target = $region56
    $region55: #{gazenet_forward.1} parent=5 // pred_region
      %s4666 = ssub.s32 %s13, 2
      // Predicated region
      $region57: #{gazenet_forward.1} parent=55 // pred_check
        %p4667 = pneg %p194
      $region58: #{gazenet_forward.1} parent=55 // pred_check_branch
        %4669 = sbr.rel (%p4667) target = $region60
      $region59: #{gazenet_forward.1} parent=55 // pred_region
        %p4670 = scmp.lt.s32.totalorder %s19, 1
        %s4671 = scalar_select %p4670, %s19, 1
        %s4672 = smul.addr %s4671, 23
        %s4673 = scalar_lea.vmem %s7, %s4672
      $region60: #{gazenet_forward.1} parent=55 // pred_fallthru
        _
    $region56: #{gazenet_forward.1} parent=5 // pred_fallthru
      _
  $region6: #{gazenet_forward.1} parent=0 // loop_footer
    %s17 = sadd.s32 1, %s13
  $region7: #{gazenet_forward.1} parent=0 // loop_footer_branch
    %12 = sbr.rel target = $region3
  $region8: #{gazenet_forward.1} parent=0 // loop_exit
    _

</llo_original>
